<compile_context>
chip_gen: v6e
topology: v6e:2x2x1
jax: 0.10.0
libtpu: 0.0.40
codegen_flags: <defaults>
</compile_context>

<pallas_src>
import functools
import numpy as np
import jax
import jax.numpy as jnp
from jax import lax
from jax.experimental import pallas as pl
from jax.experimental.pallas import tpu as pltpu

EPS = 1e-5
KSIZES = (15, 31, 63, 125)


# ----------------------------------------------------------------------------- fused kernel

def b7_fused_kernel(x_ref,
                    m1e0_ref, m1e1_ref, k0a_ref, k1a_ref,
                    m2e0_ref, m2e1_ref, kg0_ref, kg1_ref,
                    plane_ref, ptile_ref, dmask_ref, selb_ref, wfct_ref, bfc_ref,
                    out_ref, feat_ref, nproj_ref,
                    ye0_s, ye1_s, y2_s, y3e0_s, y3e1_s):
    """Entire B7 forward for the whole (stacked) batch, fully resident in VMEM.

    Activation rows = (channel/band, batch b, EEG-chan h), lanes = time, so every stage
    is a lane-dense MXU matmul.  All BN shifts / conv biases live in `plane` (pre-ReLU).
    """
    f32 = jnp.float32
    bf16 = jnp.bfloat16
    C0 = x_ref.shape[0]            # 9 bands
    BH = x_ref.shape[1]            # B * nChan rows per band
    M = m2e0_ref.shape[0]          # m groups

    # --- mixBlockRes(9) with the stride-2 even/odd selection of the next conv folded in:
    #     per band, two banded matmuls (identity residual + BN scale already inside).
    for c in range(C0):
        xb = x_ref[c].astype(bf16)                                        # (BH, T)
        ye0_s[c * BH:(c + 1) * BH, :] = jnp.dot(
            xb, m1e0_ref[c], preferred_element_type=f32).astype(bf16)     # (BH, T/2)
        ye1_s[c * BH:(c + 1) * BH, :] = jnp.dot(
            xb, m1e1_ref[c], preferred_element_type=f32).astype(bf16)

    # --- Conv2d(9->m,(1,2),stride 2) + BN(m): Kron(W_s, I_BH) row mix on both parities
    y2 = (jnp.dot(k0a_ref[...], ye0_s[...], preferred_element_type=f32)
          + jnp.dot(k1a_ref[...], ye1_s[...], preferred_element_type=f32))  # (m*BH, T/2)
    y2_s[...] = y2.astype(bf16)

    # --- mixBlockRes(m), again with the next stride-2 selection folded in
    for g in range(M):
        yg = y2_s[g * BH:(g + 1) * BH, :]                                  # (BH, T/2) bf16
        y3e0_s[g * BH:(g + 1) * BH, :] = jnp.dot(
            yg, m2e0_ref[g], preferred_element_type=f32).astype(bf16)      # (BH, T/4)
        y3e1_s[g * BH:(g + 1) * BH, :] = jnp.dot(
            yg, m2e1_ref[g], preferred_element_type=f32).astype(bf16)

    # --- Conv2d(m->m,(1,2),s2)+BN + grouped Conv2d(m->4m,(nChan,1))+BN folded into one
    #     row-mix pair (KG0/KG1 = Kg@K0b / Kg@K1b), + single pre-ReLU bias plane, ReLU
    z = jnp.maximum(jnp.dot(kg0_ref[...], y3e0_s[...], preferred_element_type=f32)
                    + jnp.dot(kg1_ref[...], y3e1_s[...], preferred_element_type=f32)
                    + plane_ref[...], 0.0)                                 # (B*4m, T/4) f32

    # --- AvgPool2d((1,10)) + channel-major flatten, all on the MXU:
    #     zp[r, f] = pooled value (o=f//Tp comes from the row, tp=f%Tp from PTile),
    #     the 0/1 mask keeps only f//Tp == o, SelB sums each batch block's rows.
    zp = jnp.dot(z, ptile_ref[...], preferred_element_type=f32)            # (B*4m, Fdim)
    feat = jnp.dot(selb_ref[...], dmask_ref[...] * zp,
                   preferred_element_type=f32)                             # (B, Fdim)

    # --- LinearWithConstraint (weight pre-renormed/transposed) + F.normalize(feature)
    feat_ref[...] = feat
    out_ref[...] = jnp.dot(feat.astype(bf16), wfct_ref[...],
                           preferred_element_type=f32) + bfc_ref[...]
    ss = jnp.sum(feat * feat, axis=1, keepdims=True)
    nproj_ref[...] = feat * lax.rsqrt(jnp.maximum(ss, 1e-24))


# ----------------------------------------------------------------------------- wrapper

def b7_forward(x_nchw, ops):
    """x_nchw: (B, nBands, nChan, nTime) float32 (PyTorch NCHW). Returns (out, feature, nproj)."""
    B, C0, H, T = x_nchw.shape
    BH = B * H
    T2, T4 = T // 2, T // 4
    F = ops["PTILE"].shape[1]
    nC = ops["WFCT"].shape[1]
    MBH = ops["K0A"].shape[0]          # m * B * H

    # band-major layout: rows of band c are the stacked (batch b, chan h) rows, so the
    # whole batch is processed by one grid step with fat matmuls (single-TC friendly).
    xr = jnp.transpose(x_nchw, (1, 0, 2, 3)).reshape(C0, BH, T)

    names = ["M1E0", "M1E1", "K0A", "K1A", "M2E0", "M2E1", "KG0", "KG1",
             "PLANE", "PTILE", "DMASK", "SELB", "WFCT", "BFC"]
    weights = [ops[n] for n in names]

    def full_spec(a):
        nd = a.ndim
        return pl.BlockSpec(a.shape, lambda i, _nd=nd: (0,) * _nd)

    scratch = [pltpu.VMEM((C0 * BH, T2), jnp.bfloat16),   # yE0 (even-column band result)
               pltpu.VMEM((C0 * BH, T2), jnp.bfloat16),   # yE1
               pltpu.VMEM((MBH, T2), jnp.bfloat16),       # y2
               pltpu.VMEM((MBH, T4), jnp.bfloat16),       # y3E0
               pltpu.VMEM((MBH, T4), jnp.bfloat16)]       # y3E1

    out, feat, nproj = pl.pallas_call(
        b7_fused_kernel,
        grid=(1,),
        out_shape=(jax.ShapeDtypeStruct((B, nC), jnp.float32),
                   jax.ShapeDtypeStruct((B, F), jnp.float32),
                   jax.ShapeDtypeStruct((B, F), jnp.float32)),
        in_specs=[full_spec(xr)] + [full_spec(w) for w in weights],
        out_specs=(pl.BlockSpec((B, nC), lambda i: (0, 0)),
                   pl.BlockSpec((B, F), lambda i: (0, 0)),
                   pl.BlockSpec((B, F), lambda i: (0, 0))),
        scratch_shapes=scratch,
        compiler_params=pltpu.CompilerParams(
            dimension_semantics=("arbitrary",)),
    )(xr, *weights)
    return out, feat, nproj


# ----------------------------------------------------------------------------- raw params

def _split_channels(c, n):
    s = [c // n] * n
    s[0] += c - sum(s)
    return s


def build_raw_model(key, nBands, nChan, nTime, m, nClass):
    keys = jax.random.split(key, 16)

    def mixed(k, dim):
        splits = _split_channels(dim, len(KSIZES))
        kk = jax.random.split(k, len(KSIZES) + 1)
        ws = []
        for i, (ksz, s) in enumerate(zip(KSIZES, splits)):
            w = 0.1 * np.asarray(jax.random.normal(kk[i], (s, ksz)), np.float64)
            ws.extend([w[j] for j in range(s)])
        bias = 0.05 * np.asarray(jax.random.normal(kk[-1], (dim,)), np.float64)
        return ws, bias

    def bn(k, c):
        k1, k2, k3, k4 = jax.random.split(k, 4)
        gamma = 1.0 + 0.1 * np.asarray(jax.random.normal(k1, (c,)), np.float64)
        beta = 0.1 * np.asarray(jax.random.normal(k2, (c,)), np.float64)
        mean = 0.1 * np.asarray(jax.random.normal(k3, (c,)), np.float64)
        var = 1.0 + 0.1 * np.abs(np.asarray(jax.random.normal(k4, (c,)), np.float64))
        return gamma, beta, mean, var

    raw = {}
    raw["mixA_w"], raw["mixA_b"] = mixed(keys[0], nBands)
    raw["bnA"] = bn(keys[1], nBands)
    raw["convB_w"] = 0.1 * np.asarray(jax.random.normal(keys[2], (m, nBands, 2)), np.float64)
    raw["convB_b"] = 0.05 * np.asarray(jax.random.normal(keys[3], (m,)), np.float64)
    raw["bnB"] = bn(keys[4], m)
    raw["mixC_w"], raw["mixC_b"] = mixed(keys[5], m)
    raw["bnC"] = bn(keys[6], m)
    raw["convD_w"] = 0.1 * np.asarray(jax.random.normal(keys[7], (m, m, 2)), np.float64)
    raw["convD_b"] = 0.05 * np.asarray(jax.random.normal(keys[8], (m,)), np.float64)
    raw["bnD"] = bn(keys[9], m)
    raw["convE_w"] = 0.1 * np.asarray(jax.random.normal(keys[10], (4 * m, nChan)), np.float64)
    raw["convE_b"] = 0.05 * np.asarray(jax.random.normal(keys[11], (4 * m,)), np.float64)
    raw["bnE"] = bn(keys[12], 4 * m)
    Fdim = 4 * m * ((nTime // 4) // 10)
    raw["fc_w"] = 0.1 * np.asarray(jax.random.normal(keys[13], (nClass, Fdim)), np.float64)
    raw["fc_b"] = 0.05 * np.asarray(jax.random.normal(keys[14], (nClass,)), np.float64)
    return raw


# ----------------------------------------------------------------------------- op folding

def _bn_fold(bn):
    gamma, beta, mean, var = bn
    scale = gamma / np.sqrt(var + EPS)
    return scale, beta - scale * mean


def _band_matrix(w, T):
    # Mat[t_in, t_out] = w[t_in - t_out + pad]  ('same' cross-correlation as right-matmul)
    k = w.shape[0]
    pad = (k - 1) // 2
    M = np.zeros((T, T), np.float64)
    for j in range(k):
        d = j - pad
        idx = np.arange(max(0, -d), min(T, T - d))
        M[idx + d, idx] = w[j]
    return M


def _renorm_rows(w, maxnorm):
    # torch.renorm(p=2, dim=0, maxnorm)
    n = np.sqrt(np.sum(w * w, axis=1, keepdims=True))
    return w * np.where(n > maxnorm, maxnorm / n, 1.0)


def fold_ops(raw, nBands, nChan, nTime, m, nClass, batch):
    H, T, B = nChan, nTime, batch
    BH = B * H
    T2, T4 = T // 2, T // 4
    Tp = T4 // 10
    Fdim = 4 * m * Tp

    sA, shA = _bn_fold(raw["bnA"])
    sB_, shB = _bn_fold(raw["bnB"])
    sC, shC = _bn_fold(raw["bnC"])
    sD, shD = _bn_fold(raw["bnD"])
    sE, shE = _bn_fold(raw["bnE"])

    # banded mixed-conv operators (identity residual + BN scale folded in) with the
    # stride-2 even/odd column selection of the following conv folded in at build time
    M1 = np.stack([np.eye(T) + sA[c] * _band_matrix(raw["mixA_w"][c], T) for c in range(nBands)])
    M2 = np.stack([np.eye(T2) + sC[g] * _band_matrix(raw["mixC_w"][g], T2) for g in range(m)])
    M1E0, M1E1 = M1[:, :, 0::2], M1[:, :, 1::2]
    M2E0, M2E1 = M2[:, :, 0::2], M2[:, :, 1::2]

    # Kron row mixes, batch-stacked (I_{B*H})
    I_BH = np.eye(BH)
    K0A = np.kron(sB_[:, None] * raw["convB_w"][:, :, 0], I_BH)   # (m*BH, nBands*BH)
    K1A = np.kron(sB_[:, None] * raw["convB_w"][:, :, 1], I_BH)
    K0b = np.kron(sD[:, None] * raw["convD_w"][:, :, 0], I_BH)    # (m*BH, m*BH)
    K1b = np.kron(sD[:, None] * raw["convD_w"][:, :, 1], I_BH)

    # grouped (nChan,1) conv, batch-stacked, output rows ordered (b, o) ...
    Kg = np.zeros((B * 4 * m, m * BH))
    for b in range(B):
        for o in range(4 * m):
            g = o // 4
            Kg[b * 4 * m + o, g * BH + b * H: g * BH + b * H + H] = sE[o] * raw["convE_w"][o, :]
    # ... folded into the second stride-2 row mix (y4 never materialized in the kernel)
    KG0 = Kg @ K0b
    KG1 = Kg @ K1b

    # single pre-ReLU bias plane: propagate all conv biases / BN shifts through the
    # affine chain with a zero input (single-batch, then tiled over the stacked batch)
    s1 = sA * raw["mixA_b"] + shA
    s2 = sB_ * raw["convB_b"] + shB
    s3 = sC * raw["mixC_b"] + shC
    s4 = sD * raw["convD_b"] + shD
    s5 = sE * raw["convE_b"] + shE
    I_H = np.eye(H)
    k0a1 = np.kron(sB_[:, None] * raw["convB_w"][:, :, 0], I_H)
    k1a1 = np.kron(sB_[:, None] * raw["convB_w"][:, :, 1], I_H)
    k0b1 = np.kron(sD[:, None] * raw["convD_w"][:, :, 0], I_H)
    k1b1 = np.kron(sD[:, None] * raw["convD_w"][:, :, 1], I_H)
    kg1 = np.zeros((4 * m, m * H))
    for o in range(4 * m):
        g = o // 4
        kg1[o, g * H:(g + 1) * H] = sE[o] * raw["convE_w"][o, :]
    y1 = np.repeat(s1, H)[:, None] * np.ones((1, T))
    y2 = k0a1 @ y1[:, 0::2] + k1a1 @ y1[:, 1::2] + np.repeat(s2, H)[:, None]
    y3 = np.concatenate([y2[g * H:(g + 1) * H] @ M2[g] for g in range(m)], 0) \
        + np.repeat(s3, H)[:, None]
    y4 = k0b1 @ y3[:, 0::2] + k1b1 @ y3[:, 1::2] + np.repeat(s4, H)[:, None]
    plane = kg1 @ y4 + s5[:, None]                                  # (4m, T4)
    planeB = np.tile(plane, (B, 1))                                 # rows ordered (b, o)

    # avg-pool + channel-major flatten as MXU matmuls (no one-hot rsel tensor)
    Pmat = np.zeros((T4, Tp))
    for tp in range(Tp):
        Pmat[tp * 10:(tp + 1) * 10, tp] = 0.1
    PTile = np.tile(Pmat, (1, 4 * m))                               # (T4, Fdim)
    Dmask = np.kron(np.eye(4 * m), np.ones((1, Tp)))                # (4m, Fdim) 0/1 mask
    DmaskB = np.tile(Dmask, (B, 1))                                 # (B*4m, Fdim)
    SelB = np.kron(np.eye(B), np.ones((1, 4 * m)))                  # (B, B*4m) batch select

    wfct = _renorm_rows(raw["fc_w"], 0.5).T                         # (Fdim, nClass), pre-renormed
    bfc = raw["fc_b"][None, :]

    f32 = lambda a: jnp.asarray(a, jnp.float32)
    bf16 = lambda a: jnp.asarray(a, jnp.bfloat16)
    return {"M1E0": bf16(M1E0), "M1E1": bf16(M1E1),
            "K0A": bf16(K0A), "K1A": bf16(K1A),
            "M2E0": bf16(M2E0), "M2E1": bf16(M2E1),
            "KG0": bf16(KG0), "KG1": bf16(KG1),
            "PLANE": f32(planeB), "PTILE": f32(PTile), "DMASK": f32(DmaskB),
            "SELB": f32(SelB), "WFCT": bf16(wfct), "BFC": f32(bfc)}


# ----------------------------------------------------------------------------- numpy reference

def reference_forward(x, raw, nBands, nChan, nTime, m, nClass):
    """Direct NCHW float64 implementation of the PyTorch module (eval mode)."""
    x = np.asarray(x, np.float64)
    B = x.shape[0]

    def bn4(y, bn):
        gamma, beta, mean, var = bn
        s = gamma / np.sqrt(var + EPS)
        return s[None, :, None, None] * (y - mean[None, :, None, None]) + beta[None, :, None, None]

    def mixblock(xx, ws, bias, bn):
        Bq, C, Hq, Tq = xx.shape
        y = np.zeros_like(xx)
        for c in range(C):
            w = ws[c]
            pad = (len(w) - 1) // 2
            xp = np.pad(xx[:, c], ((0, 0), (0, 0), (pad, pad)))
            acc = np.zeros((Bq, Hq, Tq))
            for j in range(len(w)):
                acc += w[j] * xp[:, :, j:j + Tq]
            y[:, c] = acc + bias[c]
        return xx + bn4(y, bn)

    def conv12(xx, W, b):
        Bq, C, Hq, Tq = xx.shape
        To = Tq // 2
        xs = xx[:, :, :, :2 * To].reshape(Bq, C, Hq, To, 2)
        return np.einsum('mcs,bchts->bmht', W, xs) + b[None, :, None, None]

    y = mixblock(x, raw["mixA_w"], raw["mixA_b"], raw["bnA"])
    y = bn4(conv12(y, raw["convB_w"], raw["convB_b"]), raw["bnB"])
    y = mixblock(y, raw["mixC_w"], raw["mixC_b"], raw["bnC"])
    y = bn4(conv12(y, raw["convD_w"], raw["convD_b"]), raw["bnD"])

    T4 = y.shape[3]
    z = np.zeros((B, 4 * m, 1, T4))
    for o in range(4 * m):
        g = o // 4
        z[:, o, 0, :] = np.einsum('h,bht->bt', raw["convE_w"][o], y[:, g]) + raw["convE_b"][o]
    z = np.maximum(bn4(z, raw["bnE"]), 0.0)

    Tp = T4 // 10
    pooled = z[:, :, :, :Tp * 10].reshape(B, 4 * m, 1, Tp, 10).mean(-1)
    feature = pooled.reshape(B, -1)

    wfc = _renorm_rows(raw["fc_w"], 0.5)
    out = feature @ wfc.T + raw["fc_b"][None, :]
    nrm = np.maximum(np.sqrt(np.sum(feature ** 2, axis=1, keepdims=True)), 1e-12)
    return out, feature, feature / nrm


# ----------------------------------------------------------------------------- main

if __name__ == "__main__":
    B, nBands, nChan, nTime = 2, 9, 8, 160      # inputSize = (9, 8, 160)
    m, nClass = 8, 4

    key = jax.random.PRNGKey(0)
    kraw, kx = jax.random.split(key)
    raw = build_raw_model(kraw, nBands, nChan, nTime, m, nClass)
    ops = fold_ops(raw, nBands, nChan, nTime, m, nClass, B)

    x = jax.random.normal(kx, (B, nBands, nChan, nTime), jnp.float32)

    fwd = jax.jit(functools.partial(b7_forward, ops=ops))
    out, feature, nproj = fwd(x)
    jax.block_until_ready((out, feature, nproj))

    Fdim = 4 * m * ((nTime // 4) // 10)
    assert out.shape == (B, nClass)
    assert feature.shape == (B, Fdim)
    assert nproj.shape == (B, Fdim)

    # numeric check against a direct NCHW float64 implementation of the PyTorch module.
    # Tolerance reflects bf16 storage of the matmul weights/activations (f32 accumulate);
    # the pure-f32 variant of this kernel matches the f64 reference to ~1e-5.
    r_out, r_feat, r_nproj = reference_forward(np.asarray(x), raw, nBands, nChan, nTime, m, nClass)
    np.testing.assert_allclose(np.asarray(out), r_out, rtol=5e-2, atol=1e-2)
    np.testing.assert_allclose(np.asarray(feature), r_feat, rtol=5e-2, atol=1e-2)
    np.testing.assert_allclose(np.asarray(nproj), r_nproj, rtol=5e-2, atol=1e-2)

    # TODO(synk): Dropout / DropPath and BatchNorm batch-stat updates are training-mode
    # behaviours; this implementation follows eval-mode semantics (identity / running stats).
    print("KERNEL_OK")
</pallas_src>

<mosaic_0001>
module attributes {stable_mosaic.version = 11 : i64} {
  func.func @b7_fused_kernel(%arg0: i32, %arg1: memref<9x16x160xf32, #tpu.memory_space<vmem>>, %arg2: memref<9x160x80xbf16, #tpu.memory_space<vmem>>, %arg3: memref<9x160x80xbf16, #tpu.memory_space<vmem>>, %arg4: memref<128x144xbf16, #tpu.memory_space<vmem>>, %arg5: memref<128x144xbf16, #tpu.memory_space<vmem>>, %arg6: memref<8x80x40xbf16, #tpu.memory_space<vmem>>, %arg7: memref<8x80x40xbf16, #tpu.memory_space<vmem>>, %arg8: memref<64x128xbf16, #tpu.memory_space<vmem>>, %arg9: memref<64x128xbf16, #tpu.memory_space<vmem>>, %arg10: memref<64x40xf32, #tpu.memory_space<vmem>>, %arg11: memref<40x128xf32, #tpu.memory_space<vmem>>, %arg12: memref<64x128xf32, #tpu.memory_space<vmem>>, %arg13: memref<2x64xf32, #tpu.memory_space<vmem>>, %arg14: memref<128x4xbf16, #tpu.memory_space<vmem>>, %arg15: memref<1x4xf32, #tpu.memory_space<vmem>>, %arg16: memref<2x4xf32, #tpu.memory_space<vmem>>, %arg17: memref<2x128xf32, #tpu.memory_space<vmem>>, %arg18: memref<2x128xf32, #tpu.memory_space<vmem>>, %arg19: memref<144x80xbf16, #tpu.memory_space<vmem>>, %arg20: memref<144x80xbf16, #tpu.memory_space<vmem>>, %arg21: memref<128x80xbf16, #tpu.memory_space<vmem>>, %arg22: memref<128x40xbf16, #tpu.memory_space<vmem>>, %arg23: memref<128x40xbf16, #tpu.memory_space<vmem>>) attributes {dimension_semantics = [#tpu.dimension_semantics<arbitrary>], iteration_bounds = array<i64: 1>, scalar_prefetch = 0 : i64, scratch_operands = 5 : i64, tpu.core_type = #tpu.core_type<tc>, window_params = [{pipeline_mode = #tpu.pipeline_mode<synchronous>, transform_indices = @transform_0, window_bounds = array<i64: 9, 16, 160>}, {pipeline_mode = #tpu.pipeline_mode<synchronous>, transform_indices = @transform_1, window_bounds = array<i64: 9, 160, 80>}, {pipeline_mode = #tpu.pipeline_mode<synchronous>, transform_indices = @transform_2, window_bounds = array<i64: 9, 160, 80>}, {pipeline_mode = #tpu.pipeline_mode<synchronous>, transform_indices = @transform_3, window_bounds = array<i64: 128, 144>}, {pipeline_mode = #tpu.pipeline_mode<synchronous>, transform_indices = @transform_4, window_bounds = array<i64: 128, 144>}, {pipeline_mode = #tpu.pipeline_mode<synchronous>, transform_indices = @transform_5, window_bounds = array<i64: 8, 80, 40>}, {pipeline_mode = #tpu.pipeline_mode<synchronous>, transform_indices = @transform_6, window_bounds = array<i64: 8, 80, 40>}, {pipeline_mode = #tpu.pipeline_mode<synchronous>, transform_indices = @transform_7, window_bounds = array<i64: 64, 128>}, {pipeline_mode = #tpu.pipeline_mode<synchronous>, transform_indices = @transform_8, window_bounds = array<i64: 64, 128>}, {pipeline_mode = #tpu.pipeline_mode<synchronous>, transform_indices = @transform_9, window_bounds = array<i64: 64, 40>}, {pipeline_mode = #tpu.pipeline_mode<synchronous>, transform_indices = @transform_10, window_bounds = array<i64: 40, 128>}, {pipeline_mode = #tpu.pipeline_mode<synchronous>, transform_indices = @transform_11, window_bounds = array<i64: 64, 128>}, {pipeline_mode = #tpu.pipeline_mode<synchronous>, transform_indices = @transform_12, window_bounds = array<i64: 2, 64>}, {pipeline_mode = #tpu.pipeline_mode<synchronous>, transform_indices = @transform_13, window_bounds = array<i64: 128, 4>}, {pipeline_mode = #tpu.pipeline_mode<synchronous>, transform_indices = @transform_14, window_bounds = array<i64: 1, 4>}, {pipeline_mode = #tpu.pipeline_mode<synchronous>, transform_indices = @transform_15, window_bounds = array<i64: 2, 4>}, {pipeline_mode = #tpu.pipeline_mode<synchronous>, transform_indices = @transform_16, window_bounds = array<i64: 2, 128>}, {pipeline_mode = #tpu.pipeline_mode<synchronous>, transform_indices = @transform_17, window_bounds = array<i64: 2, 128>}]} {
    %c0 = arith.constant 0 : index
    %c0_0 = arith.constant 0 : index
    %c0_1 = arith.constant 0 : index
    %0 = vector.load %arg1[%c0, %c0_0, %c0_1] : memref<9x16x160xf32, #tpu.memory_space<vmem>>, vector<1x16x160xf32>
    %1 = vector.shape_cast %0 : vector<1x16x160xf32> to vector<16x160xf32>
    %2 = arith.truncf %1 : vector<16x160xf32> to vector<16x160xbf16>
    %c0_2 = arith.constant 0 : index
    %c0_3 = arith.constant 0 : index
    %c0_4 = arith.constant 0 : index
    %3 = vector.load %arg2[%c0_2, %c0_3, %c0_4] : memref<9x160x80xbf16, #tpu.memory_space<vmem>>, vector<1x160x80xbf16>
    %4 = vector.shape_cast %3 : vector<1x160x80xbf16> to vector<160x80xbf16>
    %cst = arith.constant dense<0.000000e+00> : vector<16x80xf32>
    %5 = tpu.matmul %2, %4, %cst {dimension_numbers = #tpu.dot_dimension_numbers<[1], [0], [0], [1], [0, 0, 1, 1], [], []>} : vector<16x160xbf16>, vector<160x80xbf16>, vector<16x80xf32> -> vector<16x80xf32>
    %6 = arith.truncf %5 : vector<16x80xf32> to vector<16x80xbf16>
    %c0_5 = arith.constant 0 : index
    %c0_6 = arith.constant 0 : index
    %7 = vector.load %arg19[%c0_5, %c0_6] : memref<144x80xbf16, #tpu.memory_space<vmem>>, vector<16x80xbf16>
    tpu.vector_store %arg19[%c0_5, %c0_6], %6 {strides = array<i32>} : memref<144x80xbf16, #tpu.memory_space<vmem>>, vector<16x80xbf16>,
    %c0_7 = arith.constant 0 : index
    %c0_8 = arith.constant 0 : index
    %c0_9 = arith.constant 0 : index
    %8 = vector.load %arg3[%c0_7, %c0_8, %c0_9] : memref<9x160x80xbf16, #tpu.memory_space<vmem>>, vector<1x160x80xbf16>
    %9 = vector.shape_cast %8 : vector<1x160x80xbf16> to vector<160x80xbf16>
    %cst_10 = arith.constant dense<0.000000e+00> : vector<16x80xf32>
    %10 = tpu.matmul %2, %9, %cst_10 {dimension_numbers = #tpu.dot_dimension_numbers<[1], [0], [0], [1], [0, 0, 1, 1], [], []>} : vector<16x160xbf16>, vector<160x80xbf16>, vector<16x80xf32> -> vector<16x80xf32>
    %11 = arith.truncf %10 : vector<16x80xf32> to vector<16x80xbf16>
    %c0_11 = arith.constant 0 : index
    %c0_12 = arith.constant 0 : index
    %12 = vector.load %arg20[%c0_11, %c0_12] : memref<144x80xbf16, #tpu.memory_space<vmem>>, vector<16x80xbf16>
    tpu.vector_store %arg20[%c0_11, %c0_12], %11 {strides = array<i32>} : memref<144x80xbf16, #tpu.memory_space<vmem>>, vector<16x80xbf16>,
    %c1 = arith.constant 1 : index
    %c0_13 = arith.constant 0 : index
    %c0_14 = arith.constant 0 : index
    %13 = vector.load %arg1[%c1, %c0_13, %c0_14] : memref<9x16x160xf32, #tpu.memory_space<vmem>>, vector<1x16x160xf32>
    %14 = vector.shape_cast %13 : vector<1x16x160xf32> to vector<16x160xf32>
    %15 = arith.truncf %14 : vector<16x160xf32> to vector<16x160xbf16>
    %c1_15 = arith.constant 1 : index
    %c0_16 = arith.constant 0 : index
    %c0_17 = arith.constant 0 : index
    %16 = vector.load %arg2[%c1_15, %c0_16, %c0_17] : memref<9x160x80xbf16, #tpu.memory_space<vmem>>, vector<1x160x80xbf16>
    %17 = vector.shape_cast %16 : vector<1x160x80xbf16> to vector<160x80xbf16>
    %cst_18 = arith.constant dense<0.000000e+00> : vector<16x80xf32>
    %18 = tpu.matmul %15, %17, %cst_18 {dimension_numbers = #tpu.dot_dimension_numbers<[1], [0], [0], [1], [0, 0, 1, 1], [], []>} : vector<16x160xbf16>, vector<160x80xbf16>, vector<16x80xf32> -> vector<16x80xf32>
    %19 = arith.truncf %18 : vector<16x80xf32> to vector<16x80xbf16>
    %c16 = arith.constant 16 : index
    %c0_19 = arith.constant 0 : index
    %20 = vector.load %arg19[%c16, %c0_19] : memref<144x80xbf16, #tpu.memory_space<vmem>>, vector<16x80xbf16>
    tpu.vector_store %arg19[%c16, %c0_19], %19 {strides = array<i32>} : memref<144x80xbf16, #tpu.memory_space<vmem>>, vector<16x80xbf16>,
    %c1_20 = arith.constant 1 : index
    %c0_21 = arith.constant 0 : index
    %c0_22 = arith.constant 0 : index
    %21 = vector.load %arg3[%c1_20, %c0_21, %c0_22] : memref<9x160x80xbf16, #tpu.memory_space<vmem>>, vector<1x160x80xbf16>
    %22 = vector.shape_cast %21 : vector<1x160x80xbf16> to vector<160x80xbf16>
    %cst_23 = arith.constant dense<0.000000e+00> : vector<16x80xf32>
    %23 = tpu.matmul %15, %22, %cst_23 {dimension_numbers = #tpu.dot_dimension_numbers<[1], [0], [0], [1], [0, 0, 1, 1], [], []>} : vector<16x160xbf16>, vector<160x80xbf16>, vector<16x80xf32> -> vector<16x80xf32>
    %24 = arith.truncf %23 : vector<16x80xf32> to vector<16x80xbf16>
    %c16_24 = arith.constant 16 : index
    %c0_25 = arith.constant 0 : index
    %25 = vector.load %arg20[%c16_24, %c0_25] : memref<144x80xbf16, #tpu.memory_space<vmem>>, vector<16x80xbf16>
    tpu.vector_store %arg20[%c16_24, %c0_25], %24 {strides = array<i32>} : memref<144x80xbf16, #tpu.memory_space<vmem>>, vector<16x80xbf16>,
    %c2 = arith.constant 2 : index
    %c0_26 = arith.constant 0 : index
    %c0_27 = arith.constant 0 : index
    %26 = vector.load %arg1[%c2, %c0_26, %c0_27] : memref<9x16x160xf32, #tpu.memory_space<vmem>>, vector<1x16x160xf32>
    %27 = vector.shape_cast %26 : vector<1x16x160xf32> to vector<16x160xf32>
    %28 = arith.truncf %27 : vector<16x160xf32> to vector<16x160xbf16>
    %c2_28 = arith.constant 2 : index
    %c0_29 = arith.constant 0 : index
    %c0_30 = arith.constant 0 : index
    %29 = vector.load %arg2[%c2_28, %c0_29, %c0_30] : memref<9x160x80xbf16, #tpu.memory_space<vmem>>, vector<1x160x80xbf16>
    %30 = vector.shape_cast %29 : vector<1x160x80xbf16> to vector<160x80xbf16>
    %cst_31 = arith.constant dense<0.000000e+00> : vector<16x80xf32>
    %31 = tpu.matmul %28, %30, %cst_31 {dimension_numbers = #tpu.dot_dimension_numbers<[1], [0], [0], [1], [0, 0, 1, 1], [], []>} : vector<16x160xbf16>, vector<160x80xbf16>, vector<16x80xf32> -> vector<16x80xf32>
    %32 = arith.truncf %31 : vector<16x80xf32> to vector<16x80xbf16>
    %c32 = arith.constant 32 : index
    %c0_32 = arith.constant 0 : index
    %33 = vector.load %arg19[%c32, %c0_32] : memref<144x80xbf16, #tpu.memory_space<vmem>>, vector<16x80xbf16>
    tpu.vector_store %arg19[%c32, %c0_32], %32 {strides = array<i32>} : memref<144x80xbf16, #tpu.memory_space<vmem>>, vector<16x80xbf16>,
    %c2_33 = arith.constant 2 : index
    %c0_34 = arith.constant 0 : index
    %c0_35 = arith.constant 0 : index
    %34 = vector.load %arg3[%c2_33, %c0_34, %c0_35] : memref<9x160x80xbf16, #tpu.memory_space<vmem>>, vector<1x160x80xbf16>
    %35 = vector.shape_cast %34 : vector<1x160x80xbf16> to vector<160x80xbf16>
    %cst_36 = arith.constant dense<0.000000e+00> : vector<16x80xf32>
    %36 = tpu.matmul %28, %35, %cst_36 {dimension_numbers = #tpu.dot_dimension_numbers<[1], [0], [0], [1], [0, 0, 1, 1], [], []>} : vector<16x160xbf16>, vector<160x80xbf16>, vector<16x80xf32> -> vector<16x80xf32>
    %37 = arith.truncf %36 : vector<16x80xf32> to vector<16x80xbf16>
    %c32_37 = arith.constant 32 : index
    %c0_38 = arith.constant 0 : index
    %38 = vector.load %arg20[%c32_37, %c0_38] : memref<144x80xbf16, #tpu.memory_space<vmem>>, vector<16x80xbf16>
    tpu.vector_store %arg20[%c32_37, %c0_38], %37 {strides = array<i32>} : memref<144x80xbf16, #tpu.memory_space<vmem>>, vector<16x80xbf16>,
    %c3 = arith.constant 3 : index
    %c0_39 = arith.constant 0 : index
    %c0_40 = arith.constant 0 : index
    %39 = vector.load %arg1[%c3, %c0_39, %c0_40] : memref<9x16x160xf32, #tpu.memory_space<vmem>>, vector<1x16x160xf32>
    %40 = vector.shape_cast %39 : vector<1x16x160xf32> to vector<16x160xf32>
    %41 = arith.truncf %40 : vector<16x160xf32> to vector<16x160xbf16>
    %c3_41 = arith.constant 3 : index
    %c0_42 = arith.constant 0 : index
    %c0_43 = arith.constant 0 : index
    %42 = vector.load %arg2[%c3_41, %c0_42, %c0_43] : memref<9x160x80xbf16, #tpu.memory_space<vmem>>, vector<1x160x80xbf16>
    %43 = vector.shape_cast %42 : vector<1x160x80xbf16> to vector<160x80xbf16>
    %cst_44 = arith.constant dense<0.000000e+00> : vector<16x80xf32>
    %44 = tpu.matmul %41, %43, %cst_44 {dimension_numbers = #tpu.dot_dimension_numbers<[1], [0], [0], [1], [0, 0, 1, 1], [], []>} : vector<16x160xbf16>, vector<160x80xbf16>, vector<16x80xf32> -> vector<16x80xf32>
    %45 = arith.truncf %44 : vector<16x80xf32> to vector<16x80xbf16>
    %c48 = arith.constant 48 : index
    %c0_45 = arith.constant 0 : index
    %46 = vector.load %arg19[%c48, %c0_45] : memref<144x80xbf16, #tpu.memory_space<vmem>>, vector<16x80xbf16>
    tpu.vector_store %arg19[%c48, %c0_45], %45 {strides = array<i32>} : memref<144x80xbf16, #tpu.memory_space<vmem>>, vector<16x80xbf16>,
    %c3_46 = arith.constant 3 : index
    %c0_47 = arith.constant 0 : index
    %c0_48 = arith.constant 0 : index
    %47 = vector.load %arg3[%c3_46, %c0_47, %c0_48] : memref<9x160x80xbf16, #tpu.memory_space<vmem>>, vector<1x160x80xbf16>
    %48 = vector.shape_cast %47 : vector<1x160x80xbf16> to vector<160x80xbf16>
    %cst_49 = arith.constant dense<0.000000e+00> : vector<16x80xf32>
    %49 = tpu.matmul %41, %48, %cst_49 {dimension_numbers = #tpu.dot_dimension_numbers<[1], [0], [0], [1], [0, 0, 1, 1], [], []>} : vector<16x160xbf16>, vector<160x80xbf16>, vector<16x80xf32> -> vector<16x80xf32>
    %50 = arith.truncf %49 : vector<16x80xf32> to vector<16x80xbf16>
    %c48_50 = arith.constant 48 : index
    %c0_51 = arith.constant 0 : index
    %51 = vector.load %arg20[%c48_50, %c0_51] : memref<144x80xbf16, #tpu.memory_space<vmem>>, vector<16x80xbf16>
    tpu.vector_store %arg20[%c48_50, %c0_51], %50 {strides = array<i32>} : memref<144x80xbf16, #tpu.memory_space<vmem>>, vector<16x80xbf16>,
    %c4 = arith.constant 4 : index
    %c0_52 = arith.constant 0 : index
    %c0_53 = arith.constant 0 : index
    %52 = vector.load %arg1[%c4, %c0_52, %c0_53] : memref<9x16x160xf32, #tpu.memory_space<vmem>>, vector<1x16x160xf32>
    %53 = vector.shape_cast %52 : vector<1x16x160xf32> to vector<16x160xf32>
    %54 = arith.truncf %53 : vector<16x160xf32> to vector<16x160xbf16>
    %c4_54 = arith.constant 4 : index
    %c0_55 = arith.constant 0 : index
    %c0_56 = arith.constant 0 : index
    %55 = vector.load %arg2[%c4_54, %c0_55, %c0_56] : memref<9x160x80xbf16, #tpu.memory_space<vmem>>, vector<1x160x80xbf16>
    %56 = vector.shape_cast %55 : vector<1x160x80xbf16> to vector<160x80xbf16>
    %cst_57 = arith.constant dense<0.000000e+00> : vector<16x80xf32>
    %57 = tpu.matmul %54, %56, %cst_57 {dimension_numbers = #tpu.dot_dimension_numbers<[1], [0], [0], [1], [0, 0, 1, 1], [], []>} : vector<16x160xbf16>, vector<160x80xbf16>, vector<16x80xf32> -> vector<16x80xf32>
    %58 = arith.truncf %57 : vector<16x80xf32> to vector<16x80xbf16>
    %c64 = arith.constant 64 : index
    %c0_58 = arith.constant 0 : index
    %59 = vector.load %arg19[%c64, %c0_58] : memref<144x80xbf16, #tpu.memory_space<vmem>>, vector<16x80xbf16>
    tpu.vector_store %arg19[%c64, %c0_58], %58 {strides = array<i32>} : memref<144x80xbf16, #tpu.memory_space<vmem>>, vector<16x80xbf16>,
    %c4_59 = arith.constant 4 : index
    %c0_60 = arith.constant 0 : index
    %c0_61 = arith.constant 0 : index
    %60 = vector.load %arg3[%c4_59, %c0_60, %c0_61] : memref<9x160x80xbf16, #tpu.memory_space<vmem>>, vector<1x160x80xbf16>
    %61 = vector.shape_cast %60 : vector<1x160x80xbf16> to vector<160x80xbf16>
    %cst_62 = arith.constant dense<0.000000e+00> : vector<16x80xf32>
    %62 = tpu.matmul %54, %61, %cst_62 {dimension_numbers = #tpu.dot_dimension_numbers<[1], [0], [0], [1], [0, 0, 1, 1], [], []>} : vector<16x160xbf16>, vector<160x80xbf16>, vector<16x80xf32> -> vector<16x80xf32>
    %63 = arith.truncf %62 : vector<16x80xf32> to vector<16x80xbf16>
    %c64_63 = arith.constant 64 : index
    %c0_64 = arith.constant 0 : index
    %64 = vector.load %arg20[%c64_63, %c0_64] : memref<144x80xbf16, #tpu.memory_space<vmem>>, vector<16x80xbf16>
    tpu.vector_store %arg20[%c64_63, %c0_64], %63 {strides = array<i32>} : memref<144x80xbf16, #tpu.memory_space<vmem>>, vector<16x80xbf16>,
    %c5 = arith.constant 5 : index
    %c0_65 = arith.constant 0 : index
    %c0_66 = arith.constant 0 : index
    %65 = vector.load %arg1[%c5, %c0_65, %c0_66] : memref<9x16x160xf32, #tpu.memory_space<vmem>>, vector<1x16x160xf32>
    %66 = vector.shape_cast %65 : vector<1x16x160xf32> to vector<16x160xf32>
    %67 = arith.truncf %66 : vector<16x160xf32> to vector<16x160xbf16>
    %c5_67 = arith.constant 5 : index
    %c0_68 = arith.constant 0 : index
    %c0_69 = arith.constant 0 : index
    %68 = vector.load %arg2[%c5_67, %c0_68, %c0_69] : memref<9x160x80xbf16, #tpu.memory_space<vmem>>, vector<1x160x80xbf16>
    %69 = vector.shape_cast %68 : vector<1x160x80xbf16> to vector<160x80xbf16>
    %cst_70 = arith.constant dense<0.000000e+00> : vector<16x80xf32>
    %70 = tpu.matmul %67, %69, %cst_70 {dimension_numbers = #tpu.dot_dimension_numbers<[1], [0], [0], [1], [0, 0, 1, 1], [], []>} : vector<16x160xbf16>, vector<160x80xbf16>, vector<16x80xf32> -> vector<16x80xf32>
    %71 = arith.truncf %70 : vector<16x80xf32> to vector<16x80xbf16>
    %c80 = arith.constant 80 : index
    %c0_71 = arith.constant 0 : index
    %72 = vector.load %arg19[%c80, %c0_71] : memref<144x80xbf16, #tpu.memory_space<vmem>>, vector<16x80xbf16>
    tpu.vector_store %arg19[%c80, %c0_71], %71 {strides = array<i32>} : memref<144x80xbf16, #tpu.memory_space<vmem>>, vector<16x80xbf16>,
    %c5_72 = arith.constant 5 : index
    %c0_73 = arith.constant 0 : index
    %c0_74 = arith.constant 0 : index
    %73 = vector.load %arg3[%c5_72, %c0_73, %c0_74] : memref<9x160x80xbf16, #tpu.memory_space<vmem>>, vector<1x160x80xbf16>
    %74 = vector.shape_cast %73 : vector<1x160x80xbf16> to vector<160x80xbf16>
    %cst_75 = arith.constant dense<0.000000e+00> : vector<16x80xf32>
    %75 = tpu.matmul %67, %74, %cst_75 {dimension_numbers = #tpu.dot_dimension_numbers<[1], [0], [0], [1], [0, 0, 1, 1], [], []>} : vector<16x160xbf16>, vector<160x80xbf16>, vector<16x80xf32> -> vector<16x80xf32>
    %76 = arith.truncf %75 : vector<16x80xf32> to vector<16x80xbf16>
    %c80_76 = arith.constant 80 : index
    %c0_77 = arith.constant 0 : index
    %77 = vector.load %arg20[%c80_76, %c0_77] : memref<144x80xbf16, #tpu.memory_space<vmem>>, vector<16x80xbf16>
    tpu.vector_store %arg20[%c80_76, %c0_77], %76 {strides = array<i32>} : memref<144x80xbf16, #tpu.memory_space<vmem>>, vector<16x80xbf16>,
    %c6 = arith.constant 6 : index
    %c0_78 = arith.constant 0 : index
    %c0_79 = arith.constant 0 : index
    %78 = vector.load %arg1[%c6, %c0_78, %c0_79] : memref<9x16x160xf32, #tpu.memory_space<vmem>>, vector<1x16x160xf32>
    %79 = vector.shape_cast %78 : vector<1x16x160xf32> to vector<16x160xf32>
    %80 = arith.truncf %79 : vector<16x160xf32> to vector<16x160xbf16>
    %c6_80 = arith.constant 6 : index
    %c0_81 = arith.constant 0 : index
    %c0_82 = arith.constant 0 : index
    %81 = vector.load %arg2[%c6_80, %c0_81, %c0_82] : memref<9x160x80xbf16, #tpu.memory_space<vmem>>, vector<1x160x80xbf16>
    %82 = vector.shape_cast %81 : vector<1x160x80xbf16> to vector<160x80xbf16>
    %cst_83 = arith.constant dense<0.000000e+00> : vector<16x80xf32>
    %83 = tpu.matmul %80, %82, %cst_83 {dimension_numbers = #tpu.dot_dimension_numbers<[1], [0], [0], [1], [0, 0, 1, 1], [], []>} : vector<16x160xbf16>, vector<160x80xbf16>, vector<16x80xf32> -> vector<16x80xf32>
    %84 = arith.truncf %83 : vector<16x80xf32> to vector<16x80xbf16>
    %c96 = arith.constant 96 : index
    %c0_84 = arith.constant 0 : index
    %85 = vector.load %arg19[%c96, %c0_84] : memref<144x80xbf16, #tpu.memory_space<vmem>>, vector<16x80xbf16>
    tpu.vector_store %arg19[%c96, %c0_84], %84 {strides = array<i32>} : memref<144x80xbf16, #tpu.memory_space<vmem>>, vector<16x80xbf16>,
    %c6_85 = arith.constant 6 : index
    %c0_86 = arith.constant 0 : index
    %c0_87 = arith.constant 0 : index
    %86 = vector.load %arg3[%c6_85, %c0_86, %c0_87] : memref<9x160x80xbf16, #tpu.memory_space<vmem>>, vector<1x160x80xbf16>
    %87 = vector.shape_cast %86 : vector<1x160x80xbf16> to vector<160x80xbf16>
    %cst_88 = arith.constant dense<0.000000e+00> : vector<16x80xf32>
    %88 = tpu.matmul %80, %87, %cst_88 {dimension_numbers = #tpu.dot_dimension_numbers<[1], [0], [0], [1], [0, 0, 1, 1], [], []>} : vector<16x160xbf16>, vector<160x80xbf16>, vector<16x80xf32> -> vector<16x80xf32>
    %89 = arith.truncf %88 : vector<16x80xf32> to vector<16x80xbf16>
    %c96_89 = arith.constant 96 : index
    %c0_90 = arith.constant 0 : index
    %90 = vector.load %arg20[%c96_89, %c0_90] : memref<144x80xbf16, #tpu.memory_space<vmem>>, vector<16x80xbf16>
    tpu.vector_store %arg20[%c96_89, %c0_90], %89 {strides = array<i32>} : memref<144x80xbf16, #tpu.memory_space<vmem>>, vector<16x80xbf16>,
    %c7 = arith.constant 7 : index
    %c0_91 = arith.constant 0 : index
    %c0_92 = arith.constant 0 : index
    %91 = vector.load %arg1[%c7, %c0_91, %c0_92] : memref<9x16x160xf32, #tpu.memory_space<vmem>>, vector<1x16x160xf32>
    %92 = vector.shape_cast %91 : vector<1x16x160xf32> to vector<16x160xf32>
    %93 = arith.truncf %92 : vector<16x160xf32> to vector<16x160xbf16>
    %c7_93 = arith.constant 7 : index
    %c0_94 = arith.constant 0 : index
    %c0_95 = arith.constant 0 : index
    %94 = vector.load %arg2[%c7_93, %c0_94, %c0_95] : memref<9x160x80xbf16, #tpu.memory_space<vmem>>, vector<1x160x80xbf16>
    %95 = vector.shape_cast %94 : vector<1x160x80xbf16> to vector<160x80xbf16>
    %cst_96 = arith.constant dense<0.000000e+00> : vector<16x80xf32>
    %96 = tpu.matmul %93, %95, %cst_96 {dimension_numbers = #tpu.dot_dimension_numbers<[1], [0], [0], [1], [0, 0, 1, 1], [], []>} : vector<16x160xbf16>, vector<160x80xbf16>, vector<16x80xf32> -> vector<16x80xf32>
    %97 = arith.truncf %96 : vector<16x80xf32> to vector<16x80xbf16>
    %c112 = arith.constant 112 : index
    %c0_97 = arith.constant 0 : index
    %98 = vector.load %arg19[%c112, %c0_97] : memref<144x80xbf16, #tpu.memory_space<vmem>>, vector<16x80xbf16>
    tpu.vector_store %arg19[%c112, %c0_97], %97 {strides = array<i32>} : memref<144x80xbf16, #tpu.memory_space<vmem>>, vector<16x80xbf16>,
    %c7_98 = arith.constant 7 : index
    %c0_99 = arith.constant 0 : index
    %c0_100 = arith.constant 0 : index
    %99 = vector.load %arg3[%c7_98, %c0_99, %c0_100] : memref<9x160x80xbf16, #tpu.memory_space<vmem>>, vector<1x160x80xbf16>
    %100 = vector.shape_cast %99 : vector<1x160x80xbf16> to vector<160x80xbf16>
    %cst_101 = arith.constant dense<0.000000e+00> : vector<16x80xf32>
    %101 = tpu.matmul %93, %100, %cst_101 {dimension_numbers = #tpu.dot_dimension_numbers<[1], [0], [0], [1], [0, 0, 1, 1], [], []>} : vector<16x160xbf16>, vector<160x80xbf16>, vector<16x80xf32> -> vector<16x80xf32>
    %102 = arith.truncf %101 : vector<16x80xf32> to vector<16x80xbf16>
    %c112_102 = arith.constant 112 : index
    %c0_103 = arith.constant 0 : index
    %103 = vector.load %arg20[%c112_102, %c0_103] : memref<144x80xbf16, #tpu.memory_space<vmem>>, vector<16x80xbf16>
    tpu.vector_store %arg20[%c112_102, %c0_103], %102 {strides = array<i32>} : memref<144x80xbf16, #tpu.memory_space<vmem>>, vector<16x80xbf16>,
    %c8 = arith.constant 8 : index
    %c0_104 = arith.constant 0 : index
    %c0_105 = arith.constant 0 : index
    %104 = vector.load %arg1[%c8, %c0_104, %c0_105] : memref<9x16x160xf32, #tpu.memory_space<vmem>>, vector<1x16x160xf32>
    %105 = vector.shape_cast %104 : vector<1x16x160xf32> to vector<16x160xf32>
    %106 = arith.truncf %105 : vector<16x160xf32> to vector<16x160xbf16>
    %c8_106 = arith.constant 8 : index
    %c0_107 = arith.constant 0 : index
    %c0_108 = arith.constant 0 : index
    %107 = vector.load %arg2[%c8_106, %c0_107, %c0_108] : memref<9x160x80xbf16, #tpu.memory_space<vmem>>, vector<1x160x80xbf16>
    %108 = vector.shape_cast %107 : vector<1x160x80xbf16> to vector<160x80xbf16>
    %cst_109 = arith.constant dense<0.000000e+00> : vector<16x80xf32>
    %109 = tpu.matmul %106, %108, %cst_109 {dimension_numbers = #tpu.dot_dimension_numbers<[1], [0], [0], [1], [0, 0, 1, 1], [], []>} : vector<16x160xbf16>, vector<160x80xbf16>, vector<16x80xf32> -> vector<16x80xf32>
    %110 = arith.truncf %109 : vector<16x80xf32> to vector<16x80xbf16>
    %c128 = arith.constant 128 : index
    %c0_110 = arith.constant 0 : index
    %111 = vector.load %arg19[%c128, %c0_110] : memref<144x80xbf16, #tpu.memory_space<vmem>>, vector<16x80xbf16>
    tpu.vector_store %arg19[%c128, %c0_110], %110 {strides = array<i32>} : memref<144x80xbf16, #tpu.memory_space<vmem>>, vector<16x80xbf16>,
    %c8_111 = arith.constant 8 : index
    %c0_112 = arith.constant 0 : index
    %c0_113 = arith.constant 0 : index
    %112 = vector.load %arg3[%c8_111, %c0_112, %c0_113] : memref<9x160x80xbf16, #tpu.memory_space<vmem>>, vector<1x160x80xbf16>
    %113 = vector.shape_cast %112 : vector<1x160x80xbf16> to vector<160x80xbf16>
    %cst_114 = arith.constant dense<0.000000e+00> : vector<16x80xf32>
    %114 = tpu.matmul %106, %113, %cst_114 {dimension_numbers = #tpu.dot_dimension_numbers<[1], [0], [0], [1], [0, 0, 1, 1], [], []>} : vector<16x160xbf16>, vector<160x80xbf16>, vector<16x80xf32> -> vector<16x80xf32>
    %115 = arith.truncf %114 : vector<16x80xf32> to vector<16x80xbf16>
    %c128_115 = arith.constant 128 : index
    %c0_116 = arith.constant 0 : index
    %116 = vector.load %arg20[%c128_115, %c0_116] : memref<144x80xbf16, #tpu.memory_space<vmem>>, vector<16x80xbf16>
    tpu.vector_store %arg20[%c128_115, %c0_116], %115 {strides = array<i32>} : memref<144x80xbf16, #tpu.memory_space<vmem>>, vector<16x80xbf16>,
    %c0_117 = arith.constant 0 : index
    %c0_118 = arith.constant 0 : index
    %117 = vector.load %arg4[%c0_117, %c0_118] : memref<128x144xbf16, #tpu.memory_space<vmem>>, vector<128x144xbf16>
    %c0_119 = arith.constant 0 : index
    %c0_120 = arith.constant 0 : index
    %118 = vector.load %arg19[%c0_119, %c0_120] : memref<144x80xbf16, #tpu.memory_space<vmem>>, vector<144x80xbf16>
    %cst_121 = arith.constant dense<0.000000e+00> : vector<128x80xf32>
    %119 = tpu.matmul %117, %118, %cst_121 {dimension_numbers = #tpu.dot_dimension_numbers<[1], [0], [0], [1], [0, 0, 1, 1], [], []>} : vector<128x144xbf16>, vector<144x80xbf16>, vector<128x80xf32> -> vector<128x80xf32>
    %c0_122 = arith.constant 0 : index
    %c0_123 = arith.constant 0 : index
    %120 = vector.load %arg5[%c0_122, %c0_123] : memref<128x144xbf16, #tpu.memory_space<vmem>>, vector<128x144xbf16>
    %c0_124 = arith.constant 0 : index
    %c0_125 = arith.constant 0 : index
    %121 = vector.load %arg20[%c0_124, %c0_125] : memref<144x80xbf16, #tpu.memory_space<vmem>>, vector<144x80xbf16>
    %cst_126 = arith.constant dense<0.000000e+00> : vector<128x80xf32>
    %122 = tpu.matmul %120, %121, %cst_126 {dimension_numbers = #tpu.dot_dimension_numbers<[1], [0], [0], [1], [0, 0, 1, 1], [], []>} : vector<128x144xbf16>, vector<144x80xbf16>, vector<128x80xf32> -> vector<128x80xf32>
    %123 = arith.addf %119, %122 : vector<128x80xf32>
    %124 = arith.truncf %123 : vector<128x80xf32> to vector<128x80xbf16>
    %c0_127 = arith.constant 0 : index
    %c0_128 = arith.constant 0 : index
    %125 = vector.load %arg21[%c0_127, %c0_128] : memref<128x80xbf16, #tpu.memory_space<vmem>>, vector<128x80xbf16>
    tpu.vector_store %arg21[%c0_127, %c0_128], %124 {strides = array<i32>} : memref<128x80xbf16, #tpu.memory_space<vmem>>, vector<128x80xbf16>,
    %c0_129 = arith.constant 0 : index
    %c0_130 = arith.constant 0 : index
    %126 = vector.load %arg21[%c0_129, %c0_130] : memref<128x80xbf16, #tpu.memory_space<vmem>>, vector<16x80xbf16>
    %c0_131 = arith.constant 0 : index
    %c0_132 = arith.constant 0 : index
    %c0_133 = arith.constant 0 : index
    %127 = vector.load %arg6[%c0_131, %c0_132, %c0_133] : memref<8x80x40xbf16, #tpu.memory_space<vmem>>, vector<1x80x40xbf16>
    %128 = vector.shape_cast %127 : vector<1x80x40xbf16> to vector<80x40xbf16>
    %cst_134 = arith.constant dense<0.000000e+00> : vector<16x40xf32>
    %129 = tpu.matmul %126, %128, %cst_134 {dimension_numbers = #tpu.dot_dimension_numbers<[1], [0], [0], [1], [0, 0, 1, 1], [], []>} : vector<16x80xbf16>, vector<80x40xbf16>, vector<16x40xf32> -> vector<16x40xf32>
    %130 = arith.truncf %129 : vector<16x40xf32> to vector<16x40xbf16>
    %c0_135 = arith.constant 0 : index
    %c0_136 = arith.constant 0 : index
    %131 = vector.load %arg22[%c0_135, %c0_136] : memref<128x40xbf16, #tpu.memory_space<vmem>>, vector<16x40xbf16>
    tpu.vector_store %arg22[%c0_135, %c0_136], %130 {strides = array<i32>} : memref<128x40xbf16, #tpu.memory_space<vmem>>, vector<16x40xbf16>,
    %c0_137 = arith.constant 0 : index
    %c0_138 = arith.constant 0 : index
    %c0_139 = arith.constant 0 : index
    %132 = vector.load %arg7[%c0_137, %c0_138, %c0_139] : memref<8x80x40xbf16, #tpu.memory_space<vmem>>, vector<1x80x40xbf16>
    %133 = vector.shape_cast %132 : vector<1x80x40xbf16> to vector<80x40xbf16>
    %cst_140 = arith.constant dense<0.000000e+00> : vector<16x40xf32>
    %134 = tpu.matmul %126, %133, %cst_140 {dimension_numbers = #tpu.dot_dimension_numbers<[1], [0], [0], [1], [0, 0, 1, 1], [], []>} : vector<16x80xbf16>, vector<80x40xbf16>, vector<16x40xf32> -> vector<16x40xf32>
    %135 = arith.truncf %134 : vector<16x40xf32> to vector<16x40xbf16>
    %c0_141 = arith.constant 0 : index
    %c0_142 = arith.constant 0 : index
    %136 = vector.load %arg23[%c0_141, %c0_142] : memref<128x40xbf16, #tpu.memory_space<vmem>>, vector<16x40xbf16>
    tpu.vector_store %arg23[%c0_141, %c0_142], %135 {strides = array<i32>} : memref<128x40xbf16, #tpu.memory_space<vmem>>, vector<16x40xbf16>,
    %c16_143 = arith.constant 16 : index
    %c0_144 = arith.constant 0 : index
    %137 = vector.load %arg21[%c16_143, %c0_144] : memref<128x80xbf16, #tpu.memory_space<vmem>>, vector<16x80xbf16>
    %c1_145 = arith.constant 1 : index
    %c0_146 = arith.constant 0 : index
    %c0_147 = arith.constant 0 : index
    %138 = vector.load %arg6[%c1_145, %c0_146, %c0_147] : memref<8x80x40xbf16, #tpu.memory_space<vmem>>, vector<1x80x40xbf16>
    %139 = vector.shape_cast %138 : vector<1x80x40xbf16> to vector<80x40xbf16>
    %cst_148 = arith.constant dense<0.000000e+00> : vector<16x40xf32>
    %140 = tpu.matmul %137, %139, %cst_148 {dimension_numbers = #tpu.dot_dimension_numbers<[1], [0], [0], [1], [0, 0, 1, 1], [], []>} : vector<16x80xbf16>, vector<80x40xbf16>, vector<16x40xf32> -> vector<16x40xf32>
    %141 = arith.truncf %140 : vector<16x40xf32> to vector<16x40xbf16>
    %c16_149 = arith.constant 16 : index
    %c0_150 = arith.constant 0 : index
    %142 = vector.load %arg22[%c16_149, %c0_150] : memref<128x40xbf16, #tpu.memory_space<vmem>>, vector<16x40xbf16>
    tpu.vector_store %arg22[%c16_149, %c0_150], %141 {strides = array<i32>} : memref<128x40xbf16, #tpu.memory_space<vmem>>, vector<16x40xbf16>,
    %c1_151 = arith.constant 1 : index
    %c0_152 = arith.constant 0 : index
    %c0_153 = arith.constant 0 : index
    %143 = vector.load %arg7[%c1_151, %c0_152, %c0_153] : memref<8x80x40xbf16, #tpu.memory_space<vmem>>, vector<1x80x40xbf16>
    %144 = vector.shape_cast %143 : vector<1x80x40xbf16> to vector<80x40xbf16>
    %cst_154 = arith.constant dense<0.000000e+00> : vector<16x40xf32>
    %145 = tpu.matmul %137, %144, %cst_154 {dimension_numbers = #tpu.dot_dimension_numbers<[1], [0], [0], [1], [0, 0, 1, 1], [], []>} : vector<16x80xbf16>, vector<80x40xbf16>, vector<16x40xf32> -> vector<16x40xf32>
    %146 = arith.truncf %145 : vector<16x40xf32> to vector<16x40xbf16>
    %c16_155 = arith.constant 16 : index
    %c0_156 = arith.constant 0 : index
    %147 = vector.load %arg23[%c16_155, %c0_156] : memref<128x40xbf16, #tpu.memory_space<vmem>>, vector<16x40xbf16>
    tpu.vector_store %arg23[%c16_155, %c0_156], %146 {strides = array<i32>} : memref<128x40xbf16, #tpu.memory_space<vmem>>, vector<16x40xbf16>,
    %c32_157 = arith.constant 32 : index
    %c0_158 = arith.constant 0 : index
    %148 = vector.load %arg21[%c32_157, %c0_158] : memref<128x80xbf16, #tpu.memory_space<vmem>>, vector<16x80xbf16>
    %c2_159 = arith.constant 2 : index
    %c0_160 = arith.constant 0 : index
    %c0_161 = arith.constant 0 : index
    %149 = vector.load %arg6[%c2_159, %c0_160, %c0_161] : memref<8x80x40xbf16, #tpu.memory_space<vmem>>, vector<1x80x40xbf16>
    %150 = vector.shape_cast %149 : vector<1x80x40xbf16> to vector<80x40xbf16>
    %cst_162 = arith.constant dense<0.000000e+00> : vector<16x40xf32>
    %151 = tpu.matmul %148, %150, %cst_162 {dimension_numbers = #tpu.dot_dimension_numbers<[1], [0], [0], [1], [0, 0, 1, 1], [], []>} : vector<16x80xbf16>, vector<80x40xbf16>, vector<16x40xf32> -> vector<16x40xf32>
    %152 = arith.truncf %151 : vector<16x40xf32> to vector<16x40xbf16>
    %c32_163 = arith.constant 32 : index
    %c0_164 = arith.constant 0 : index
    %153 = vector.load %arg22[%c32_163, %c0_164] : memref<128x40xbf16, #tpu.memory_space<vmem>>, vector<16x40xbf16>
    tpu.vector_store %arg22[%c32_163, %c0_164], %152 {strides = array<i32>} : memref<128x40xbf16, #tpu.memory_space<vmem>>, vector<16x40xbf16>,
    %c2_165 = arith.constant 2 : index
    %c0_166 = arith.constant 0 : index
    %c0_167 = arith.constant 0 : index
    %154 = vector.load %arg7[%c2_165, %c0_166, %c0_167] : memref<8x80x40xbf16, #tpu.memory_space<vmem>>, vector<1x80x40xbf16>
    %155 = vector.shape_cast %154 : vector<1x80x40xbf16> to vector<80x40xbf16>
    %cst_168 = arith.constant dense<0.000000e+00> : vector<16x40xf32>
    %156 = tpu.matmul %148, %155, %cst_168 {dimension_numbers = #tpu.dot_dimension_numbers<[1], [0], [0], [1], [0, 0, 1, 1], [], []>} : vector<16x80xbf16>, vector<80x40xbf16>, vector<16x40xf32> -> vector<16x40xf32>
    %157 = arith.truncf %156 : vector<16x40xf32> to vector<16x40xbf16>
    %c32_169 = arith.constant 32 : index
    %c0_170 = arith.constant 0 : index
    %158 = vector.load %arg23[%c32_169, %c0_170] : memref<128x40xbf16, #tpu.memory_space<vmem>>, vector<16x40xbf16>
    tpu.vector_store %arg23[%c32_169, %c0_170], %157 {strides = array<i32>} : memref<128x40xbf16, #tpu.memory_space<vmem>>, vector<16x40xbf16>,
    %c48_171 = arith.constant 48 : index
    %c0_172 = arith.constant 0 : index
    %159 = vector.load %arg21[%c48_171, %c0_172] : memref<128x80xbf16, #tpu.memory_space<vmem>>, vector<16x80xbf16>
    %c3_173 = arith.constant 3 : index
    %c0_174 = arith.constant 0 : index
    %c0_175 = arith.constant 0 : index
    %160 = vector.load %arg6[%c3_173, %c0_174, %c0_175] : memref<8x80x40xbf16, #tpu.memory_space<vmem>>, vector<1x80x40xbf16>
    %161 = vector.shape_cast %160 : vector<1x80x40xbf16> to vector<80x40xbf16>
    %cst_176 = arith.constant dense<0.000000e+00> : vector<16x40xf32>
    %162 = tpu.matmul %159, %161, %cst_176 {dimension_numbers = #tpu.dot_dimension_numbers<[1], [0], [0], [1], [0, 0, 1, 1], [], []>} : vector<16x80xbf16>, vector<80x40xbf16>, vector<16x40xf32> -> vector<16x40xf32>
    %163 = arith.truncf %162 : vector<16x40xf32> to vector<16x40xbf16>
    %c48_177 = arith.constant 48 : index
    %c0_178 = arith.constant 0 : index
    %164 = vector.load %arg22[%c48_177, %c0_178] : memref<128x40xbf16, #tpu.memory_space<vmem>>, vector<16x40xbf16>
    tpu.vector_store %arg22[%c48_177, %c0_178], %163 {strides = array<i32>} : memref<128x40xbf16, #tpu.memory_space<vmem>>, vector<16x40xbf16>,
    %c3_179 = arith.constant 3 : index
    %c0_180 = arith.constant 0 : index
    %c0_181 = arith.constant 0 : index
    %165 = vector.load %arg7[%c3_179, %c0_180, %c0_181] : memref<8x80x40xbf16, #tpu.memory_space<vmem>>, vector<1x80x40xbf16>
    %166 = vector.shape_cast %165 : vector<1x80x40xbf16> to vector<80x40xbf16>
    %cst_182 = arith.constant dense<0.000000e+00> : vector<16x40xf32>
    %167 = tpu.matmul %159, %166, %cst_182 {dimension_numbers = #tpu.dot_dimension_numbers<[1], [0], [0], [1], [0, 0, 1, 1], [], []>} : vector<16x80xbf16>, vector<80x40xbf16>, vector<16x40xf32> -> vector<16x40xf32>
    %168 = arith.truncf %167 : vector<16x40xf32> to vector<16x40xbf16>
    %c48_183 = arith.constant 48 : index
    %c0_184 = arith.constant 0 : index
    %169 = vector.load %arg23[%c48_183, %c0_184] : memref<128x40xbf16, #tpu.memory_space<vmem>>, vector<16x40xbf16>
    tpu.vector_store %arg23[%c48_183, %c0_184], %168 {strides = array<i32>} : memref<128x40xbf16, #tpu.memory_space<vmem>>, vector<16x40xbf16>,
    %c64_185 = arith.constant 64 : index
    %c0_186 = arith.constant 0 : index
    %170 = vector.load %arg21[%c64_185, %c0_186] : memref<128x80xbf16, #tpu.memory_space<vmem>>, vector<16x80xbf16>
    %c4_187 = arith.constant 4 : index
    %c0_188 = arith.constant 0 : index
    %c0_189 = arith.constant 0 : index
    %171 = vector.load %arg6[%c4_187, %c0_188, %c0_189] : memref<8x80x40xbf16, #tpu.memory_space<vmem>>, vector<1x80x40xbf16>
    %172 = vector.shape_cast %171 : vector<1x80x40xbf16> to vector<80x40xbf16>
    %cst_190 = arith.constant dense<0.000000e+00> : vector<16x40xf32>
    %173 = tpu.matmul %170, %172, %cst_190 {dimension_numbers = #tpu.dot_dimension_numbers<[1], [0], [0], [1], [0, 0, 1, 1], [], []>} : vector<16x80xbf16>, vector<80x40xbf16>, vector<16x40xf32> -> vector<16x40xf32>
    %174 = arith.truncf %173 : vector<16x40xf32> to vector<16x40xbf16>
    %c64_191 = arith.constant 64 : index
    %c0_192 = arith.constant 0 : index
    %175 = vector.load %arg22[%c64_191, %c0_192] : memref<128x40xbf16, #tpu.memory_space<vmem>>, vector<16x40xbf16>
    tpu.vector_store %arg22[%c64_191, %c0_192], %174 {strides = array<i32>} : memref<128x40xbf16, #tpu.memory_space<vmem>>, vector<16x40xbf16>,
    %c4_193 = arith.constant 4 : index
    %c0_194 = arith.constant 0 : index
    %c0_195 = arith.constant 0 : index
    %176 = vector.load %arg7[%c4_193, %c0_194, %c0_195] : memref<8x80x40xbf16, #tpu.memory_space<vmem>>, vector<1x80x40xbf16>
    %177 = vector.shape_cast %176 : vector<1x80x40xbf16> to vector<80x40xbf16>
    %cst_196 = arith.constant dense<0.000000e+00> : vector<16x40xf32>
    %178 = tpu.matmul %170, %177, %cst_196 {dimension_numbers = #tpu.dot_dimension_numbers<[1], [0], [0], [1], [0, 0, 1, 1], [], []>} : vector<16x80xbf16>, vector<80x40xbf16>, vector<16x40xf32> -> vector<16x40xf32>
    %179 = arith.truncf %178 : vector<16x40xf32> to vector<16x40xbf16>
    %c64_197 = arith.constant 64 : index
    %c0_198 = arith.constant 0 : index
    %180 = vector.load %arg23[%c64_197, %c0_198] : memref<128x40xbf16, #tpu.memory_space<vmem>>, vector<16x40xbf16>
    tpu.vector_store %arg23[%c64_197, %c0_198], %179 {strides = array<i32>} : memref<128x40xbf16, #tpu.memory_space<vmem>>, vector<16x40xbf16>,
    %c80_199 = arith.constant 80 : index
    %c0_200 = arith.constant 0 : index
    %181 = vector.load %arg21[%c80_199, %c0_200] : memref<128x80xbf16, #tpu.memory_space<vmem>>, vector<16x80xbf16>
    %c5_201 = arith.constant 5 : index
    %c0_202 = arith.constant 0 : index
    %c0_203 = arith.constant 0 : index
    %182 = vector.load %arg6[%c5_201, %c0_202, %c0_203] : memref<8x80x40xbf16, #tpu.memory_space<vmem>>, vector<1x80x40xbf16>
    %183 = vector.shape_cast %182 : vector<1x80x40xbf16> to vector<80x40xbf16>
    %cst_204 = arith.constant dense<0.000000e+00> : vector<16x40xf32>
    %184 = tpu.matmul %181, %183, %cst_204 {dimension_numbers = #tpu.dot_dimension_numbers<[1], [0], [0], [1], [0, 0, 1, 1], [], []>} : vector<16x80xbf16>, vector<80x40xbf16>, vector<16x40xf32> -> vector<16x40xf32>
    %185 = arith.truncf %184 : vector<16x40xf32> to vector<16x40xbf16>
    %c80_205 = arith.constant 80 : index
    %c0_206 = arith.constant 0 : index
    %186 = vector.load %arg22[%c80_205, %c0_206] : memref<128x40xbf16, #tpu.memory_space<vmem>>, vector<16x40xbf16>
    tpu.vector_store %arg22[%c80_205, %c0_206], %185 {strides = array<i32>} : memref<128x40xbf16, #tpu.memory_space<vmem>>, vector<16x40xbf16>,
    %c5_207 = arith.constant 5 : index
    %c0_208 = arith.constant 0 : index
    %c0_209 = arith.constant 0 : index
    %187 = vector.load %arg7[%c5_207, %c0_208, %c0_209] : memref<8x80x40xbf16, #tpu.memory_space<vmem>>, vector<1x80x40xbf16>
    %188 = vector.shape_cast %187 : vector<1x80x40xbf16> to vector<80x40xbf16>
    %cst_210 = arith.constant dense<0.000000e+00> : vector<16x40xf32>
    %189 = tpu.matmul %181, %188, %cst_210 {dimension_numbers = #tpu.dot_dimension_numbers<[1], [0], [0], [1], [0, 0, 1, 1], [], []>} : vector<16x80xbf16>, vector<80x40xbf16>, vector<16x40xf32> -> vector<16x40xf32>
    %190 = arith.truncf %189 : vector<16x40xf32> to vector<16x40xbf16>
    %c80_211 = arith.constant 80 : index
    %c0_212 = arith.constant 0 : index
    %191 = vector.load %arg23[%c80_211, %c0_212] : memref<128x40xbf16, #tpu.memory_space<vmem>>, vector<16x40xbf16>
    tpu.vector_store %arg23[%c80_211, %c0_212], %190 {strides = array<i32>} : memref<128x40xbf16, #tpu.memory_space<vmem>>, vector<16x40xbf16>,
    %c96_213 = arith.constant 96 : index
    %c0_214 = arith.constant 0 : index
    %192 = vector.load %arg21[%c96_213, %c0_214] : memref<128x80xbf16, #tpu.memory_space<vmem>>, vector<16x80xbf16>
    %c6_215 = arith.constant 6 : index
    %c0_216 = arith.constant 0 : index
    %c0_217 = arith.constant 0 : index
    %193 = vector.load %arg6[%c6_215, %c0_216, %c0_217] : memref<8x80x40xbf16, #tpu.memory_space<vmem>>, vector<1x80x40xbf16>
    %194 = vector.shape_cast %193 : vector<1x80x40xbf16> to vector<80x40xbf16>
    %cst_218 = arith.constant dense<0.000000e+00> : vector<16x40xf32>
    %195 = tpu.matmul %192, %194, %cst_218 {dimension_numbers = #tpu.dot_dimension_numbers<[1], [0], [0], [1], [0, 0, 1, 1], [], []>} : vector<16x80xbf16>, vector<80x40xbf16>, vector<16x40xf32> -> vector<16x40xf32>
    %196 = arith.truncf %195 : vector<16x40xf32> to vector<16x40xbf16>
    %c96_219 = arith.constant 96 : index
    %c0_220 = arith.constant 0 : index
    %197 = vector.load %arg22[%c96_219, %c0_220] : memref<128x40xbf16, #tpu.memory_space<vmem>>, vector<16x40xbf16>
    tpu.vector_store %arg22[%c96_219, %c0_220], %196 {strides = array<i32>} : memref<128x40xbf16, #tpu.memory_space<vmem>>, vector<16x40xbf16>,
    %c6_221 = arith.constant 6 : index
    %c0_222 = arith.constant 0 : index
    %c0_223 = arith.constant 0 : index
    %198 = vector.load %arg7[%c6_221, %c0_222, %c0_223] : memref<8x80x40xbf16, #tpu.memory_space<vmem>>, vector<1x80x40xbf16>
    %199 = vector.shape_cast %198 : vector<1x80x40xbf16> to vector<80x40xbf16>
    %cst_224 = arith.constant dense<0.000000e+00> : vector<16x40xf32>
    %200 = tpu.matmul %192, %199, %cst_224 {dimension_numbers = #tpu.dot_dimension_numbers<[1], [0], [0], [1], [0, 0, 1, 1], [], []>} : vector<16x80xbf16>, vector<80x40xbf16>, vector<16x40xf32> -> vector<16x40xf32>
    %201 = arith.truncf %200 : vector<16x40xf32> to vector<16x40xbf16>
    %c96_225 = arith.constant 96 : index
    %c0_226 = arith.constant 0 : index
    %202 = vector.load %arg23[%c96_225, %c0_226] : memref<128x40xbf16, #tpu.memory_space<vmem>>, vector<16x40xbf16>
    tpu.vector_store %arg23[%c96_225, %c0_226], %201 {strides = array<i32>} : memref<128x40xbf16, #tpu.memory_space<vmem>>, vector<16x40xbf16>,
    %c112_227 = arith.constant 112 : index
    %c0_228 = arith.constant 0 : index
    %203 = vector.load %arg21[%c112_227, %c0_228] : memref<128x80xbf16, #tpu.memory_space<vmem>>, vector<16x80xbf16>
    %c7_229 = arith.constant 7 : index
    %c0_230 = arith.constant 0 : index
    %c0_231 = arith.constant 0 : index
    %204 = vector.load %arg6[%c7_229, %c0_230, %c0_231] : memref<8x80x40xbf16, #tpu.memory_space<vmem>>, vector<1x80x40xbf16>
    %205 = vector.shape_cast %204 : vector<1x80x40xbf16> to vector<80x40xbf16>
    %cst_232 = arith.constant dense<0.000000e+00> : vector<16x40xf32>
    %206 = tpu.matmul %203, %205, %cst_232 {dimension_numbers = #tpu.dot_dimension_numbers<[1], [0], [0], [1], [0, 0, 1, 1], [], []>} : vector<16x80xbf16>, vector<80x40xbf16>, vector<16x40xf32> -> vector<16x40xf32>
    %207 = arith.truncf %206 : vector<16x40xf32> to vector<16x40xbf16>
    %c112_233 = arith.constant 112 : index
    %c0_234 = arith.constant 0 : index
    %208 = vector.load %arg22[%c112_233, %c0_234] : memref<128x40xbf16, #tpu.memory_space<vmem>>, vector<16x40xbf16>
    tpu.vector_store %arg22[%c112_233, %c0_234], %207 {strides = array<i32>} : memref<128x40xbf16, #tpu.memory_space<vmem>>, vector<16x40xbf16>,
    %c7_235 = arith.constant 7 : index
    %c0_236 = arith.constant 0 : index
    %c0_237 = arith.constant 0 : index
    %209 = vector.load %arg7[%c7_235, %c0_236, %c0_237] : memref<8x80x40xbf16, #tpu.memory_space<vmem>>, vector<1x80x40xbf16>
    %210 = vector.shape_cast %209 : vector<1x80x40xbf16> to vector<80x40xbf16>
    %cst_238 = arith.constant dense<0.000000e+00> : vector<16x40xf32>
    %211 = tpu.matmul %203, %210, %cst_238 {dimension_numbers = #tpu.dot_dimension_numbers<[1], [0], [0], [1], [0, 0, 1, 1], [], []>} : vector<16x80xbf16>, vector<80x40xbf16>, vector<16x40xf32> -> vector<16x40xf32>
    %212 = arith.truncf %211 : vector<16x40xf32> to vector<16x40xbf16>
    %c112_239 = arith.constant 112 : index
    %c0_240 = arith.constant 0 : index
    %213 = vector.load %arg23[%c112_239, %c0_240] : memref<128x40xbf16, #tpu.memory_space<vmem>>, vector<16x40xbf16>
    tpu.vector_store %arg23[%c112_239, %c0_240], %212 {strides = array<i32>} : memref<128x40xbf16, #tpu.memory_space<vmem>>, vector<16x40xbf16>,
    %c0_241 = arith.constant 0 : index
    %c0_242 = arith.constant 0 : index
    %214 = vector.load %arg8[%c0_241, %c0_242] : memref<64x128xbf16, #tpu.memory_space<vmem>>, vector<64x128xbf16>
    %c0_243 = arith.constant 0 : index
    %c0_244 = arith.constant 0 : index
    %215 = vector.load %arg22[%c0_243, %c0_244] : memref<128x40xbf16, #tpu.memory_space<vmem>>, vector<128x40xbf16>
    %cst_245 = arith.constant dense<0.000000e+00> : vector<64x40xf32>
    %216 = tpu.matmul %214, %215, %cst_245 {dimension_numbers = #tpu.dot_dimension_numbers<[1], [0], [0], [1], [0, 0, 1, 1], [], []>} : vector<64x128xbf16>, vector<128x40xbf16>, vector<64x40xf32> -> vector<64x40xf32>
    %c0_246 = arith.constant 0 : index
    %c0_247 = arith.constant 0 : index
    %217 = vector.load %arg9[%c0_246, %c0_247] : memref<64x128xbf16, #tpu.memory_space<vmem>>, vector<64x128xbf16>
    %c0_248 = arith.constant 0 : index
    %c0_249 = arith.constant 0 : index
    %218 = vector.load %arg23[%c0_248, %c0_249] : memref<128x40xbf16, #tpu.memory_space<vmem>>, vector<128x40xbf16>
    %cst_250 = arith.constant dense<0.000000e+00> : vector<64x40xf32>
    %219 = tpu.matmul %217, %218, %cst_250 {dimension_numbers = #tpu.dot_dimension_numbers<[1], [0], [0], [1], [0, 0, 1, 1], [], []>} : vector<64x128xbf16>, vector<128x40xbf16>, vector<64x40xf32> -> vector<64x40xf32>
    %220 = arith.addf %216, %219 : vector<64x40xf32>
    %c0_251 = arith.constant 0 : index
    %c0_252 = arith.constant 0 : index
    %221 = vector.load %arg10[%c0_251, %c0_252] : memref<64x40xf32, #tpu.memory_space<vmem>>, vector<64x40xf32>
    %222 = arith.addf %220, %221 : vector<64x40xf32>
    %cst_253 = arith.constant 0.000000e+00 : f32
    %223 = vector.broadcast %cst_253 : f32 to vector<64x40xf32>
    %224 = arith.maximumf %222, %223 : vector<64x40xf32>
    %c0_254 = arith.constant 0 : index
    %c0_255 = arith.constant 0 : index
    %225 = vector.load %arg11[%c0_254, %c0_255] : memref<40x128xf32, #tpu.memory_space<vmem>>, vector<40x128xf32>
    %cst_256 = arith.constant dense<0.000000e+00> : vector<64x128xf32>
    %226 = tpu.matmul %224, %225, %cst_256 {dimension_numbers = #tpu.dot_dimension_numbers<[1], [0], [0], [1], [0, 0, 1, 1], [], []>} : vector<64x40xf32>, vector<40x128xf32>, vector<64x128xf32> -> vector<64x128xf32>
    %c0_257 = arith.constant 0 : index
    %c0_258 = arith.constant 0 : index
    %227 = vector.load %arg13[%c0_257, %c0_258] : memref<2x64xf32, #tpu.memory_space<vmem>>, vector<2x64xf32>
    %c0_259 = arith.constant 0 : index
    %c0_260 = arith.constant 0 : index
    %228 = vector.load %arg12[%c0_259, %c0_260] : memref<64x128xf32, #tpu.memory_space<vmem>>, vector<64x128xf32>
    %229 = arith.mulf %228, %226 : vector<64x128xf32>
    %cst_261 = arith.constant dense<0.000000e+00> : vector<2x128xf32>
    %230 = tpu.matmul %227, %229, %cst_261 {dimension_numbers = #tpu.dot_dimension_numbers<[1], [0], [0], [1], [0, 0, 1, 1], [], []>} : vector<2x64xf32>, vector<64x128xf32>, vector<2x128xf32> -> vector<2x128xf32>
    %c0_262 = arith.constant 0 : index
    %c0_263 = arith.constant 0 : index
    %231 = vector.load %arg17[%c0_262, %c0_263] : memref<2x128xf32, #tpu.memory_space<vmem>>, vector<2x128xf32>
    tpu.vector_store %arg17[%c0_262, %c0_263], %230 {strides = array<i32>} : memref<2x128xf32, #tpu.memory_space<vmem>>, vector<2x128xf32>,
    %232 = arith.truncf %230 : vector<2x128xf32> to vector<2x128xbf16>
    %c0_264 = arith.constant 0 : index
    %c0_265 = arith.constant 0 : index
    %233 = vector.load %arg14[%c0_264, %c0_265] : memref<128x4xbf16, #tpu.memory_space<vmem>>, vector<128x4xbf16>
    %cst_266 = arith.constant dense<0.000000e+00> : vector<2x4xf32>
    %234 = tpu.matmul %232, %233, %cst_266 {dimension_numbers = #tpu.dot_dimension_numbers<[1], [0], [0], [1], [0, 0, 1, 1], [], []>} : vector<2x128xbf16>, vector<128x4xbf16>, vector<2x4xf32> -> vector<2x4xf32>
    %c0_267 = arith.constant 0 : index
    %c0_268 = arith.constant 0 : index
    %235 = vector.load %arg15[%c0_267, %c0_268] : memref<1x4xf32, #tpu.memory_space<vmem>>, vector<1x4xf32>
    %236 = vector.broadcast %235 : vector<1x4xf32> to vector<2x4xf32>
    %237 = arith.addf %234, %236 : vector<2x4xf32>
    %c0_269 = arith.constant 0 : index
    %c0_270 = arith.constant 0 : index
    %238 = vector.load %arg16[%c0_269, %c0_270] : memref<2x4xf32, #tpu.memory_space<vmem>>, vector<2x4xf32>
    tpu.vector_store %arg16[%c0_269, %c0_270], %237 {strides = array<i32>} : memref<2x4xf32, #tpu.memory_space<vmem>>, vector<2x4xf32>,
    %239 = arith.mulf %230, %230 : vector<2x128xf32>
    %cst_271 = arith.constant dense<0.000000e+00> : vector<2xf32>
    %240 = vector.multi_reduction <add>, %239, %cst_271 [1] : vector<2x128xf32> to vector<2xf32>
    %241 = vector.shape_cast %240 : vector<2xf32> to vector<2x1xf32>
    %cst_272 = arith.constant 1.000000e-24 : f32
    %242 = vector.broadcast %cst_272 : f32 to vector<2x1xf32>
    %243 = arith.maximumf %241, %242 : vector<2x1xf32>
    %244 = math.rsqrt %243 : vector<2x1xf32>
    %245 = vector.broadcast %244 : vector<2x1xf32> to vector<2x128xf32>
    %246 = arith.mulf %230, %245 : vector<2x128xf32>
    %c0_273 = arith.constant 0 : index
    %c0_274 = arith.constant 0 : index
    %247 = vector.load %arg18[%c0_273, %c0_274] : memref<2x128xf32, #tpu.memory_space<vmem>>, vector<2x128xf32>
    tpu.vector_store %arg18[%c0_273, %c0_274], %246 {strides = array<i32>} : memref<2x128xf32, #tpu.memory_space<vmem>>, vector<2x128xf32>,
    return
  }
  func.func @transform_0(%arg0: i32) -> (i32, i32, i32) {
    %c0_i32 = arith.constant 0 : i32
    %c0_i32_0 = arith.constant 0 : i32
    %c0_i32_1 = arith.constant 0 : i32
    %c0_i32_2 = arith.constant 0 : i32
    return %c0_i32, %c0_i32_0, %c0_i32_1 : i32, i32, i32
  }
  func.func @transform_1(%arg0: i32) -> (i32, i32, i32) {
    %c0_i32 = arith.constant 0 : i32
    %c0_i32_0 = arith.constant 0 : i32
    %c0_i32_1 = arith.constant 0 : i32
    %c0_i32_2 = arith.constant 0 : i32
    return %c0_i32, %c0_i32_0, %c0_i32_1 : i32, i32, i32
  }
  func.func @transform_2(%arg0: i32) -> (i32, i32, i32) {
    %c0_i32 = arith.constant 0 : i32
    %c0_i32_0 = arith.constant 0 : i32
    %c0_i32_1 = arith.constant 0 : i32
    %c0_i32_2 = arith.constant 0 : i32
    return %c0_i32, %c0_i32_0, %c0_i32_1 : i32, i32, i32
  }
  func.func @transform_3(%arg0: i32) -> (i32, i32) {
    %c0_i32 = arith.constant 0 : i32
    %c0_i32_0 = arith.constant 0 : i32
    %c0_i32_1 = arith.constant 0 : i32
    return %c0_i32, %c0_i32_0 : i32, i32
  }
  func.func @transform_4(%arg0: i32) -> (i32, i32) {
    %c0_i32 = arith.constant 0 : i32
    %c0_i32_0 = arith.constant 0 : i32
    %c0_i32_1 = arith.constant 0 : i32
    return %c0_i32, %c0_i32_0 : i32, i32
  }
  func.func @transform_5(%arg0: i32) -> (i32, i32, i32) {
    %c0_i32 = arith.constant 0 : i32
    %c0_i32_0 = arith.constant 0 : i32
    %c0_i32_1 = arith.constant 0 : i32
    %c0_i32_2 = arith.constant 0 : i32
    return %c0_i32, %c0_i32_0, %c0_i32_1 : i32, i32, i32
  }
  func.func @transform_6(%arg0: i32) -> (i32, i32, i32) {
    %c0_i32 = arith.constant 0 : i32
    %c0_i32_0 = arith.constant 0 : i32
    %c0_i32_1 = arith.constant 0 : i32
    %c0_i32_2 = arith.constant 0 : i32
    return %c0_i32, %c0_i32_0, %c0_i32_1 : i32, i32, i32
  }
  func.func @transform_7(%arg0: i32) -> (i32, i32) {
    %c0_i32 = arith.constant 0 : i32
    %c0_i32_0 = arith.constant 0 : i32
    %c0_i32_1 = arith.constant 0 : i32
    return %c0_i32, %c0_i32_0 : i32, i32
  }
  func.func @transform_8(%arg0: i32) -> (i32, i32) {
    %c0_i32 = arith.constant 0 : i32
    %c0_i32_0 = arith.constant 0 : i32
    %c0_i32_1 = arith.constant 0 : i32
    return %c0_i32, %c0_i32_0 : i32, i32
  }
  func.func @transform_9(%arg0: i32) -> (i32, i32) {
    %c0_i32 = arith.constant 0 : i32
    %c0_i32_0 = arith.constant 0 : i32
    %c0_i32_1 = arith.constant 0 : i32
    return %c0_i32, %c0_i32_0 : i32, i32
  }
  func.func @transform_10(%arg0: i32) -> (i32, i32) {
    %c0_i32 = arith.constant 0 : i32
    %c0_i32_0 = arith.constant 0 : i32
    %c0_i32_1 = arith.constant 0 : i32
    return %c0_i32, %c0_i32_0 : i32, i32
  }
  func.func @transform_11(%arg0: i32) -> (i32, i32) {
    %c0_i32 = arith.constant 0 : i32
    %c0_i32_0 = arith.constant 0 : i32
    %c0_i32_1 = arith.constant 0 : i32
    return %c0_i32, %c0_i32_0 : i32, i32
  }
  func.func @transform_12(%arg0: i32) -> (i32, i32) {
    %c0_i32 = arith.constant 0 : i32
    %c0_i32_0 = arith.constant 0 : i32
    %c0_i32_1 = arith.constant 0 : i32
    return %c0_i32, %c0_i32_0 : i32, i32
  }
  func.func @transform_13(%arg0: i32) -> (i32, i32) {
    %c0_i32 = arith.constant 0 : i32
    %c0_i32_0 = arith.constant 0 : i32
    %c0_i32_1 = arith.constant 0 : i32
    return %c0_i32, %c0_i32_0 : i32, i32
  }
  func.func @transform_14(%arg0: i32) -> (i32, i32) {
    %c0_i32 = arith.constant 0 : i32
    %c0_i32_0 = arith.constant 0 : i32
    %c0_i32_1 = arith.constant 0 : i32
    return %c0_i32, %c0_i32_0 : i32, i32
  }
  func.func @transform_15(%arg0: i32) -> (i32, i32) {
    %c0_i32 = arith.constant 0 : i32
    %c0_i32_0 = arith.constant 0 : i32
    %c0_i32_1 = arith.constant 0 : i32
    return %c0_i32, %c0_i32_0 : i32, i32
  }
  func.func @transform_16(%arg0: i32) -> (i32, i32) {
    %c0_i32 = arith.constant 0 : i32
    %c0_i32_0 = arith.constant 0 : i32
    %c0_i32_1 = arith.constant 0 : i32
    return %c0_i32, %c0_i32_0 : i32, i32
  }
  func.func @transform_17(%arg0: i32) -> (i32, i32) {
    %c0_i32 = arith.constant 0 : i32
    %c0_i32_0 = arith.constant 0 : i32
    %c0_i32_1 = arith.constant 0 : i32
    return %c0_i32, %c0_i32_0 : i32, i32
  }
}

</mosaic_0001>

<llo_original>
// kernel: b7_forward.1
$region0: #{b7_forward.1}
  #allocation0 [shape = 'u32[]', space=smem, size = 0x4, offset = 0x4, fixed_abs, tag = 'smem constant byte address 0x4 - core index']
  #allocation1 [shape = 'u32[144,128]{1,0:T(1,128)}', space=vmem, size = 0x12000, scoped, tag = 'internal scratch']
  #allocation2 [shape = 'bf16[144,80]{1,0:T(8,128)(2,1)}', space=vmem, size = 0x9000, scoped, tag = 'scratch operand']
  #allocation3 [shape = 'bf16[144,80]{1,0:T(8,128)(2,1)}', space=vmem, size = 0x9000, scoped, tag = 'scratch operand']
  #allocation4 [shape = 'bf16[128,80]{1,0:T(8,128)(2,1)}', space=vmem, size = 0x8000, scoped, tag = 'scratch operand']
  #allocation5 [shape = 'bf16[128,40]{1,0:T(8,128)(2,1)}', space=vmem, size = 0x8000, scoped, tag = 'scratch operand']
  #allocation6 [shape = 'bf16[128,40]{1,0:T(8,128)(2,1)}', space=vmem, size = 0x8000, scoped, tag = 'scratch operand']
  %s0 = inlined_call_operand.vmem [shape: f32[9,16,160], index: 0, kind: input, shape index: {}]
  %s1 = inlined_call_operand.hbm [shape: bf16[9,160,80], index: 1, kind: input, shape index: {}]
  %s2 = inlined_call_operand.hbm [shape: bf16[9,160,80], index: 2, kind: input, shape index: {}]
  %s3 = inlined_call_operand.vmem [shape: bf16[128,144], index: 3, kind: input, shape index: {}]
  %s4 = inlined_call_operand.vmem [shape: bf16[128,144], index: 4, kind: input, shape index: {}]
  %s5 = inlined_call_operand.hbm [shape: bf16[8,80,40], index: 5, kind: input, shape index: {}]
  %s6 = inlined_call_operand.vmem [shape: bf16[8,80,40], index: 6, kind: input, shape index: {}]
  %s7 = inlined_call_operand.hbm [shape: bf16[64,128], index: 7, kind: input, shape index: {}]
  %s8 = inlined_call_operand.hbm [shape: bf16[64,128], index: 8, kind: input, shape index: {}]
  %s9 = inlined_call_operand.hbm [shape: f32[64,40], index: 9, kind: input, shape index: {}]
  %s10 = inlined_call_operand.hbm [shape: f32[40,128], index: 10, kind: input, shape index: {}]
  %s11 = inlined_call_operand.hbm [shape: f32[64,128], index: 11, kind: input, shape index: {}]
  %s12 = inlined_call_operand.vmem [shape: f32[2,64], index: 12, kind: input, shape index: {}]
  %s13 = inlined_call_operand.hbm [shape: bf16[128,4], index: 13, kind: input, shape index: {}]
  %s14 = inlined_call_operand.vmem [shape: f32[1,4], index: 14, kind: input, shape index: {}]
  %s15 = inlined_call_operand.hbm [shape: f32[2,4], index: 15, kind: output, shape index: {0}]
  %s16 = inlined_call_operand.hbm [shape: f32[2,128], index: 16, kind: output, shape index: {1}]
  %s17 = inlined_call_operand.hbm [shape: f32[2,128], index: 17, kind: output, shape index: {2}]
  %18 = xla_tuple %s15, %s16, %s17
  %s19 = sld [smem:[#allocation0]]
  $region122: #{b7_forward.1} parent=0
    _
  %s21 = ssub.s32 1, %s19
  %s22 = scalar_select 0, %s21, %s19
  $region1: #{b7_forward.1} parent=0
    #allocation7 [shape = 'u8[368640]{0}', space=vmem, size = 0x5a000, scoped, tag = 'input window, operand 1, single buffered']
    #allocation8 [shape = 's32[1]{0}', space=sflag, size = 0x4, scoped, tag = 'scoped memory for b7_forward.1']
    #allocation9 [shape = 's32[1]{0}', space=sflag, size = 0x4, scoped, tag = 'scoped memory for b7_forward.1']
    #allocation10 [shape = 'u8[368640]{0}', space=vmem, size = 0x5a000, scoped, tag = 'input window, operand 2, single buffered']
    #allocation11 [shape = 's32[1]{0}', space=sflag, size = 0x4, scoped, tag = 'scoped memory for b7_forward.1']
    #allocation12 [shape = 'u8[163840]{0}', space=vmem, size = 0x28000, scoped, tag = 'input window, operand 5, single buffered']
    #allocation13 [shape = 'u8[16384]{0}', space=vmem, size = 0x4000, scoped, tag = 'input window, operand 7, single buffered']
    #allocation14 [shape = 's32[1]{0}', space=sflag, size = 0x4, scoped, tag = 'scoped memory for b7_forward.1']
    #allocation15 [shape = 'u8[16384]{0}', space=vmem, size = 0x4000, scoped, tag = 'input window, operand 8, single buffered']
    #allocation16 [shape = 'u8[32768]{0}', space=vmem, size = 0x8000, scoped, tag = 'input window, operand 9, single buffered']
    #allocation17 [shape = 's32[1]{0}', space=sflag, size = 0x4, scoped, tag = 'scoped memory for b7_forward.1']
    #allocation18 [shape = 'u8[20480]{0}', space=vmem, size = 0x5000, scoped, tag = 'input window, operand 10, single buffered']
    #allocation19 [shape = 'u8[32768]{0}', space=vmem, size = 0x8000, scoped, tag = 'input window, operand 11, single buffered']
    #allocation20 [shape = 's32[1]{0}', space=sflag, size = 0x4, scoped, tag = 'scoped memory for b7_forward.1']
    #allocation21 [shape = 'u8[32768]{0}', space=vmem, size = 0x8000, scoped, tag = 'input window, operand 13, single buffered']
    #allocation22 [shape = 'u8[1024]{0}', space=vmem, size = 0x400, scoped, tag = 'output window, operand 0, single buffered']
    #allocation23 [shape = 'u8[1024]{0}', space=vmem, size = 0x400, scoped, tag = 'output window, operand 1, single buffered']
    #allocation24 [shape = 's32[1]{0}', space=sflag, size = 0x4, scoped, tag = 'scoped memory for b7_forward.1']
    #allocation25 [shape = 'u8[1024]{0}', space=vmem, size = 0x400, scoped, tag = 'output window, operand 2, single buffered']
    %23 = vsyncpa [#allocation8], 0
    %24 = vsyncpa [#allocation11], 0
    %25 = vsyncpa [#allocation14], 0
    %26 = vsyncpa [#allocation17], 0
    %27 = vsyncpa [#allocation20], 0
    %28 = vsyncpa [#allocation9], 0
    %29 = vsyncpa [#allocation24], 0
    // Predicated region
    $region2: #{b7_forward.1} parent=1 // pred_check
      _
    $region3: #{b7_forward.1} parent=1 // pred_check_branch
      %31 = sbr.rel (0) target = $region5
    $region4: #{b7_forward.1} parent=1 // pred_region
      _
    $region5: #{b7_forward.1} parent=1 // pred_fallthru
      _
    // Predicated region
    $region6: #{b7_forward.1} parent=1 // pred_check
      _
    $region7: #{b7_forward.1} parent=1 // pred_check_branch
      %33 = sbr.rel (0) target = $region9
    $region8: #{b7_forward.1} parent=1 // pred_region
      %s35 = ssub.s32 11520, 11520
      %36 = vsyncadd [#allocation8], %s35
      %s37 = sshll.u32 [#allocation7], 4
      %s38 = int_to_ptr.vmem [resolvable:$true] %s37
      %43 = dma.hbm_to_vmem [thread:$0]  %s1, 11520, %s38, [#allocation8], 64, 64, 4
    $region9: #{b7_forward.1} parent=1 // pred_fallthru
      _
    // Predicated region
    $region10: #{b7_forward.1} parent=1 // pred_check
      _
    $region11: #{b7_forward.1} parent=1 // pred_check_branch
      %45 = sbr.rel (0) target = $region13
    $region12: #{b7_forward.1} parent=1 // pred_region
      %s47 = ssub.s32 11520, 11520
      %48 = vsyncadd [#allocation11], %s47
      %s49 = sshll.u32 [#allocation10], 4
      %s50 = int_to_ptr.vmem [resolvable:$true] %s49
      %55 = dma.hbm_to_vmem [thread:$0]  %s2, 11520, %s50, [#allocation11], 64, 64, 4
    $region13: #{b7_forward.1} parent=1 // pred_fallthru
      _
    // Predicated region
    $region14: #{b7_forward.1} parent=1 // pred_check
      _
    $region15: #{b7_forward.1} parent=1 // pred_check_branch
      %57 = sbr.rel (0) target = $region17
    $region16: #{b7_forward.1} parent=1 // pred_region
      _
    $region17: #{b7_forward.1} parent=1 // pred_fallthru
      _
    // Predicated region
    $region18: #{b7_forward.1} parent=1 // pred_check
      _
    $region19: #{b7_forward.1} parent=1 // pred_check_branch
      %59 = sbr.rel (0) target = $region21
    $region20: #{b7_forward.1} parent=1 // pred_region
      _
    $region21: #{b7_forward.1} parent=1 // pred_fallthru
      _
    // Predicated region
    $region22: #{b7_forward.1} parent=1 // pred_check
      _
    $region23: #{b7_forward.1} parent=1 // pred_check_branch
      %61 = sbr.rel (0) target = $region25
    $region24: #{b7_forward.1} parent=1 // pred_region
      %s63 = ssub.s32 5120, 5120
      %64 = vsyncadd [#allocation11], %s63
      %s65 = sshll.u32 [#allocation12], 4
      %s66 = int_to_ptr.vmem [resolvable:$true] %s65
      %71 = dma.hbm_to_vmem [thread:$0]  %s5, 5120, %s66, [#allocation11], 64, 64, 4
    $region25: #{b7_forward.1} parent=1 // pred_fallthru
      _
    // Predicated region
    $region26: #{b7_forward.1} parent=1 // pred_check
      _
    $region27: #{b7_forward.1} parent=1 // pred_check_branch
      %73 = sbr.rel (0) target = $region29
    $region28: #{b7_forward.1} parent=1 // pred_region
      _
    $region29: #{b7_forward.1} parent=1 // pred_fallthru
      _
    // Predicated region
    $region30: #{b7_forward.1} parent=1 // pred_check
      _
    $region31: #{b7_forward.1} parent=1 // pred_check_branch
      %75 = sbr.rel (0) target = $region33
    $region32: #{b7_forward.1} parent=1 // pred_region
      %s77 = ssub.s32 512, 512
      %78 = vsyncadd [#allocation14], %s77
      %s79 = sshll.u32 [#allocation13], 4
      %s80 = int_to_ptr.vmem [resolvable:$true] %s79
      %85 = dma.hbm_to_vmem [thread:$0]  %s7, 512, %s80, [#allocation14], 64, 64, 4
    $region33: #{b7_forward.1} parent=1 // pred_fallthru
      _
    // Predicated region
    $region34: #{b7_forward.1} parent=1 // pred_check
      _
    $region35: #{b7_forward.1} parent=1 // pred_check_branch
      %87 = sbr.rel (0) target = $region37
    $region36: #{b7_forward.1} parent=1 // pred_region
      %s89 = ssub.s32 512, 512
      %90 = vsyncadd [#allocation14], %s89
      %s91 = sshll.u32 [#allocation15], 4
      %s92 = int_to_ptr.vmem [resolvable:$true] %s91
      %97 = dma.hbm_to_vmem [thread:$0]  %s8, 512, %s92, [#allocation14], 64, 64, 4
    $region37: #{b7_forward.1} parent=1 // pred_fallthru
      _
    // Predicated region
    $region38: #{b7_forward.1} parent=1 // pred_check
      _
    $region39: #{b7_forward.1} parent=1 // pred_check_branch
      %99 = sbr.rel (0) target = $region41
    $region40: #{b7_forward.1} parent=1 // pred_region
      %s101 = ssub.s32 1024, 1024
      %102 = vsyncadd [#allocation17], %s101
      %s103 = sshll.u32 [#allocation16], 4
      %s104 = int_to_ptr.vmem [resolvable:$true] %s103
      %109 = dma.hbm_to_vmem [thread:$0]  %s9, 1024, %s104, [#allocation17], 128, 128, 8
    $region41: #{b7_forward.1} parent=1 // pred_fallthru
      _
    // Predicated region
    $region42: #{b7_forward.1} parent=1 // pred_check
      _
    $region43: #{b7_forward.1} parent=1 // pred_check_branch
      %111 = sbr.rel (0) target = $region45
    $region44: #{b7_forward.1} parent=1 // pred_region
      %s113 = ssub.s32 640, 640
      %114 = vsyncadd [#allocation17], %s113
      %s115 = sshll.u32 [#allocation18], 4
      %s116 = int_to_ptr.vmem [resolvable:$true] %s115
      %121 = dma.hbm_to_vmem [thread:$0]  %s10, 640, %s116, [#allocation17], 128, 128, 8
    $region45: #{b7_forward.1} parent=1 // pred_fallthru
      _
    // Predicated region
    $region46: #{b7_forward.1} parent=1 // pred_check
      _
    $region47: #{b7_forward.1} parent=1 // pred_check_branch
      %123 = sbr.rel (0) target = $region49
    $region48: #{b7_forward.1} parent=1 // pred_region
      %s125 = ssub.s32 1024, 1024
      %126 = vsyncadd [#allocation20], %s125
      %s127 = sshll.u32 [#allocation19], 4
      %s128 = int_to_ptr.vmem [resolvable:$true] %s127
      %133 = dma.hbm_to_vmem [thread:$0]  %s11, 1024, %s128, [#allocation20], 128, 128, 8
    $region49: #{b7_forward.1} parent=1 // pred_fallthru
      _
    // Predicated region
    $region50: #{b7_forward.1} parent=1 // pred_check
      _
    $region51: #{b7_forward.1} parent=1 // pred_check_branch
      %135 = sbr.rel (0) target = $region53
    $region52: #{b7_forward.1} parent=1 // pred_region
      _
    $region53: #{b7_forward.1} parent=1 // pred_fallthru
      _
    // Predicated region
    $region54: #{b7_forward.1} parent=1 // pred_check
      _
    $region55: #{b7_forward.1} parent=1 // pred_check_branch
      %137 = sbr.rel (0) target = $region57
    $region56: #{b7_forward.1} parent=1 // pred_region
      %s139 = ssub.s32 1024, 1024
      %140 = vsyncadd [#allocation20], %s139
      %s141 = sshll.u32 [#allocation21], 4
      %s142 = int_to_ptr.vmem [resolvable:$true] %s141
      %147 = dma.hbm_to_vmem [thread:$0]  %s13, 1024, %s142, [#allocation20], 64, 64, 4
    $region57: #{b7_forward.1} parent=1 // pred_fallthru
      _
    // Predicated region
    $region58: #{b7_forward.1} parent=1 // pred_check
      _
    $region59: #{b7_forward.1} parent=1 // pred_check_branch
      %149 = sbr.rel (0) target = $region61
    $region60: #{b7_forward.1} parent=1 // pred_region
      _
    $region61: #{b7_forward.1} parent=1 // pred_fallthru
      _
    // Predicated region
    $region62: #{b7_forward.1} parent=1 // pred_check
      _
    $region63: #{b7_forward.1} parent=1 // pred_check_branch
      %151 = sbr.rel (0) target = $region65
    $region64: #{b7_forward.1} parent=1 // pred_region
      %152 = dma.done [#allocation8], 11520
    $region65: #{b7_forward.1} parent=1 // pred_fallthru
      _
    // Predicated region
    $region66: #{b7_forward.1} parent=1 // pred_check
      _
    $region67: #{b7_forward.1} parent=1 // pred_check_branch
      %154 = sbr.rel (0) target = $region69
    $region68: #{b7_forward.1} parent=1 // pred_region
      %155 = dma.done [#allocation11], 11520
    $region69: #{b7_forward.1} parent=1 // pred_fallthru
      _
    // Predicated region
    $region70: #{b7_forward.1} parent=1 // pred_check
      _
    $region71: #{b7_forward.1} parent=1 // pred_check_branch
      %157 = sbr.rel (0) target = $region73
    $region72: #{b7_forward.1} parent=1 // pred_region
      %158 = dma.done [#allocation11], 5120
    $region73: #{b7_forward.1} parent=1 // pred_fallthru
      _
    // Predicated region
    $region74: #{b7_forward.1} parent=1 // pred_check
      _
    $region75: #{b7_forward.1} parent=1 // pred_check_branch
      %160 = sbr.rel (0) target = $region77
    $region76: #{b7_forward.1} parent=1 // pred_region
      %161 = dma.done [#allocation14], 512
    $region77: #{b7_forward.1} parent=1 // pred_fallthru
      _
    // Predicated region
    $region78: #{b7_forward.1} parent=1 // pred_check
      _
    $region79: #{b7_forward.1} parent=1 // pred_check_branch
      %163 = sbr.rel (0) target = $region81
    $region80: #{b7_forward.1} parent=1 // pred_region
      %164 = dma.done [#allocation14], 512
    $region81: #{b7_forward.1} parent=1 // pred_fallthru
      _
    // Predicated region
    $region82: #{b7_forward.1} parent=1 // pred_check
      _
    $region83: #{b7_forward.1} parent=1 // pred_check_branch
      %166 = sbr.rel (0) target = $region85
    $region84: #{b7_forward.1} parent=1 // pred_region
      %167 = dma.done [#allocation17], 1024
    $region85: #{b7_forward.1} parent=1 // pred_fallthru
      _
    // Predicated region
    $region86: #{b7_forward.1} parent=1 // pred_check
      _
    $region87: #{b7_forward.1} parent=1 // pred_check_branch
      %169 = sbr.rel (0) target = $region89
    $region88: #{b7_forward.1} parent=1 // pred_region
      %170 = dma.done [#allocation17], 640
    $region89: #{b7_forward.1} parent=1 // pred_fallthru
      _
    // Predicated region
    $region90: #{b7_forward.1} parent=1 // pred_check
      _
    $region91: #{b7_forward.1} parent=1 // pred_check_branch
      %172 = sbr.rel (0) target = $region93
    $region92: #{b7_forward.1} parent=1 // pred_region
      %173 = dma.done [#allocation20], 1024
    $region93: #{b7_forward.1} parent=1 // pred_fallthru
      _
    // Predicated region
    $region94: #{b7_forward.1} parent=1 // pred_check
      _
    $region95: #{b7_forward.1} parent=1 // pred_check_branch
      %175 = sbr.rel (0) target = $region97
    $region96: #{b7_forward.1} parent=1 // pred_region
      %176 = dma.done [#allocation20], 1024
    $region97: #{b7_forward.1} parent=1 // pred_fallthru
      _
    %v178 = vld [vmem:[%s0] sm:$0xff]
    %v179 = vld [vmem:[%s0 + $0x8] sm:$0xff]
    %v180 = vld [vmem:[%s0 + $0x10] sm:$0xff]
    %v181 = vld [vmem:[%s0 + $0x18] sm:$0xff]
    %v182 = vpack.c.bf16 %v180, %v178
    %v183 = vpack.c.bf16 %v181, %v179
    %v184 = vld [vmem:[#allocation7] sm:$0xf]
    %v185 = vld [vmem:[#allocation7 + $0x4] sm:$0xf]
    %v186 = vld [vmem:[#allocation7 + $0x8] sm:$0xf]
    %v187 = vld [vmem:[#allocation7 + $0xc] sm:$0xf]
    %v188 = vld [vmem:[#allocation7 + $0x10] sm:$0xf]
    %v189 = vld [vmem:[#allocation7 + $0x14] sm:$0xf]
    %v190 = vld [vmem:[#allocation7 + $0x18] sm:$0xf]
    %v191 = vld [vmem:[#allocation7 + $0x1c] sm:$0xf]
    %v192 = vld [vmem:[#allocation7 + $0x20] sm:$0xf]
    %v193 = vld [vmem:[#allocation7 + $0x24] sm:$0xf]
    %v194 = vld [vmem:[#allocation7 + $0x28] sm:$0xf]
    %v195 = vld [vmem:[#allocation7 + $0x2c] sm:$0xf]
    %v196 = vld [vmem:[#allocation7 + $0x30] sm:$0xf]
    %v197 = vld [vmem:[#allocation7 + $0x34] sm:$0xf]
    %v198 = vld [vmem:[#allocation7 + $0x38] sm:$0xf]
    %v199 = vld [vmem:[#allocation7 + $0x3c] sm:$0xf]
    %v200 = vld [vmem:[#allocation7 + $0x40] sm:$0xf]
    %v201 = vld [vmem:[#allocation7 + $0x44] sm:$0xf]
    %v202 = vld [vmem:[#allocation7 + $0x48] sm:$0xf]
    %v203 = vld [vmem:[#allocation7 + $0x4c] sm:$0xf]
    %v224 = vunpack.c.l.b16 %v184
    %v225 = vunpack.c.l.b16 %v185
    %v226 = vunpack.c.l.b16 %v186
    %v227 = vunpack.c.l.b16 %v187
    %v228 = vunpack.c.l.b16 %v188
    %v229 = vunpack.c.l.b16 %v189
    %v230 = vunpack.c.l.b16 %v190
    %v231 = vunpack.c.l.b16 %v191
    %v232 = vunpack.c.l.b16 %v192
    %v233 = vunpack.c.l.b16 %v193
    %v234 = vunpack.c.l.b16 %v194
    %v235 = vunpack.c.l.b16 %v195
    %v236 = vunpack.c.l.b16 %v196
    %v237 = vunpack.c.l.b16 %v197
    %v238 = vunpack.c.l.b16 %v198
    %v239 = vunpack.c.l.b16 %v199
    %v240 = vunpack.c.l.b16 %v200
    %v241 = vunpack.c.l.b16 %v201
    %v242 = vunpack.c.l.b16 %v202
    %v243 = vunpack.c.l.b16 %v203
    %v244 = vpack.c.b16 %v225, %v224
    %v245 = vpack.c.b16 %v227, %v226
    %v246 = vpack.c.b16 %v229, %v228
    %v247 = vpack.c.b16 %v231, %v230
    %v248 = vpack.c.b16 %v233, %v232
    %v249 = vpack.c.b16 %v235, %v234
    %v250 = vpack.c.b16 %v237, %v236
    %v251 = vpack.c.b16 %v239, %v238
    %v252 = vpack.c.b16 %v241, %v240
    %v253 = vpack.c.b16 %v243, %v242
    %vm264 = vcmask 261120
    %v266 = vsel %vm264, %v183, 0
    %268 = vmatprep.subr.bf16.mxu0 0
    %269 = vmatpush1.bf16.msra.mxu0 %v251
    %270 = vmatprep.subr.bf16.mxu0 0
    %271 = vmatpush1.bf16.msra.mxu0 %v250
    %272 = vmatprep.subr.bf16.mxu0 0
    %273 = vmatpush1.bf16.msra.mxu0 %v249
    %274 = vmatprep.subr.bf16.mxu0 0
    %275 = vmatpush1.bf16.msra.mxu0 %v248
    %276 = vmatprep.subr.bf16.mxu0 0
    %277 = vmatpush1.bf16.msra.mxu0 %v247
    %278 = vmatprep.subr.bf16.mxu0 0
    %279 = vmatpush1.bf16.msra.mxu0 %v246
    %280 = vmatprep.subr.bf16.mxu0 0
    %281 = vmatpush1.bf16.msra.mxu0 %v245
    %282 = vmatprep.subr.bf16.mxu0 0
    %283 = vmatpush1.bf16.msra.mxu0 %v244
    %284 = vmatprep.subr.bf16.mxu0 0
    %285 = vmatpush2.bf16.msra.mxu0 0
    %286 = vmatprep.subr.bf16.mxu0 0
    %287 = vmatpush2.bf16.msra.mxu0 0
    %288 = vmatprep.subr.bf16.mxu0 0
    %289 = vmatpush2.bf16.msra.mxu0 0
    %290 = vmatprep.subr.bf16.mxu0 0
    %291 = vmatpush2.bf16.msra.mxu0 0
    %292 = vmatprep.subr.bf16.mxu0 0
    %293 = vmatpush2.bf16.msra.mxu0 0
    %294 = vmatprep.subr.bf16.mxu0 0
    %295 = vmatpush2.bf16.msra.mxu0 0
    %296 = vmatprep.subr.bf16.mxu0 0
    %297 = vmatpush2.bf16.msra.mxu0 %v253
    %298 = vmatprep.subr.bf16.mxu0 0
    %299 = vmatpush2.bf16.msra.mxu0 %v252
    %300 = vmatprep.mubr.bf16.mxu0 %v266
    %301 = vmatmul.mubr.bf16.gmra.mxu0 %v182
    %v302 = vpop.f32.mrf.mxu0
    %v303 = vadd.f32 0.0, %v302
    %v304 = vpop.f32.mrf.mxu0
    %v305 = vpop.f32.mrf.mxu0
    %v306 = vadd.f32 0.0, %v305
    %v307 = vpop.f32.mrf.mxu0
    %308 = vdwg.mxu0
    %v309 = vpack.c.bf16 %v306, %v303
    %v311 = vunpack.c.l.b16 %v309
    %v312 = vunpack.c.h.b16 %v309
    %v313 = vpack.c.b16 %v311, %v311
    %v314 = vpack.c.b16 %v312, %v312
    %vm317 = vcmask 650240
    %318 = vst.msk [vmem:[#allocation2] sm:$0xf] %vm317, %v313
    %319 = vst.msk [vmem:[#allocation2 + $0x4] sm:$0xf] %vm317, %v314
    %v320 = vld [vmem:[#allocation10] sm:$0xf]
    %v321 = vld [vmem:[#allocation10 + $0x4] sm:$0xf]
    %v322 = vld [vmem:[#allocation10 + $0x8] sm:$0xf]
    %v323 = vld [vmem:[#allocation10 + $0xc] sm:$0xf]
    %v324 = vld [vmem:[#allocation10 + $0x10] sm:$0xf]
    %v325 = vld [vmem:[#allocation10 + $0x14] sm:$0xf]
    %v326 = vld [vmem:[#allocation10 + $0x18] sm:$0xf]
    %v327 = vld [vmem:[#allocation10 + $0x1c] sm:$0xf]
    %v328 = vld [vmem:[#allocation10 + $0x20] sm:$0xf]
    %v329 = vld [vmem:[#allocation10 + $0x24] sm:$0xf]
    %v330 = vld [vmem:[#allocation10 + $0x28] sm:$0xf]
    %v331 = vld [vmem:[#allocation10 + $0x2c] sm:$0xf]
    %v332 = vld [vmem:[#allocation10 + $0x30] sm:$0xf]
    %v333 = vld [vmem:[#allocation10 + $0x34] sm:$0xf]
    %v334 = vld [vmem:[#allocation10 + $0x38] sm:$0xf]
    %v335 = vld [vmem:[#allocation10 + $0x3c] sm:$0xf]
    %v336 = vld [vmem:[#allocation10 + $0x40] sm:$0xf]
    %v337 = vld [vmem:[#allocation10 + $0x44] sm:$0xf]
    %v338 = vld [vmem:[#allocation10 + $0x48] sm:$0xf]
    %v339 = vld [vmem:[#allocation10 + $0x4c] sm:$0xf]
    %v360 = vunpack.c.l.b16 %v320
    %v361 = vunpack.c.l.b16 %v321
    %v362 = vunpack.c.l.b16 %v322
    %v363 = vunpack.c.l.b16 %v323
    %v364 = vunpack.c.l.b16 %v324
    %v365 = vunpack.c.l.b16 %v325
    %v366 = vunpack.c.l.b16 %v326
    %v367 = vunpack.c.l.b16 %v327
    %v368 = vunpack.c.l.b16 %v328
    %v369 = vunpack.c.l.b16 %v329
    %v370 = vunpack.c.l.b16 %v330
    %v371 = vunpack.c.l.b16 %v331
    %v372 = vunpack.c.l.b16 %v332
    %v373 = vunpack.c.l.b16 %v333
    %v374 = vunpack.c.l.b16 %v334
    %v375 = vunpack.c.l.b16 %v335
    %v376 = vunpack.c.l.b16 %v336
    %v377 = vunpack.c.l.b16 %v337
    %v378 = vunpack.c.l.b16 %v338
    %v379 = vunpack.c.l.b16 %v339
    %v380 = vpack.c.b16 %v361, %v360
    %v381 = vpack.c.b16 %v363, %v362
    %v382 = vpack.c.b16 %v365, %v364
    %v383 = vpack.c.b16 %v367, %v366
    %v384 = vpack.c.b16 %v369, %v368
    %v385 = vpack.c.b16 %v371, %v370
    %v386 = vpack.c.b16 %v373, %v372
    %v387 = vpack.c.b16 %v375, %v374
    %v388 = vpack.c.b16 %v377, %v376
    %v389 = vpack.c.b16 %v379, %v378
    %400 = vmatprep.subr.bf16.mxu0 0
    %401 = vmatpush1.bf16.msra.mxu0 %v387
    %402 = vmatprep.subr.bf16.mxu0 0
    %403 = vmatpush1.bf16.msra.mxu0 %v386
    %404 = vmatprep.subr.bf16.mxu0 0
    %405 = vmatpush1.bf16.msra.mxu0 %v385
    %406 = vmatprep.subr.bf16.mxu0 0
    %407 = vmatpush1.bf16.msra.mxu0 %v384
    %408 = vmatprep.subr.bf16.mxu0 0
    %409 = vmatpush1.bf16.msra.mxu0 %v383
    %410 = vmatprep.subr.bf16.mxu0 0
    %411 = vmatpush1.bf16.msra.mxu0 %v382
    %412 = vmatprep.subr.bf16.mxu0 0
    %413 = vmatpush1.bf16.msra.mxu0 %v381
    %414 = vmatprep.subr.bf16.mxu0 0
    %415 = vmatpush1.bf16.msra.mxu0 %v380
    %416 = vmatprep.subr.bf16.mxu0 0
    %417 = vmatpush2.bf16.msra.mxu0 0
    %418 = vmatprep.subr.bf16.mxu0 0
    %419 = vmatpush2.bf16.msra.mxu0 0
    %420 = vmatprep.subr.bf16.mxu0 0
    %421 = vmatpush2.bf16.msra.mxu0 0
    %422 = vmatprep.subr.bf16.mxu0 0
    %423 = vmatpush2.bf16.msra.mxu0 0
    %424 = vmatprep.subr.bf16.mxu0 0
    %425 = vmatpush2.bf16.msra.mxu0 0
    %426 = vmatprep.subr.bf16.mxu0 0
    %427 = vmatpush2.bf16.msra.mxu0 0
    %428 = vmatprep.subr.bf16.mxu0 0
    %429 = vmatpush2.bf16.msra.mxu0 %v389
    %430 = vmatprep.subr.bf16.mxu0 0
    %431 = vmatpush2.bf16.msra.mxu0 %v388
    %432 = vmatprep.mubr.bf16.mxu0 %v266
    %433 = vmatmul.mubr.bf16.gmra.mxu0 %v182
    %v434 = vpop.f32.mrf.mxu0
    %v435 = vadd.f32 0.0, %v434
    %v436 = vpop.f32.mrf.mxu0
    %v437 = vpop.f32.mrf.mxu0
    %v438 = vadd.f32 0.0, %v437
    %v439 = vpop.f32.mrf.mxu0
    %440 = vdwg.mxu0
    %v441 = vpack.c.bf16 %v438, %v435
    %v443 = vunpack.c.l.b16 %v441
    %v444 = vunpack.c.h.b16 %v441
    %v445 = vpack.c.b16 %v443, %v443
    %v446 = vpack.c.b16 %v444, %v444
    %449 = vst.msk [vmem:[#allocation3] sm:$0xf] %vm317, %v445
    %450 = vst.msk [vmem:[#allocation3 + $0x4] sm:$0xf] %vm317, %v446
    %s451 = scalar_lea.vmem %s0, 32
    %v452 = vld [vmem:[%s451] sm:$0xff]
    %v453 = vld [vmem:[%s451 + $0x8] sm:$0xff]
    %v454 = vld [vmem:[%s451 + $0x10] sm:$0xff]
    %v455 = vld [vmem:[%s451 + $0x18] sm:$0xff]
    %v456 = vpack.c.bf16 %v454, %v452
    %v457 = vpack.c.bf16 %v455, %v453
    %s458 = scalar_lea.vmem [#allocation7], 80
    %v459 = vld [vmem:[%s458] sm:$0xf]
    %v460 = vld [vmem:[%s458 + $0x4] sm:$0xf]
    %v461 = vld [vmem:[%s458 + $0x8] sm:$0xf]
    %v462 = vld [vmem:[%s458 + $0xc] sm:$0xf]
    %v463 = vld [vmem:[%s458 + $0x10] sm:$0xf]
    %v464 = vld [vmem:[%s458 + $0x14] sm:$0xf]
    %v465 = vld [vmem:[%s458 + $0x18] sm:$0xf]
    %v466 = vld [vmem:[%s458 + $0x1c] sm:$0xf]
    %v467 = vld [vmem:[%s458 + $0x20] sm:$0xf]
    %v468 = vld [vmem:[%s458 + $0x24] sm:$0xf]
    %v469 = vld [vmem:[%s458 + $0x28] sm:$0xf]
    %v470 = vld [vmem:[%s458 + $0x2c] sm:$0xf]
    %v471 = vld [vmem:[%s458 + $0x30] sm:$0xf]
    %v472 = vld [vmem:[%s458 + $0x34] sm:$0xf]
    %v473 = vld [vmem:[%s458 + $0x38] sm:$0xf]
    %v474 = vld [vmem:[%s458 + $0x3c] sm:$0xf]
    %v475 = vld [vmem:[%s458 + $0x40] sm:$0xf]
    %v476 = vld [vmem:[%s458 + $0x44] sm:$0xf]
    %v477 = vld [vmem:[%s458 + $0x48] sm:$0xf]
    %v478 = vld [vmem:[%s458 + $0x4c] sm:$0xf]
    %v499 = vunpack.c.l.b16 %v459
    %v500 = vunpack.c.l.b16 %v460
    %v501 = vunpack.c.l.b16 %v461
    %v502 = vunpack.c.l.b16 %v462
    %v503 = vunpack.c.l.b16 %v463
    %v504 = vunpack.c.l.b16 %v464
    %v505 = vunpack.c.l.b16 %v465
    %v506 = vunpack.c.l.b16 %v466
    %v507 = vunpack.c.l.b16 %v467
    %v508 = vunpack.c.l.b16 %v468
    %v509 = vunpack.c.l.b16 %v469
    %v510 = vunpack.c.l.b16 %v470
    %v511 = vunpack.c.l.b16 %v471
    %v512 = vunpack.c.l.b16 %v472
    %v513 = vunpack.c.l.b16 %v473
    %v514 = vunpack.c.l.b16 %v474
    %v515 = vunpack.c.l.b16 %v475
    %v516 = vunpack.c.l.b16 %v476
    %v517 = vunpack.c.l.b16 %v477
    %v518 = vunpack.c.l.b16 %v478
    %v519 = vpack.c.b16 %v500, %v499
    %v520 = vpack.c.b16 %v502, %v501
    %v521 = vpack.c.b16 %v504, %v503
    %v522 = vpack.c.b16 %v506, %v505
    %v523 = vpack.c.b16 %v508, %v507
    %v524 = vpack.c.b16 %v510, %v509
    %v525 = vpack.c.b16 %v512, %v511
    %v526 = vpack.c.b16 %v514, %v513
    %v527 = vpack.c.b16 %v516, %v515
    %v528 = vpack.c.b16 %v518, %v517
    %v540 = vsel %vm264, %v457, 0
    %542 = vmatprep.subr.bf16.mxu0 0
    %543 = vmatpush1.bf16.msra.mxu0 %v526
    %544 = vmatprep.subr.bf16.mxu0 0
    %545 = vmatpush1.bf16.msra.mxu0 %v525
    %546 = vmatprep.subr.bf16.mxu0 0
    %547 = vmatpush1.bf16.msra.mxu0 %v524
    %548 = vmatprep.subr.bf16.mxu0 0
    %549 = vmatpush1.bf16.msra.mxu0 %v523
    %550 = vmatprep.subr.bf16.mxu0 0
    %551 = vmatpush1.bf16.msra.mxu0 %v522
    %552 = vmatprep.subr.bf16.mxu0 0
    %553 = vmatpush1.bf16.msra.mxu0 %v521
    %554 = vmatprep.subr.bf16.mxu0 0
    %555 = vmatpush1.bf16.msra.mxu0 %v520
    %556 = vmatprep.subr.bf16.mxu0 0
    %557 = vmatpush1.bf16.msra.mxu0 %v519
    %558 = vmatprep.subr.bf16.mxu0 0
    %559 = vmatpush2.bf16.msra.mxu0 0
    %560 = vmatprep.subr.bf16.mxu0 0
    %561 = vmatpush2.bf16.msra.mxu0 0
    %562 = vmatprep.subr.bf16.mxu0 0
    %563 = vmatpush2.bf16.msra.mxu0 0
    %564 = vmatprep.subr.bf16.mxu0 0
    %565 = vmatpush2.bf16.msra.mxu0 0
    %566 = vmatprep.subr.bf16.mxu0 0
    %567 = vmatpush2.bf16.msra.mxu0 0
    %568 = vmatprep.subr.bf16.mxu0 0
    %569 = vmatpush2.bf16.msra.mxu0 0
    %570 = vmatprep.subr.bf16.mxu0 0
    %571 = vmatpush2.bf16.msra.mxu0 %v528
    %572 = vmatprep.subr.bf16.mxu0 0
    %573 = vmatpush2.bf16.msra.mxu0 %v527
    %574 = vmatprep.mubr.bf16.mxu0 %v540
    %575 = vmatmul.mubr.bf16.gmra.mxu0 %v456
    %v576 = vpop.f32.mrf.mxu0
    %v577 = vadd.f32 0.0, %v576
    %v578 = vpop.f32.mrf.mxu0
    %v579 = vpop.f32.mrf.mxu0
    %v580 = vadd.f32 0.0, %v579
    %v581 = vpop.f32.mrf.mxu0
    %582 = vdwg.mxu0
    %v583 = vpack.c.bf16 %v580, %v577
    %v585 = vunpack.c.l.b16 %v583
    %v586 = vunpack.c.h.b16 %v583
    %v587 = vpack.c.b16 %v585, %v585
    %v588 = vpack.c.b16 %v586, %v586
    %591 = vst.msk [vmem:[#allocation2 + $0x8] sm:$0xf] %vm317, %v587
    %592 = vst.msk [vmem:[#allocation2 + $0xc] sm:$0xf] %vm317, %v588
    %s593 = scalar_lea.vmem [#allocation10], 80
    %v594 = vld [vmem:[%s593] sm:$0xf]
    %v595 = vld [vmem:[%s593 + $0x4] sm:$0xf]
    %v596 = vld [vmem:[%s593 + $0x8] sm:$0xf]
    %v597 = vld [vmem:[%s593 + $0xc] sm:$0xf]
    %v598 = vld [vmem:[%s593 + $0x10] sm:$0xf]
    %v599 = vld [vmem:[%s593 + $0x14] sm:$0xf]
    %v600 = vld [vmem:[%s593 + $0x18] sm:$0xf]
    %v601 = vld [vmem:[%s593 + $0x1c] sm:$0xf]
    %v602 = vld [vmem:[%s593 + $0x20] sm:$0xf]
    %v603 = vld [vmem:[%s593 + $0x24] sm:$0xf]
    %v604 = vld [vmem:[%s593 + $0x28] sm:$0xf]
    %v605 = vld [vmem:[%s593 + $0x2c] sm:$0xf]
    %v606 = vld [vmem:[%s593 + $0x30] sm:$0xf]
    %v607 = vld [vmem:[%s593 + $0x34] sm:$0xf]
    %v608 = vld [vmem:[%s593 + $0x38] sm:$0xf]
    %v609 = vld [vmem:[%s593 + $0x3c] sm:$0xf]
    %v610 = vld [vmem:[%s593 + $0x40] sm:$0xf]
    %v611 = vld [vmem:[%s593 + $0x44] sm:$0xf]
    %v612 = vld [vmem:[%s593 + $0x48] sm:$0xf]
    %v613 = vld [vmem:[%s593 + $0x4c] sm:$0xf]
    %v634 = vunpack.c.l.b16 %v594
    %v635 = vunpack.c.l.b16 %v595
    %v636 = vunpack.c.l.b16 %v596
    %v637 = vunpack.c.l.b16 %v597
    %v638 = vunpack.c.l.b16 %v598
    %v639 = vunpack.c.l.b16 %v599
    %v640 = vunpack.c.l.b16 %v600
    %v641 = vunpack.c.l.b16 %v601
    %v642 = vunpack.c.l.b16 %v602
    %v643 = vunpack.c.l.b16 %v603
    %v644 = vunpack.c.l.b16 %v604
    %v645 = vunpack.c.l.b16 %v605
    %v646 = vunpack.c.l.b16 %v606
    %v647 = vunpack.c.l.b16 %v607
    %v648 = vunpack.c.l.b16 %v608
    %v649 = vunpack.c.l.b16 %v609
    %v650 = vunpack.c.l.b16 %v610
    %v651 = vunpack.c.l.b16 %v611
    %v652 = vunpack.c.l.b16 %v612
    %v653 = vunpack.c.l.b16 %v613
    %v654 = vpack.c.b16 %v635, %v634
    %v655 = vpack.c.b16 %v637, %v636
    %v656 = vpack.c.b16 %v639, %v638
    %v657 = vpack.c.b16 %v641, %v640
    %v658 = vpack.c.b16 %v643, %v642
    %v659 = vpack.c.b16 %v645, %v644
    %v660 = vpack.c.b16 %v647, %v646
    %v661 = vpack.c.b16 %v649, %v648
    %v662 = vpack.c.b16 %v651, %v650
    %v663 = vpack.c.b16 %v653, %v652
    %674 = vmatprep.subr.bf16.mxu0 0
    %675 = vmatpush1.bf16.msra.mxu0 %v661
    %676 = vmatprep.subr.bf16.mxu0 0
    %677 = vmatpush1.bf16.msra.mxu0 %v660
    %678 = vmatprep.subr.bf16.mxu0 0
    %679 = vmatpush1.bf16.msra.mxu0 %v659
    %680 = vmatprep.subr.bf16.mxu0 0
    %681 = vmatpush1.bf16.msra.mxu0 %v658
    %682 = vmatprep.subr.bf16.mxu0 0
    %683 = vmatpush1.bf16.msra.mxu0 %v657
    %684 = vmatprep.subr.bf16.mxu0 0
    %685 = vmatpush1.bf16.msra.mxu0 %v656
    %686 = vmatprep.subr.bf16.mxu0 0
    %687 = vmatpush1.bf16.msra.mxu0 %v655
    %688 = vmatprep.subr.bf16.mxu0 0
    %689 = vmatpush1.bf16.msra.mxu0 %v654
    %690 = vmatprep.subr.bf16.mxu0 0
    %691 = vmatpush2.bf16.msra.mxu0 0
    %692 = vmatprep.subr.bf16.mxu0 0
    %693 = vmatpush2.bf16.msra.mxu0 0
    %694 = vmatprep.subr.bf16.mxu0 0
    %695 = vmatpush2.bf16.msra.mxu0 0
    %696 = vmatprep.subr.bf16.mxu0 0
    %697 = vmatpush2.bf16.msra.mxu0 0
    %698 = vmatprep.subr.bf16.mxu0 0
    %699 = vmatpush2.bf16.msra.mxu0 0
    %700 = vmatprep.subr.bf16.mxu0 0
    %701 = vmatpush2.bf16.msra.mxu0 0
    %702 = vmatprep.subr.bf16.mxu0 0
    %703 = vmatpush2.bf16.msra.mxu0 %v663
    %704 = vmatprep.subr.bf16.mxu0 0
    %705 = vmatpush2.bf16.msra.mxu0 %v662
    %706 = vmatprep.mubr.bf16.mxu0 %v540
    %707 = vmatmul.mubr.bf16.gmra.mxu0 %v456
    %v708 = vpop.f32.mrf.mxu0
    %v709 = vadd.f32 0.0, %v708
    %v710 = vpop.f32.mrf.mxu0
    %v711 = vpop.f32.mrf.mxu0
    %v712 = vadd.f32 0.0, %v711
    %v713 = vpop.f32.mrf.mxu0
    %714 = vdwg.mxu0
    %v715 = vpack.c.bf16 %v712, %v709
    %v717 = vunpack.c.l.b16 %v715
    %v718 = vunpack.c.h.b16 %v715
    %v719 = vpack.c.b16 %v717, %v717
    %v720 = vpack.c.b16 %v718, %v718
    %723 = vst.msk [vmem:[#allocation3 + $0x8] sm:$0xf] %vm317, %v719
    %724 = vst.msk [vmem:[#allocation3 + $0xc] sm:$0xf] %vm317, %v720
    %s725 = scalar_lea.vmem %s0, 64
    %v726 = vld [vmem:[%s725] sm:$0xff]
    %v727 = vld [vmem:[%s725 + $0x8] sm:$0xff]
    %v728 = vld [vmem:[%s725 + $0x10] sm:$0xff]
    %v729 = vld [vmem:[%s725 + $0x18] sm:$0xff]
    %v730 = vpack.c.bf16 %v728, %v726
    %v731 = vpack.c.bf16 %v729, %v727
    %s732 = scalar_lea.vmem [#allocation7], 160
    %v733 = vld [vmem:[%s732] sm:$0xf]
    %v734 = vld [vmem:[%s732 + $0x4] sm:$0xf]
    %v735 = vld [vmem:[%s732 + $0x8] sm:$0xf]
    %v736 = vld [vmem:[%s732 + $0xc] sm:$0xf]
    %v737 = vld [vmem:[%s732 + $0x10] sm:$0xf]
    %v738 = vld [vmem:[%s732 + $0x14] sm:$0xf]
    %v739 = vld [vmem:[%s732 + $0x18] sm:$0xf]
    %v740 = vld [vmem:[%s732 + $0x1c] sm:$0xf]
    %v741 = vld [vmem:[%s732 + $0x20] sm:$0xf]
    %v742 = vld [vmem:[%s732 + $0x24] sm:$0xf]
    %v743 = vld [vmem:[%s732 + $0x28] sm:$0xf]
    %v744 = vld [vmem:[%s732 + $0x2c] sm:$0xf]
    %v745 = vld [vmem:[%s732 + $0x30] sm:$0xf]
    %v746 = vld [vmem:[%s732 + $0x34] sm:$0xf]
    %v747 = vld [vmem:[%s732 + $0x38] sm:$0xf]
    %v748 = vld [vmem:[%s732 + $0x3c] sm:$0xf]
    %v749 = vld [vmem:[%s732 + $0x40] sm:$0xf]
    %v750 = vld [vmem:[%s732 + $0x44] sm:$0xf]
    %v751 = vld [vmem:[%s732 + $0x48] sm:$0xf]
    %v752 = vld [vmem:[%s732 + $0x4c] sm:$0xf]
    %v773 = vunpack.c.l.b16 %v733
    %v774 = vunpack.c.l.b16 %v734
    %v775 = vunpack.c.l.b16 %v735
    %v776 = vunpack.c.l.b16 %v736
    %v777 = vunpack.c.l.b16 %v737
    %v778 = vunpack.c.l.b16 %v738
    %v779 = vunpack.c.l.b16 %v739
    %v780 = vunpack.c.l.b16 %v740
    %v781 = vunpack.c.l.b16 %v741
    %v782 = vunpack.c.l.b16 %v742
    %v783 = vunpack.c.l.b16 %v743
    %v784 = vunpack.c.l.b16 %v744
    %v785 = vunpack.c.l.b16 %v745
    %v786 = vunpack.c.l.b16 %v746
    %v787 = vunpack.c.l.b16 %v747
    %v788 = vunpack.c.l.b16 %v748
    %v789 = vunpack.c.l.b16 %v749
    %v790 = vunpack.c.l.b16 %v750
    %v791 = vunpack.c.l.b16 %v751
    %v792 = vunpack.c.l.b16 %v752
    %v793 = vpack.c.b16 %v774, %v773
    %v794 = vpack.c.b16 %v776, %v775
    %v795 = vpack.c.b16 %v778, %v777
    %v796 = vpack.c.b16 %v780, %v779
    %v797 = vpack.c.b16 %v782, %v781
    %v798 = vpack.c.b16 %v784, %v783
    %v799 = vpack.c.b16 %v786, %v785
    %v800 = vpack.c.b16 %v788, %v787
    %v801 = vpack.c.b16 %v790, %v789
    %v802 = vpack.c.b16 %v792, %v791
    %v814 = vsel %vm264, %v731, 0
    %816 = vmatprep.subr.bf16.mxu0 0
    %817 = vmatpush1.bf16.msra.mxu0 %v800
    %818 = vmatprep.subr.bf16.mxu0 0
    %819 = vmatpush1.bf16.msra.mxu0 %v799
    %820 = vmatprep.subr.bf16.mxu0 0
    %821 = vmatpush1.bf16.msra.mxu0 %v798
    %822 = vmatprep.subr.bf16.mxu0 0
    %823 = vmatpush1.bf16.msra.mxu0 %v797
    %824 = vmatprep.subr.bf16.mxu0 0
    %825 = vmatpush1.bf16.msra.mxu0 %v796
    %826 = vmatprep.subr.bf16.mxu0 0
    %827 = vmatpush1.bf16.msra.mxu0 %v795
    %828 = vmatprep.subr.bf16.mxu0 0
    %829 = vmatpush1.bf16.msra.mxu0 %v794
    %830 = vmatprep.subr.bf16.mxu0 0
    %831 = vmatpush1.bf16.msra.mxu0 %v793
    %832 = vmatprep.subr.bf16.mxu0 0
    %833 = vmatpush2.bf16.msra.mxu0 0
    %834 = vmatprep.subr.bf16.mxu0 0
    %835 = vmatpush2.bf16.msra.mxu0 0
    %836 = vmatprep.subr.bf16.mxu0 0
    %837 = vmatpush2.bf16.msra.mxu0 0
    %838 = vmatprep.subr.bf16.mxu0 0
    %839 = vmatpush2.bf16.msra.mxu0 0
    %840 = vmatprep.subr.bf16.mxu0 0
    %841 = vmatpush2.bf16.msra.mxu0 0
    %842 = vmatprep.subr.bf16.mxu0 0
    %843 = vmatpush2.bf16.msra.mxu0 0
    %844 = vmatprep.subr.bf16.mxu0 0
    %845 = vmatpush2.bf16.msra.mxu0 %v802
    %846 = vmatprep.subr.bf16.mxu0 0
    %847 = vmatpush2.bf16.msra.mxu0 %v801
    %848 = vmatprep.mubr.bf16.mxu0 %v814
    %849 = vmatmul.mubr.bf16.gmra.mxu0 %v730
    %v850 = vpop.f32.mrf.mxu0
    %v851 = vadd.f32 0.0, %v850
    %v852 = vpop.f32.mrf.mxu0
    %v853 = vpop.f32.mrf.mxu0
    %v854 = vadd.f32 0.0, %v853
    %v855 = vpop.f32.mrf.mxu0
    %856 = vdwg.mxu0
    %v857 = vpack.c.bf16 %v854, %v851
    %v859 = vunpack.c.l.b16 %v857
    %v860 = vunpack.c.h.b16 %v857
    %v861 = vpack.c.b16 %v859, %v859
    %v862 = vpack.c.b16 %v860, %v860
    %865 = vst.msk [vmem:[#allocation2 + $0x10] sm:$0xf] %vm317, %v861
    %866 = vst.msk [vmem:[#allocation2 + $0x14] sm:$0xf] %vm317, %v862
    %s867 = scalar_lea.vmem [#allocation10], 160
    %v868 = vld [vmem:[%s867] sm:$0xf]
    %v869 = vld [vmem:[%s867 + $0x4] sm:$0xf]
    %v870 = vld [vmem:[%s867 + $0x8] sm:$0xf]
    %v871 = vld [vmem:[%s867 + $0xc] sm:$0xf]
    %v872 = vld [vmem:[%s867 + $0x10] sm:$0xf]
    %v873 = vld [vmem:[%s867 + $0x14] sm:$0xf]
    %v874 = vld [vmem:[%s867 + $0x18] sm:$0xf]
    %v875 = vld [vmem:[%s867 + $0x1c] sm:$0xf]
    %v876 = vld [vmem:[%s867 + $0x20] sm:$0xf]
    %v877 = vld [vmem:[%s867 + $0x24] sm:$0xf]
    %v878 = vld [vmem:[%s867 + $0x28] sm:$0xf]
    %v879 = vld [vmem:[%s867 + $0x2c] sm:$0xf]
    %v880 = vld [vmem:[%s867 + $0x30] sm:$0xf]
    %v881 = vld [vmem:[%s867 + $0x34] sm:$0xf]
    %v882 = vld [vmem:[%s867 + $0x38] sm:$0xf]
    %v883 = vld [vmem:[%s867 + $0x3c] sm:$0xf]
    %v884 = vld [vmem:[%s867 + $0x40] sm:$0xf]
    %v885 = vld [vmem:[%s867 + $0x44] sm:$0xf]
    %v886 = vld [vmem:[%s867 + $0x48] sm:$0xf]
    %v887 = vld [vmem:[%s867 + $0x4c] sm:$0xf]
    %v908 = vunpack.c.l.b16 %v868
    %v909 = vunpack.c.l.b16 %v869
    %v910 = vunpack.c.l.b16 %v870
    %v911 = vunpack.c.l.b16 %v871
    %v912 = vunpack.c.l.b16 %v872
    %v913 = vunpack.c.l.b16 %v873
    %v914 = vunpack.c.l.b16 %v874
    %v915 = vunpack.c.l.b16 %v875
    %v916 = vunpack.c.l.b16 %v876
    %v917 = vunpack.c.l.b16 %v877
    %v918 = vunpack.c.l.b16 %v878
    %v919 = vunpack.c.l.b16 %v879
    %v920 = vunpack.c.l.b16 %v880
    %v921 = vunpack.c.l.b16 %v881
    %v922 = vunpack.c.l.b16 %v882
    %v923 = vunpack.c.l.b16 %v883
    %v924 = vunpack.c.l.b16 %v884
    %v925 = vunpack.c.l.b16 %v885
    %v926 = vunpack.c.l.b16 %v886
    %v927 = vunpack.c.l.b16 %v887
    %v928 = vpack.c.b16 %v909, %v908
    %v929 = vpack.c.b16 %v911, %v910
    %v930 = vpack.c.b16 %v913, %v912
    %v931 = vpack.c.b16 %v915, %v914
    %v932 = vpack.c.b16 %v917, %v916
    %v933 = vpack.c.b16 %v919, %v918
    %v934 = vpack.c.b16 %v921, %v920
    %v935 = vpack.c.b16 %v923, %v922
    %v936 = vpack.c.b16 %v925, %v924
    %v937 = vpack.c.b16 %v927, %v926
    %948 = vmatprep.subr.bf16.mxu0 0
    %949 = vmatpush1.bf16.msra.mxu0 %v935
    %950 = vmatprep.subr.bf16.mxu0 0
    %951 = vmatpush1.bf16.msra.mxu0 %v934
    %952 = vmatprep.subr.bf16.mxu0 0
    %953 = vmatpush1.bf16.msra.mxu0 %v933
    %954 = vmatprep.subr.bf16.mxu0 0
    %955 = vmatpush1.bf16.msra.mxu0 %v932
    %956 = vmatprep.subr.bf16.mxu0 0
    %957 = vmatpush1.bf16.msra.mxu0 %v931
    %958 = vmatprep.subr.bf16.mxu0 0
    %959 = vmatpush1.bf16.msra.mxu0 %v930
    %960 = vmatprep.subr.bf16.mxu0 0
    %961 = vmatpush1.bf16.msra.mxu0 %v929
    %962 = vmatprep.subr.bf16.mxu0 0
    %963 = vmatpush1.bf16.msra.mxu0 %v928
    %964 = vmatprep.subr.bf16.mxu0 0
    %965 = vmatpush2.bf16.msra.mxu0 0
    %966 = vmatprep.subr.bf16.mxu0 0
    %967 = vmatpush2.bf16.msra.mxu0 0
    %968 = vmatprep.subr.bf16.mxu0 0
    %969 = vmatpush2.bf16.msra.mxu0 0
    %970 = vmatprep.subr.bf16.mxu0 0
    %971 = vmatpush2.bf16.msra.mxu0 0
    %972 = vmatprep.subr.bf16.mxu0 0
    %973 = vmatpush2.bf16.msra.mxu0 0
    %974 = vmatprep.subr.bf16.mxu0 0
    %975 = vmatpush2.bf16.msra.mxu0 0
    %976 = vmatprep.subr.bf16.mxu0 0
    %977 = vmatpush2.bf16.msra.mxu0 %v937
    %978 = vmatprep.subr.bf16.mxu0 0
    %979 = vmatpush2.bf16.msra.mxu0 %v936
    %980 = vmatprep.mubr.bf16.mxu0 %v814
    %981 = vmatmul.mubr.bf16.gmra.mxu0 %v730
    %v982 = vpop.f32.mrf.mxu0
    %v983 = vadd.f32 0.0, %v982
    %v984 = vpop.f32.mrf.mxu0
    %v985 = vpop.f32.mrf.mxu0
    %v986 = vadd.f32 0.0, %v985
    %v987 = vpop.f32.mrf.mxu0
    %988 = vdwg.mxu0
    %v989 = vpack.c.bf16 %v986, %v983
    %v991 = vunpack.c.l.b16 %v989
    %v992 = vunpack.c.h.b16 %v989
    %v993 = vpack.c.b16 %v991, %v991
    %v994 = vpack.c.b16 %v992, %v992
    %997 = vst.msk [vmem:[#allocation3 + $0x10] sm:$0xf] %vm317, %v993
    %998 = vst.msk [vmem:[#allocation3 + $0x14] sm:$0xf] %vm317, %v994
    %s999 = scalar_lea.vmem %s0, 96
    %v1000 = vld [vmem:[%s999] sm:$0xff]
    %v1001 = vld [vmem:[%s999 + $0x8] sm:$0xff]
    %v1002 = vld [vmem:[%s999 + $0x10] sm:$0xff]
    %v1003 = vld [vmem:[%s999 + $0x18] sm:$0xff]
    %v1004 = vpack.c.bf16 %v1002, %v1000
    %v1005 = vpack.c.bf16 %v1003, %v1001
    %s1006 = scalar_lea.vmem [#allocation7], 240
    %v1007 = vld [vmem:[%s1006] sm:$0xf]
    %v1008 = vld [vmem:[%s1006 + $0x4] sm:$0xf]
    %v1009 = vld [vmem:[%s1006 + $0x8] sm:$0xf]
    %v1010 = vld [vmem:[%s1006 + $0xc] sm:$0xf]
    %v1011 = vld [vmem:[%s1006 + $0x10] sm:$0xf]
    %v1012 = vld [vmem:[%s1006 + $0x14] sm:$0xf]
    %v1013 = vld [vmem:[%s1006 + $0x18] sm:$0xf]
    %v1014 = vld [vmem:[%s1006 + $0x1c] sm:$0xf]
    %v1015 = vld [vmem:[%s1006 + $0x20] sm:$0xf]
    %v1016 = vld [vmem:[%s1006 + $0x24] sm:$0xf]
    %v1017 = vld [vmem:[%s1006 + $0x28] sm:$0xf]
    %v1018 = vld [vmem:[%s1006 + $0x2c] sm:$0xf]
    %v1019 = vld [vmem:[%s1006 + $0x30] sm:$0xf]
    %v1020 = vld [vmem:[%s1006 + $0x34] sm:$0xf]
    %v1021 = vld [vmem:[%s1006 + $0x38] sm:$0xf]
    %v1022 = vld [vmem:[%s1006 + $0x3c] sm:$0xf]
    %v1023 = vld [vmem:[%s1006 + $0x40] sm:$0xf]
    %v1024 = vld [vmem:[%s1006 + $0x44] sm:$0xf]
    %v1025 = vld [vmem:[%s1006 + $0x48] sm:$0xf]
    %v1026 = vld [vmem:[%s1006 + $0x4c] sm:$0xf]
    %v1047 = vunpack.c.l.b16 %v1007
    %v1048 = vunpack.c.l.b16 %v1008
    %v1049 = vunpack.c.l.b16 %v1009
    %v1050 = vunpack.c.l.b16 %v1010
    %v1051 = vunpack.c.l.b16 %v1011
    %v1052 = vunpack.c.l.b16 %v1012
    %v1053 = vunpack.c.l.b16 %v1013
    %v1054 = vunpack.c.l.b16 %v1014
    %v1055 = vunpack.c.l.b16 %v1015
    %v1056 = vunpack.c.l.b16 %v1016
    %v1057 = vunpack.c.l.b16 %v1017
    %v1058 = vunpack.c.l.b16 %v1018
    %v1059 = vunpack.c.l.b16 %v1019
    %v1060 = vunpack.c.l.b16 %v1020
    %v1061 = vunpack.c.l.b16 %v1021
    %v1062 = vunpack.c.l.b16 %v1022
    %v1063 = vunpack.c.l.b16 %v1023
    %v1064 = vunpack.c.l.b16 %v1024
    %v1065 = vunpack.c.l.b16 %v1025
    %v1066 = vunpack.c.l.b16 %v1026
    %v1067 = vpack.c.b16 %v1048, %v1047
    %v1068 = vpack.c.b16 %v1050, %v1049
    %v1069 = vpack.c.b16 %v1052, %v1051
    %v1070 = vpack.c.b16 %v1054, %v1053
    %v1071 = vpack.c.b16 %v1056, %v1055
    %v1072 = vpack.c.b16 %v1058, %v1057
    %v1073 = vpack.c.b16 %v1060, %v1059
    %v1074 = vpack.c.b16 %v1062, %v1061
    %v1075 = vpack.c.b16 %v1064, %v1063
    %v1076 = vpack.c.b16 %v1066, %v1065
    %v1088 = vsel %vm264, %v1005, 0
    %1090 = vmatprep.subr.bf16.mxu0 0
    %1091 = vmatpush1.bf16.msra.mxu0 %v1074
    %1092 = vmatprep.subr.bf16.mxu0 0
    %1093 = vmatpush1.bf16.msra.mxu0 %v1073
    %1094 = vmatprep.subr.bf16.mxu0 0
    %1095 = vmatpush1.bf16.msra.mxu0 %v1072
    %1096 = vmatprep.subr.bf16.mxu0 0
    %1097 = vmatpush1.bf16.msra.mxu0 %v1071
    %1098 = vmatprep.subr.bf16.mxu0 0
    %1099 = vmatpush1.bf16.msra.mxu0 %v1070
    %1100 = vmatprep.subr.bf16.mxu0 0
    %1101 = vmatpush1.bf16.msra.mxu0 %v1069
    %1102 = vmatprep.subr.bf16.mxu0 0
    %1103 = vmatpush1.bf16.msra.mxu0 %v1068
    %1104 = vmatprep.subr.bf16.mxu0 0
    %1105 = vmatpush1.bf16.msra.mxu0 %v1067
    %1106 = vmatprep.subr.bf16.mxu0 0
    %1107 = vmatpush2.bf16.msra.mxu0 0
    %1108 = vmatprep.subr.bf16.mxu0 0
    %1109 = vmatpush2.bf16.msra.mxu0 0
    %1110 = vmatprep.subr.bf16.mxu0 0
    %1111 = vmatpush2.bf16.msra.mxu0 0
    %1112 = vmatprep.subr.bf16.mxu0 0
    %1113 = vmatpush2.bf16.msra.mxu0 0
    %1114 = vmatprep.subr.bf16.mxu0 0
    %1115 = vmatpush2.bf16.msra.mxu0 0
    %1116 = vmatprep.subr.bf16.mxu0 0
    %1117 = vmatpush2.bf16.msra.mxu0 0
    %1118 = vmatprep.subr.bf16.mxu0 0
    %1119 = vmatpush2.bf16.msra.mxu0 %v1076
    %1120 = vmatprep.subr.bf16.mxu0 0
    %1121 = vmatpush2.bf16.msra.mxu0 %v1075
    %1122 = vmatprep.mubr.bf16.mxu0 %v1088
    %1123 = vmatmul.mubr.bf16.gmra.mxu0 %v1004
    %v1124 = vpop.f32.mrf.mxu0
    %v1125 = vadd.f32 0.0, %v1124
    %v1126 = vpop.f32.mrf.mxu0
    %v1127 = vpop.f32.mrf.mxu0
    %v1128 = vadd.f32 0.0, %v1127
    %v1129 = vpop.f32.mrf.mxu0
    %1130 = vdwg.mxu0
    %v1131 = vpack.c.bf16 %v1128, %v1125
    %v1133 = vunpack.c.l.b16 %v1131
    %v1134 = vunpack.c.h.b16 %v1131
    %v1135 = vpack.c.b16 %v1133, %v1133
    %v1136 = vpack.c.b16 %v1134, %v1134
    %1139 = vst.msk [vmem:[#allocation2 + $0x18] sm:$0xf] %vm317, %v1135
    %1140 = vst.msk [vmem:[#allocation2 + $0x1c] sm:$0xf] %vm317, %v1136
    %s1141 = scalar_lea.vmem [#allocation10], 240
    %v1142 = vld [vmem:[%s1141] sm:$0xf]
    %v1143 = vld [vmem:[%s1141 + $0x4] sm:$0xf]
    %v1144 = vld [vmem:[%s1141 + $0x8] sm:$0xf]
    %v1145 = vld [vmem:[%s1141 + $0xc] sm:$0xf]
    %v1146 = vld [vmem:[%s1141 + $0x10] sm:$0xf]
    %v1147 = vld [vmem:[%s1141 + $0x14] sm:$0xf]
    %v1148 = vld [vmem:[%s1141 + $0x18] sm:$0xf]
    %v1149 = vld [vmem:[%s1141 + $0x1c] sm:$0xf]
    %v1150 = vld [vmem:[%s1141 + $0x20] sm:$0xf]
    %v1151 = vld [vmem:[%s1141 + $0x24] sm:$0xf]
    %v1152 = vld [vmem:[%s1141 + $0x28] sm:$0xf]
    %v1153 = vld [vmem:[%s1141 + $0x2c] sm:$0xf]
    %v1154 = vld [vmem:[%s1141 + $0x30] sm:$0xf]
    %v1155 = vld [vmem:[%s1141 + $0x34] sm:$0xf]
    %v1156 = vld [vmem:[%s1141 + $0x38] sm:$0xf]
    %v1157 = vld [vmem:[%s1141 + $0x3c] sm:$0xf]
    %v1158 = vld [vmem:[%s1141 + $0x40] sm:$0xf]
    %v1159 = vld [vmem:[%s1141 + $0x44] sm:$0xf]
    %v1160 = vld [vmem:[%s1141 + $0x48] sm:$0xf]
    %v1161 = vld [vmem:[%s1141 + $0x4c] sm:$0xf]
    %v1182 = vunpack.c.l.b16 %v1142
    %v1183 = vunpack.c.l.b16 %v1143
    %v1184 = vunpack.c.l.b16 %v1144
    %v1185 = vunpack.c.l.b16 %v1145
    %v1186 = vunpack.c.l.b16 %v1146
    %v1187 = vunpack.c.l.b16 %v1147
    %v1188 = vunpack.c.l.b16 %v1148
    %v1189 = vunpack.c.l.b16 %v1149
    %v1190 = vunpack.c.l.b16 %v1150
    %v1191 = vunpack.c.l.b16 %v1151
    %v1192 = vunpack.c.l.b16 %v1152
    %v1193 = vunpack.c.l.b16 %v1153
    %v1194 = vunpack.c.l.b16 %v1154
    %v1195 = vunpack.c.l.b16 %v1155
    %v1196 = vunpack.c.l.b16 %v1156
    %v1197 = vunpack.c.l.b16 %v1157
    %v1198 = vunpack.c.l.b16 %v1158
    %v1199 = vunpack.c.l.b16 %v1159
    %v1200 = vunpack.c.l.b16 %v1160
    %v1201 = vunpack.c.l.b16 %v1161
    %v1202 = vpack.c.b16 %v1183, %v1182
    %v1203 = vpack.c.b16 %v1185, %v1184
    %v1204 = vpack.c.b16 %v1187, %v1186
    %v1205 = vpack.c.b16 %v1189, %v1188
    %v1206 = vpack.c.b16 %v1191, %v1190
    %v1207 = vpack.c.b16 %v1193, %v1192
    %v1208 = vpack.c.b16 %v1195, %v1194
    %v1209 = vpack.c.b16 %v1197, %v1196
    %v1210 = vpack.c.b16 %v1199, %v1198
    %v1211 = vpack.c.b16 %v1201, %v1200
    %1222 = vmatprep.subr.bf16.mxu0 0
    %1223 = vmatpush1.bf16.msra.mxu0 %v1209
    %1224 = vmatprep.subr.bf16.mxu0 0
    %1225 = vmatpush1.bf16.msra.mxu0 %v1208
    %1226 = vmatprep.subr.bf16.mxu0 0
    %1227 = vmatpush1.bf16.msra.mxu0 %v1207
    %1228 = vmatprep.subr.bf16.mxu0 0
    %1229 = vmatpush1.bf16.msra.mxu0 %v1206
    %1230 = vmatprep.subr.bf16.mxu0 0
    %1231 = vmatpush1.bf16.msra.mxu0 %v1205
    %1232 = vmatprep.subr.bf16.mxu0 0
    %1233 = vmatpush1.bf16.msra.mxu0 %v1204
    %1234 = vmatprep.subr.bf16.mxu0 0
    %1235 = vmatpush1.bf16.msra.mxu0 %v1203
    %1236 = vmatprep.subr.bf16.mxu0 0
    %1237 = vmatpush1.bf16.msra.mxu0 %v1202
    %1238 = vmatprep.subr.bf16.mxu0 0
    %1239 = vmatpush2.bf16.msra.mxu0 0
    %1240 = vmatprep.subr.bf16.mxu0 0
    %1241 = vmatpush2.bf16.msra.mxu0 0
    %1242 = vmatprep.subr.bf16.mxu0 0
    %1243 = vmatpush2.bf16.msra.mxu0 0
    %1244 = vmatprep.subr.bf16.mxu0 0
    %1245 = vmatpush2.bf16.msra.mxu0 0
    %1246 = vmatprep.subr.bf16.mxu0 0
    %1247 = vmatpush2.bf16.msra.mxu0 0
    %1248 = vmatprep.subr.bf16.mxu0 0
    %1249 = vmatpush2.bf16.msra.mxu0 0
    %1250 = vmatprep.subr.bf16.mxu0 0
    %1251 = vmatpush2.bf16.msra.mxu0 %v1211
    %1252 = vmatprep.subr.bf16.mxu0 0
    %1253 = vmatpush2.bf16.msra.mxu0 %v1210
    %1254 = vmatprep.mubr.bf16.mxu0 %v1088
    %1255 = vmatmul.mubr.bf16.gmra.mxu0 %v1004
    %v1256 = vpop.f32.mrf.mxu0
    %v1257 = vadd.f32 0.0, %v1256
    %v1258 = vpop.f32.mrf.mxu0
    %v1259 = vpop.f32.mrf.mxu0
    %v1260 = vadd.f32 0.0, %v1259
    %v1261 = vpop.f32.mrf.mxu0
    %1262 = vdwg.mxu0
    %v1263 = vpack.c.bf16 %v1260, %v1257
    %v1265 = vunpack.c.l.b16 %v1263
    %v1266 = vunpack.c.h.b16 %v1263
    %v1267 = vpack.c.b16 %v1265, %v1265
    %v1268 = vpack.c.b16 %v1266, %v1266
    %1271 = vst.msk [vmem:[#allocation3 + $0x18] sm:$0xf] %vm317, %v1267
    %1272 = vst.msk [vmem:[#allocation3 + $0x1c] sm:$0xf] %vm317, %v1268
    %s1273 = scalar_lea.vmem %s0, 128
    %v1274 = vld [vmem:[%s1273] sm:$0xff]
    %v1275 = vld [vmem:[%s1273 + $0x8] sm:$0xff]
    %v1276 = vld [vmem:[%s1273 + $0x10] sm:$0xff]
    %v1277 = vld [vmem:[%s1273 + $0x18] sm:$0xff]
    %v1278 = vpack.c.bf16 %v1276, %v1274
    %v1279 = vpack.c.bf16 %v1277, %v1275
    %s1280 = scalar_lea.vmem [#allocation7], 320
    %v1281 = vld [vmem:[%s1280] sm:$0xf]
    %v1282 = vld [vmem:[%s1280 + $0x4] sm:$0xf]
    %v1283 = vld [vmem:[%s1280 + $0x8] sm:$0xf]
    %v1284 = vld [vmem:[%s1280 + $0xc] sm:$0xf]
    %v1285 = vld [vmem:[%s1280 + $0x10] sm:$0xf]
    %v1286 = vld [vmem:[%s1280 + $0x14] sm:$0xf]
    %v1287 = vld [vmem:[%s1280 + $0x18] sm:$0xf]
    %v1288 = vld [vmem:[%s1280 + $0x1c] sm:$0xf]
    %v1289 = vld [vmem:[%s1280 + $0x20] sm:$0xf]
    %v1290 = vld [vmem:[%s1280 + $0x24] sm:$0xf]
    %v1291 = vld [vmem:[%s1280 + $0x28] sm:$0xf]
    %v1292 = vld [vmem:[%s1280 + $0x2c] sm:$0xf]
    %v1293 = vld [vmem:[%s1280 + $0x30] sm:$0xf]
    %v1294 = vld [vmem:[%s1280 + $0x34] sm:$0xf]
    %v1295 = vld [vmem:[%s1280 + $0x38] sm:$0xf]
    %v1296 = vld [vmem:[%s1280 + $0x3c] sm:$0xf]
    %v1297 = vld [vmem:[%s1280 + $0x40] sm:$0xf]
    %v1298 = vld [vmem:[%s1280 + $0x44] sm:$0xf]
    %v1299 = vld [vmem:[%s1280 + $0x48] sm:$0xf]
    %v1300 = vld [vmem:[%s1280 + $0x4c] sm:$0xf]
    %v1321 = vunpack.c.l.b16 %v1281
    %v1322 = vunpack.c.l.b16 %v1282
    %v1323 = vunpack.c.l.b16 %v1283
    %v1324 = vunpack.c.l.b16 %v1284
    %v1325 = vunpack.c.l.b16 %v1285
    %v1326 = vunpack.c.l.b16 %v1286
    %v1327 = vunpack.c.l.b16 %v1287
    %v1328 = vunpack.c.l.b16 %v1288
    %v1329 = vunpack.c.l.b16 %v1289
    %v1330 = vunpack.c.l.b16 %v1290
    %v1331 = vunpack.c.l.b16 %v1291
    %v1332 = vunpack.c.l.b16 %v1292
    %v1333 = vunpack.c.l.b16 %v1293
    %v1334 = vunpack.c.l.b16 %v1294
    %v1335 = vunpack.c.l.b16 %v1295
    %v1336 = vunpack.c.l.b16 %v1296
    %v1337 = vunpack.c.l.b16 %v1297
    %v1338 = vunpack.c.l.b16 %v1298
    %v1339 = vunpack.c.l.b16 %v1299
    %v1340 = vunpack.c.l.b16 %v1300
    %v1341 = vpack.c.b16 %v1322, %v1321
    %v1342 = vpack.c.b16 %v1324, %v1323
    %v1343 = vpack.c.b16 %v1326, %v1325
    %v1344 = vpack.c.b16 %v1328, %v1327
    %v1345 = vpack.c.b16 %v1330, %v1329
    %v1346 = vpack.c.b16 %v1332, %v1331
    %v1347 = vpack.c.b16 %v1334, %v1333
    %v1348 = vpack.c.b16 %v1336, %v1335
    %v1349 = vpack.c.b16 %v1338, %v1337
    %v1350 = vpack.c.b16 %v1340, %v1339
    %v1362 = vsel %vm264, %v1279, 0
    %1364 = vmatprep.subr.bf16.mxu0 0
    %1365 = vmatpush1.bf16.msra.mxu0 %v1348
    %1366 = vmatprep.subr.bf16.mxu0 0
    %1367 = vmatpush1.bf16.msra.mxu0 %v1347
    %1368 = vmatprep.subr.bf16.mxu0 0
    %1369 = vmatpush1.bf16.msra.mxu0 %v1346
    %1370 = vmatprep.subr.bf16.mxu0 0
    %1371 = vmatpush1.bf16.msra.mxu0 %v1345
    %1372 = vmatprep.subr.bf16.mxu0 0
    %1373 = vmatpush1.bf16.msra.mxu0 %v1344
    %1374 = vmatprep.subr.bf16.mxu0 0
    %1375 = vmatpush1.bf16.msra.mxu0 %v1343
    %1376 = vmatprep.subr.bf16.mxu0 0
    %1377 = vmatpush1.bf16.msra.mxu0 %v1342
    %1378 = vmatprep.subr.bf16.mxu0 0
    %1379 = vmatpush1.bf16.msra.mxu0 %v1341
    %1380 = vmatprep.subr.bf16.mxu0 0
    %1381 = vmatpush2.bf16.msra.mxu0 0
    %1382 = vmatprep.subr.bf16.mxu0 0
    %1383 = vmatpush2.bf16.msra.mxu0 0
    %1384 = vmatprep.subr.bf16.mxu0 0
    %1385 = vmatpush2.bf16.msra.mxu0 0
    %1386 = vmatprep.subr.bf16.mxu0 0
    %1387 = vmatpush2.bf16.msra.mxu0 0
    %1388 = vmatprep.subr.bf16.mxu0 0
    %1389 = vmatpush2.bf16.msra.mxu0 0
    %1390 = vmatprep.subr.bf16.mxu0 0
    %1391 = vmatpush2.bf16.msra.mxu0 0
    %1392 = vmatprep.subr.bf16.mxu0 0
    %1393 = vmatpush2.bf16.msra.mxu0 %v1350
    %1394 = vmatprep.subr.bf16.mxu0 0
    %1395 = vmatpush2.bf16.msra.mxu0 %v1349
    %1396 = vmatprep.mubr.bf16.mxu0 %v1362
    %1397 = vmatmul.mubr.bf16.gmra.mxu0 %v1278
    %v1398 = vpop.f32.mrf.mxu0
    %v1399 = vadd.f32 0.0, %v1398
    %v1400 = vpop.f32.mrf.mxu0
    %v1401 = vpop.f32.mrf.mxu0
    %v1402 = vadd.f32 0.0, %v1401
    %v1403 = vpop.f32.mrf.mxu0
    %1404 = vdwg.mxu0
    %v1405 = vpack.c.bf16 %v1402, %v1399
    %v1407 = vunpack.c.l.b16 %v1405
    %v1408 = vunpack.c.h.b16 %v1405
    %v1409 = vpack.c.b16 %v1407, %v1407
    %v1410 = vpack.c.b16 %v1408, %v1408
    %1413 = vst.msk [vmem:[#allocation2 + $0x20] sm:$0xf] %vm317, %v1409
    %1414 = vst.msk [vmem:[#allocation2 + $0x24] sm:$0xf] %vm317, %v1410
    %s1415 = scalar_lea.vmem [#allocation10], 320
    %v1416 = vld [vmem:[%s1415] sm:$0xf]
    %v1417 = vld [vmem:[%s1415 + $0x4] sm:$0xf]
    %v1418 = vld [vmem:[%s1415 + $0x8] sm:$0xf]
    %v1419 = vld [vmem:[%s1415 + $0xc] sm:$0xf]
    %v1420 = vld [vmem:[%s1415 + $0x10] sm:$0xf]
    %v1421 = vld [vmem:[%s1415 + $0x14] sm:$0xf]
    %v1422 = vld [vmem:[%s1415 + $0x18] sm:$0xf]
    %v1423 = vld [vmem:[%s1415 + $0x1c] sm:$0xf]
    %v1424 = vld [vmem:[%s1415 + $0x20] sm:$0xf]
    %v1425 = vld [vmem:[%s1415 + $0x24] sm:$0xf]
    %v1426 = vld [vmem:[%s1415 + $0x28] sm:$0xf]
    %v1427 = vld [vmem:[%s1415 + $0x2c] sm:$0xf]
    %v1428 = vld [vmem:[%s1415 + $0x30] sm:$0xf]
    %v1429 = vld [vmem:[%s1415 + $0x34] sm:$0xf]
    %v1430 = vld [vmem:[%s1415 + $0x38] sm:$0xf]
    %v1431 = vld [vmem:[%s1415 + $0x3c] sm:$0xf]
    %v1432 = vld [vmem:[%s1415 + $0x40] sm:$0xf]
    %v1433 = vld [vmem:[%s1415 + $0x44] sm:$0xf]
    %v1434 = vld [vmem:[%s1415 + $0x48] sm:$0xf]
    %v1435 = vld [vmem:[%s1415 + $0x4c] sm:$0xf]
    %v1456 = vunpack.c.l.b16 %v1416
    %v1457 = vunpack.c.l.b16 %v1417
    %v1458 = vunpack.c.l.b16 %v1418
    %v1459 = vunpack.c.l.b16 %v1419
    %v1460 = vunpack.c.l.b16 %v1420
    %v1461 = vunpack.c.l.b16 %v1421
    %v1462 = vunpack.c.l.b16 %v1422
    %v1463 = vunpack.c.l.b16 %v1423
    %v1464 = vunpack.c.l.b16 %v1424
    %v1465 = vunpack.c.l.b16 %v1425
    %v1466 = vunpack.c.l.b16 %v1426
    %v1467 = vunpack.c.l.b16 %v1427
    %v1468 = vunpack.c.l.b16 %v1428
    %v1469 = vunpack.c.l.b16 %v1429
    %v1470 = vunpack.c.l.b16 %v1430
    %v1471 = vunpack.c.l.b16 %v1431
    %v1472 = vunpack.c.l.b16 %v1432
    %v1473 = vunpack.c.l.b16 %v1433
    %v1474 = vunpack.c.l.b16 %v1434
    %v1475 = vunpack.c.l.b16 %v1435
    %v1476 = vpack.c.b16 %v1457, %v1456
    %v1477 = vpack.c.b16 %v1459, %v1458
    %v1478 = vpack.c.b16 %v1461, %v1460
    %v1479 = vpack.c.b16 %v1463, %v1462
    %v1480 = vpack.c.b16 %v1465, %v1464
    %v1481 = vpack.c.b16 %v1467, %v1466
    %v1482 = vpack.c.b16 %v1469, %v1468
    %v1483 = vpack.c.b16 %v1471, %v1470
    %v1484 = vpack.c.b16 %v1473, %v1472
    %v1485 = vpack.c.b16 %v1475, %v1474
    %1496 = vmatprep.subr.bf16.mxu0 0
    %1497 = vmatpush1.bf16.msra.mxu0 %v1483
    %1498 = vmatprep.subr.bf16.mxu0 0
    %1499 = vmatpush1.bf16.msra.mxu0 %v1482
    %1500 = vmatprep.subr.bf16.mxu0 0
    %1501 = vmatpush1.bf16.msra.mxu0 %v1481
    %1502 = vmatprep.subr.bf16.mxu0 0
    %1503 = vmatpush1.bf16.msra.mxu0 %v1480
    %1504 = vmatprep.subr.bf16.mxu0 0
    %1505 = vmatpush1.bf16.msra.mxu0 %v1479
    %1506 = vmatprep.subr.bf16.mxu0 0
    %1507 = vmatpush1.bf16.msra.mxu0 %v1478
    %1508 = vmatprep.subr.bf16.mxu0 0
    %1509 = vmatpush1.bf16.msra.mxu0 %v1477
    %1510 = vmatprep.subr.bf16.mxu0 0
    %1511 = vmatpush1.bf16.msra.mxu0 %v1476
    %1512 = vmatprep.subr.bf16.mxu0 0
    %1513 = vmatpush2.bf16.msra.mxu0 0
    %1514 = vmatprep.subr.bf16.mxu0 0
    %1515 = vmatpush2.bf16.msra.mxu0 0
    %1516 = vmatprep.subr.bf16.mxu0 0
    %1517 = vmatpush2.bf16.msra.mxu0 0
    %1518 = vmatprep.subr.bf16.mxu0 0
    %1519 = vmatpush2.bf16.msra.mxu0 0
    %1520 = vmatprep.subr.bf16.mxu0 0
    %1521 = vmatpush2.bf16.msra.mxu0 0
    %1522 = vmatprep.subr.bf16.mxu0 0
    %1523 = vmatpush2.bf16.msra.mxu0 0
    %1524 = vmatprep.subr.bf16.mxu0 0
    %1525 = vmatpush2.bf16.msra.mxu0 %v1485
    %1526 = vmatprep.subr.bf16.mxu0 0
    %1527 = vmatpush2.bf16.msra.mxu0 %v1484
    %1528 = vmatprep.mubr.bf16.mxu0 %v1362
    %1529 = vmatmul.mubr.bf16.gmra.mxu0 %v1278
    %v1530 = vpop.f32.mrf.mxu0
    %v1531 = vadd.f32 0.0, %v1530
    %v1532 = vpop.f32.mrf.mxu0
    %v1533 = vpop.f32.mrf.mxu0
    %v1534 = vadd.f32 0.0, %v1533
    %v1535 = vpop.f32.mrf.mxu0
    %1536 = vdwg.mxu0
    %v1537 = vpack.c.bf16 %v1534, %v1531
    %v1539 = vunpack.c.l.b16 %v1537
    %v1540 = vunpack.c.h.b16 %v1537
    %v1541 = vpack.c.b16 %v1539, %v1539
    %v1542 = vpack.c.b16 %v1540, %v1540
    %1545 = vst.msk [vmem:[#allocation3 + $0x20] sm:$0xf] %vm317, %v1541
    %1546 = vst.msk [vmem:[#allocation3 + $0x24] sm:$0xf] %vm317, %v1542
    %s1547 = scalar_lea.vmem %s0, 160
    %v1548 = vld [vmem:[%s1547] sm:$0xff]
    %v1549 = vld [vmem:[%s1547 + $0x8] sm:$0xff]
    %v1550 = vld [vmem:[%s1547 + $0x10] sm:$0xff]
    %v1551 = vld [vmem:[%s1547 + $0x18] sm:$0xff]
    %v1552 = vpack.c.bf16 %v1550, %v1548
    %v1553 = vpack.c.bf16 %v1551, %v1549
    %s1554 = scalar_lea.vmem [#allocation7], 400
    %v1555 = vld [vmem:[%s1554] sm:$0xf]
    %v1556 = vld [vmem:[%s1554 + $0x4] sm:$0xf]
    %v1557 = vld [vmem:[%s1554 + $0x8] sm:$0xf]
    %v1558 = vld [vmem:[%s1554 + $0xc] sm:$0xf]
    %v1559 = vld [vmem:[%s1554 + $0x10] sm:$0xf]
    %v1560 = vld [vmem:[%s1554 + $0x14] sm:$0xf]
    %v1561 = vld [vmem:[%s1554 + $0x18] sm:$0xf]
    %v1562 = vld [vmem:[%s1554 + $0x1c] sm:$0xf]
    %v1563 = vld [vmem:[%s1554 + $0x20] sm:$0xf]
    %v1564 = vld [vmem:[%s1554 + $0x24] sm:$0xf]
    %v1565 = vld [vmem:[%s1554 + $0x28] sm:$0xf]
    %v1566 = vld [vmem:[%s1554 + $0x2c] sm:$0xf]
    %v1567 = vld [vmem:[%s1554 + $0x30] sm:$0xf]
    %v1568 = vld [vmem:[%s1554 + $0x34] sm:$0xf]
    %v1569 = vld [vmem:[%s1554 + $0x38] sm:$0xf]
    %v1570 = vld [vmem:[%s1554 + $0x3c] sm:$0xf]
    %v1571 = vld [vmem:[%s1554 + $0x40] sm:$0xf]
    %v1572 = vld [vmem:[%s1554 + $0x44] sm:$0xf]
    %v1573 = vld [vmem:[%s1554 + $0x48] sm:$0xf]
    %v1574 = vld [vmem:[%s1554 + $0x4c] sm:$0xf]
    %v1595 = vunpack.c.l.b16 %v1555
    %v1596 = vunpack.c.l.b16 %v1556
    %v1597 = vunpack.c.l.b16 %v1557
    %v1598 = vunpack.c.l.b16 %v1558
    %v1599 = vunpack.c.l.b16 %v1559
    %v1600 = vunpack.c.l.b16 %v1560
    %v1601 = vunpack.c.l.b16 %v1561
    %v1602 = vunpack.c.l.b16 %v1562
    %v1603 = vunpack.c.l.b16 %v1563
    %v1604 = vunpack.c.l.b16 %v1564
    %v1605 = vunpack.c.l.b16 %v1565
    %v1606 = vunpack.c.l.b16 %v1566
    %v1607 = vunpack.c.l.b16 %v1567
    %v1608 = vunpack.c.l.b16 %v1568
    %v1609 = vunpack.c.l.b16 %v1569
    %v1610 = vunpack.c.l.b16 %v1570
    %v1611 = vunpack.c.l.b16 %v1571
    %v1612 = vunpack.c.l.b16 %v1572
    %v1613 = vunpack.c.l.b16 %v1573
    %v1614 = vunpack.c.l.b16 %v1574
    %v1615 = vpack.c.b16 %v1596, %v1595
    %v1616 = vpack.c.b16 %v1598, %v1597
    %v1617 = vpack.c.b16 %v1600, %v1599
    %v1618 = vpack.c.b16 %v1602, %v1601
    %v1619 = vpack.c.b16 %v1604, %v1603
    %v1620 = vpack.c.b16 %v1606, %v1605
    %v1621 = vpack.c.b16 %v1608, %v1607
    %v1622 = vpack.c.b16 %v1610, %v1609
    %v1623 = vpack.c.b16 %v1612, %v1611
    %v1624 = vpack.c.b16 %v1614, %v1613
    %v1636 = vsel %vm264, %v1553, 0
    %1638 = vmatprep.subr.bf16.mxu0 0
    %1639 = vmatpush1.bf16.msra.mxu0 %v1622
    %1640 = vmatprep.subr.bf16.mxu0 0
    %1641 = vmatpush1.bf16.msra.mxu0 %v1621
    %1642 = vmatprep.subr.bf16.mxu0 0
    %1643 = vmatpush1.bf16.msra.mxu0 %v1620
    %1644 = vmatprep.subr.bf16.mxu0 0
    %1645 = vmatpush1.bf16.msra.mxu0 %v1619
    %1646 = vmatprep.subr.bf16.mxu0 0
    %1647 = vmatpush1.bf16.msra.mxu0 %v1618
    %1648 = vmatprep.subr.bf16.mxu0 0
    %1649 = vmatpush1.bf16.msra.mxu0 %v1617
    %1650 = vmatprep.subr.bf16.mxu0 0
    %1651 = vmatpush1.bf16.msra.mxu0 %v1616
    %1652 = vmatprep.subr.bf16.mxu0 0
    %1653 = vmatpush1.bf16.msra.mxu0 %v1615
    %1654 = vmatprep.subr.bf16.mxu0 0
    %1655 = vmatpush2.bf16.msra.mxu0 0
    %1656 = vmatprep.subr.bf16.mxu0 0
    %1657 = vmatpush2.bf16.msra.mxu0 0
    %1658 = vmatprep.subr.bf16.mxu0 0
    %1659 = vmatpush2.bf16.msra.mxu0 0
    %1660 = vmatprep.subr.bf16.mxu0 0
    %1661 = vmatpush2.bf16.msra.mxu0 0
    %1662 = vmatprep.subr.bf16.mxu0 0
    %1663 = vmatpush2.bf16.msra.mxu0 0
    %1664 = vmatprep.subr.bf16.mxu0 0
    %1665 = vmatpush2.bf16.msra.mxu0 0
    %1666 = vmatprep.subr.bf16.mxu0 0
    %1667 = vmatpush2.bf16.msra.mxu0 %v1624
    %1668 = vmatprep.subr.bf16.mxu0 0
    %1669 = vmatpush2.bf16.msra.mxu0 %v1623
    %1670 = vmatprep.mubr.bf16.mxu0 %v1636
    %1671 = vmatmul.mubr.bf16.gmra.mxu0 %v1552
    %v1672 = vpop.f32.mrf.mxu0
    %v1673 = vadd.f32 0.0, %v1672
    %v1674 = vpop.f32.mrf.mxu0
    %v1675 = vpop.f32.mrf.mxu0
    %v1676 = vadd.f32 0.0, %v1675
    %v1677 = vpop.f32.mrf.mxu0
    %1678 = vdwg.mxu0
    %v1679 = vpack.c.bf16 %v1676, %v1673
    %v1681 = vunpack.c.l.b16 %v1679
    %v1682 = vunpack.c.h.b16 %v1679
    %v1683 = vpack.c.b16 %v1681, %v1681
    %v1684 = vpack.c.b16 %v1682, %v1682
    %1687 = vst.msk [vmem:[#allocation2 + $0x28] sm:$0xf] %vm317, %v1683
    %1688 = vst.msk [vmem:[#allocation2 + $0x2c] sm:$0xf] %vm317, %v1684
    %s1689 = scalar_lea.vmem [#allocation10], 400
    %v1690 = vld [vmem:[%s1689] sm:$0xf]
    %v1691 = vld [vmem:[%s1689 + $0x4] sm:$0xf]
    %v1692 = vld [vmem:[%s1689 + $0x8] sm:$0xf]
    %v1693 = vld [vmem:[%s1689 + $0xc] sm:$0xf]
    %v1694 = vld [vmem:[%s1689 + $0x10] sm:$0xf]
    %v1695 = vld [vmem:[%s1689 + $0x14] sm:$0xf]
    %v1696 = vld [vmem:[%s1689 + $0x18] sm:$0xf]
    %v1697 = vld [vmem:[%s1689 + $0x1c] sm:$0xf]
    %v1698 = vld [vmem:[%s1689 + $0x20] sm:$0xf]
    %v1699 = vld [vmem:[%s1689 + $0x24] sm:$0xf]
    %v1700 = vld [vmem:[%s1689 + $0x28] sm:$0xf]
    %v1701 = vld [vmem:[%s1689 + $0x2c] sm:$0xf]
    %v1702 = vld [vmem:[%s1689 + $0x30] sm:$0xf]
    %v1703 = vld [vmem:[%s1689 + $0x34] sm:$0xf]
    %v1704 = vld [vmem:[%s1689 + $0x38] sm:$0xf]
    %v1705 = vld [vmem:[%s1689 + $0x3c] sm:$0xf]
    %v1706 = vld [vmem:[%s1689 + $0x40] sm:$0xf]
    %v1707 = vld [vmem:[%s1689 + $0x44] sm:$0xf]
    %v1708 = vld [vmem:[%s1689 + $0x48] sm:$0xf]
    %v1709 = vld [vmem:[%s1689 + $0x4c] sm:$0xf]
    %v1730 = vunpack.c.l.b16 %v1690
    %v1731 = vunpack.c.l.b16 %v1691
    %v1732 = vunpack.c.l.b16 %v1692
    %v1733 = vunpack.c.l.b16 %v1693
    %v1734 = vunpack.c.l.b16 %v1694
    %v1735 = vunpack.c.l.b16 %v1695
    %v1736 = vunpack.c.l.b16 %v1696
    %v1737 = vunpack.c.l.b16 %v1697
    %v1738 = vunpack.c.l.b16 %v1698
    %v1739 = vunpack.c.l.b16 %v1699
    %v1740 = vunpack.c.l.b16 %v1700
    %v1741 = vunpack.c.l.b16 %v1701
    %v1742 = vunpack.c.l.b16 %v1702
    %v1743 = vunpack.c.l.b16 %v1703
    %v1744 = vunpack.c.l.b16 %v1704
    %v1745 = vunpack.c.l.b16 %v1705
    %v1746 = vunpack.c.l.b16 %v1706
    %v1747 = vunpack.c.l.b16 %v1707
    %v1748 = vunpack.c.l.b16 %v1708
    %v1749 = vunpack.c.l.b16 %v1709
    %v1750 = vpack.c.b16 %v1731, %v1730
    %v1751 = vpack.c.b16 %v1733, %v1732
    %v1752 = vpack.c.b16 %v1735, %v1734
    %v1753 = vpack.c.b16 %v1737, %v1736
    %v1754 = vpack.c.b16 %v1739, %v1738
    %v1755 = vpack.c.b16 %v1741, %v1740
    %v1756 = vpack.c.b16 %v1743, %v1742
    %v1757 = vpack.c.b16 %v1745, %v1744
    %v1758 = vpack.c.b16 %v1747, %v1746
    %v1759 = vpack.c.b16 %v1749, %v1748
    %1770 = vmatprep.subr.bf16.mxu0 0
    %1771 = vmatpush1.bf16.msra.mxu0 %v1757
    %1772 = vmatprep.subr.bf16.mxu0 0
    %1773 = vmatpush1.bf16.msra.mxu0 %v1756
    %1774 = vmatprep.subr.bf16.mxu0 0
    %1775 = vmatpush1.bf16.msra.mxu0 %v1755
    %1776 = vmatprep.subr.bf16.mxu0 0
    %1777 = vmatpush1.bf16.msra.mxu0 %v1754
    %1778 = vmatprep.subr.bf16.mxu0 0
    %1779 = vmatpush1.bf16.msra.mxu0 %v1753
    %1780 = vmatprep.subr.bf16.mxu0 0
    %1781 = vmatpush1.bf16.msra.mxu0 %v1752
    %1782 = vmatprep.subr.bf16.mxu0 0
    %1783 = vmatpush1.bf16.msra.mxu0 %v1751
    %1784 = vmatprep.subr.bf16.mxu0 0
    %1785 = vmatpush1.bf16.msra.mxu0 %v1750
    %1786 = vmatprep.subr.bf16.mxu0 0
    %1787 = vmatpush2.bf16.msra.mxu0 0
    %1788 = vmatprep.subr.bf16.mxu0 0
    %1789 = vmatpush2.bf16.msra.mxu0 0
    %1790 = vmatprep.subr.bf16.mxu0 0
    %1791 = vmatpush2.bf16.msra.mxu0 0
    %1792 = vmatprep.subr.bf16.mxu0 0
    %1793 = vmatpush2.bf16.msra.mxu0 0
    %1794 = vmatprep.subr.bf16.mxu0 0
    %1795 = vmatpush2.bf16.msra.mxu0 0
    %1796 = vmatprep.subr.bf16.mxu0 0
    %1797 = vmatpush2.bf16.msra.mxu0 0
    %1798 = vmatprep.subr.bf16.mxu0 0
    %1799 = vmatpush2.bf16.msra.mxu0 %v1759
    %1800 = vmatprep.subr.bf16.mxu0 0
    %1801 = vmatpush2.bf16.msra.mxu0 %v1758
    %1802 = vmatprep.mubr.bf16.mxu0 %v1636
    %1803 = vmatmul.mubr.bf16.gmra.mxu0 %v1552
    %v1804 = vpop.f32.mrf.mxu0
    %v1805 = vadd.f32 0.0, %v1804
    %v1806 = vpop.f32.mrf.mxu0
    %v1807 = vpop.f32.mrf.mxu0
    %v1808 = vadd.f32 0.0, %v1807
    %v1809 = vpop.f32.mrf.mxu0
    %1810 = vdwg.mxu0
    %v1811 = vpack.c.bf16 %v1808, %v1805
    %v1813 = vunpack.c.l.b16 %v1811
    %v1814 = vunpack.c.h.b16 %v1811
    %v1815 = vpack.c.b16 %v1813, %v1813
    %v1816 = vpack.c.b16 %v1814, %v1814
    %1819 = vst.msk [vmem:[#allocation3 + $0x28] sm:$0xf] %vm317, %v1815
    %1820 = vst.msk [vmem:[#allocation3 + $0x2c] sm:$0xf] %vm317, %v1816
    %s1821 = scalar_lea.vmem %s0, 192
    %v1822 = vld [vmem:[%s1821] sm:$0xff]
    %v1823 = vld [vmem:[%s1821 + $0x8] sm:$0xff]
    %v1824 = vld [vmem:[%s1821 + $0x10] sm:$0xff]
    %v1825 = vld [vmem:[%s1821 + $0x18] sm:$0xff]
    %v1826 = vpack.c.bf16 %v1824, %v1822
    %v1827 = vpack.c.bf16 %v1825, %v1823
    %s1828 = scalar_lea.vmem [#allocation7], 480
    %v1829 = vld [vmem:[%s1828] sm:$0xf]
    %v1830 = vld [vmem:[%s1828 + $0x4] sm:$0xf]
    %v1831 = vld [vmem:[%s1828 + $0x8] sm:$0xf]
    %v1832 = vld [vmem:[%s1828 + $0xc] sm:$0xf]
    %v1833 = vld [vmem:[%s1828 + $0x10] sm:$0xf]
    %v1834 = vld [vmem:[%s1828 + $0x14] sm:$0xf]
    %v1835 = vld [vmem:[%s1828 + $0x18] sm:$0xf]
    %v1836 = vld [vmem:[%s1828 + $0x1c] sm:$0xf]
    %v1837 = vld [vmem:[%s1828 + $0x20] sm:$0xf]
    %v1838 = vld [vmem:[%s1828 + $0x24] sm:$0xf]
    %v1839 = vld [vmem:[%s1828 + $0x28] sm:$0xf]
    %v1840 = vld [vmem:[%s1828 + $0x2c] sm:$0xf]
    %v1841 = vld [vmem:[%s1828 + $0x30] sm:$0xf]
    %v1842 = vld [vmem:[%s1828 + $0x34] sm:$0xf]
    %v1843 = vld [vmem:[%s1828 + $0x38] sm:$0xf]
    %v1844 = vld [vmem:[%s1828 + $0x3c] sm:$0xf]
    %v1845 = vld [vmem:[%s1828 + $0x40] sm:$0xf]
    %v1846 = vld [vmem:[%s1828 + $0x44] sm:$0xf]
    %v1847 = vld [vmem:[%s1828 + $0x48] sm:$0xf]
    %v1848 = vld [vmem:[%s1828 + $0x4c] sm:$0xf]
    %v1869 = vunpack.c.l.b16 %v1829
    %v1870 = vunpack.c.l.b16 %v1830
    %v1871 = vunpack.c.l.b16 %v1831
    %v1872 = vunpack.c.l.b16 %v1832
    %v1873 = vunpack.c.l.b16 %v1833
    %v1874 = vunpack.c.l.b16 %v1834
    %v1875 = vunpack.c.l.b16 %v1835
    %v1876 = vunpack.c.l.b16 %v1836
    %v1877 = vunpack.c.l.b16 %v1837
    %v1878 = vunpack.c.l.b16 %v1838
    %v1879 = vunpack.c.l.b16 %v1839
    %v1880 = vunpack.c.l.b16 %v1840
    %v1881 = vunpack.c.l.b16 %v1841
    %v1882 = vunpack.c.l.b16 %v1842
    %v1883 = vunpack.c.l.b16 %v1843
    %v1884 = vunpack.c.l.b16 %v1844
    %v1885 = vunpack.c.l.b16 %v1845
    %v1886 = vunpack.c.l.b16 %v1846
    %v1887 = vunpack.c.l.b16 %v1847
    %v1888 = vunpack.c.l.b16 %v1848
    %v1889 = vpack.c.b16 %v1870, %v1869
    %v1890 = vpack.c.b16 %v1872, %v1871
    %v1891 = vpack.c.b16 %v1874, %v1873
    %v1892 = vpack.c.b16 %v1876, %v1875
    %v1893 = vpack.c.b16 %v1878, %v1877
    %v1894 = vpack.c.b16 %v1880, %v1879
    %v1895 = vpack.c.b16 %v1882, %v1881
    %v1896 = vpack.c.b16 %v1884, %v1883
    %v1897 = vpack.c.b16 %v1886, %v1885
    %v1898 = vpack.c.b16 %v1888, %v1887
    %v1910 = vsel %vm264, %v1827, 0
    %1912 = vmatprep.subr.bf16.mxu0 0
    %1913 = vmatpush1.bf16.msra.mxu0 %v1896
    %1914 = vmatprep.subr.bf16.mxu0 0
    %1915 = vmatpush1.bf16.msra.mxu0 %v1895
    %1916 = vmatprep.subr.bf16.mxu0 0
    %1917 = vmatpush1.bf16.msra.mxu0 %v1894
    %1918 = vmatprep.subr.bf16.mxu0 0
    %1919 = vmatpush1.bf16.msra.mxu0 %v1893
    %1920 = vmatprep.subr.bf16.mxu0 0
    %1921 = vmatpush1.bf16.msra.mxu0 %v1892
    %1922 = vmatprep.subr.bf16.mxu0 0
    %1923 = vmatpush1.bf16.msra.mxu0 %v1891
    %1924 = vmatprep.subr.bf16.mxu0 0
    %1925 = vmatpush1.bf16.msra.mxu0 %v1890
    %1926 = vmatprep.subr.bf16.mxu0 0
    %1927 = vmatpush1.bf16.msra.mxu0 %v1889
    %1928 = vmatprep.subr.bf16.mxu0 0
    %1929 = vmatpush2.bf16.msra.mxu0 0
    %1930 = vmatprep.subr.bf16.mxu0 0
    %1931 = vmatpush2.bf16.msra.mxu0 0
    %1932 = vmatprep.subr.bf16.mxu0 0
    %1933 = vmatpush2.bf16.msra.mxu0 0
    %1934 = vmatprep.subr.bf16.mxu0 0
    %1935 = vmatpush2.bf16.msra.mxu0 0
    %1936 = vmatprep.subr.bf16.mxu0 0
    %1937 = vmatpush2.bf16.msra.mxu0 0
    %1938 = vmatprep.subr.bf16.mxu0 0
    %1939 = vmatpush2.bf16.msra.mxu0 0
    %1940 = vmatprep.subr.bf16.mxu0 0
    %1941 = vmatpush2.bf16.msra.mxu0 %v1898
    %1942 = vmatprep.subr.bf16.mxu0 0
    %1943 = vmatpush2.bf16.msra.mxu0 %v1897
    %1944 = vmatprep.mubr.bf16.mxu0 %v1910
    %1945 = vmatmul.mubr.bf16.gmra.mxu0 %v1826
    %v1946 = vpop.f32.mrf.mxu0
    %v1947 = vadd.f32 0.0, %v1946
    %v1948 = vpop.f32.mrf.mxu0
    %v1949 = vpop.f32.mrf.mxu0
    %v1950 = vadd.f32 0.0, %v1949
    %v1951 = vpop.f32.mrf.mxu0
    %1952 = vdwg.mxu0
    %v1953 = vpack.c.bf16 %v1950, %v1947
    %v1955 = vunpack.c.l.b16 %v1953
    %v1956 = vunpack.c.h.b16 %v1953
    %v1957 = vpack.c.b16 %v1955, %v1955
    %v1958 = vpack.c.b16 %v1956, %v1956
    %1961 = vst.msk [vmem:[#allocation2 + $0x30] sm:$0xf] %vm317, %v1957
    %1962 = vst.msk [vmem:[#allocation2 + $0x34] sm:$0xf] %vm317, %v1958
    %s1963 = scalar_lea.vmem [#allocation10], 480
    %v1964 = vld [vmem:[%s1963] sm:$0xf]
    %v1965 = vld [vmem:[%s1963 + $0x4] sm:$0xf]
    %v1966 = vld [vmem:[%s1963 + $0x8] sm:$0xf]
    %v1967 = vld [vmem:[%s1963 + $0xc] sm:$0xf]
    %v1968 = vld [vmem:[%s1963 + $0x10] sm:$0xf]
    %v1969 = vld [vmem:[%s1963 + $0x14] sm:$0xf]
    %v1970 = vld [vmem:[%s1963 + $0x18] sm:$0xf]
    %v1971 = vld [vmem:[%s1963 + $0x1c] sm:$0xf]
    %v1972 = vld [vmem:[%s1963 + $0x20] sm:$0xf]
    %v1973 = vld [vmem:[%s1963 + $0x24] sm:$0xf]
    %v1974 = vld [vmem:[%s1963 + $0x28] sm:$0xf]
    %v1975 = vld [vmem:[%s1963 + $0x2c] sm:$0xf]
    %v1976 = vld [vmem:[%s1963 + $0x30] sm:$0xf]
    %v1977 = vld [vmem:[%s1963 + $0x34] sm:$0xf]
    %v1978 = vld [vmem:[%s1963 + $0x38] sm:$0xf]
    %v1979 = vld [vmem:[%s1963 + $0x3c] sm:$0xf]
    %v1980 = vld [vmem:[%s1963 + $0x40] sm:$0xf]
    %v1981 = vld [vmem:[%s1963 + $0x44] sm:$0xf]
    %v1982 = vld [vmem:[%s1963 + $0x48] sm:$0xf]
    %v1983 = vld [vmem:[%s1963 + $0x4c] sm:$0xf]
    %v2004 = vunpack.c.l.b16 %v1964
    %v2005 = vunpack.c.l.b16 %v1965
    %v2006 = vunpack.c.l.b16 %v1966
    %v2007 = vunpack.c.l.b16 %v1967
    %v2008 = vunpack.c.l.b16 %v1968
    %v2009 = vunpack.c.l.b16 %v1969
    %v2010 = vunpack.c.l.b16 %v1970
    %v2011 = vunpack.c.l.b16 %v1971
    %v2012 = vunpack.c.l.b16 %v1972
    %v2013 = vunpack.c.l.b16 %v1973
    %v2014 = vunpack.c.l.b16 %v1974
    %v2015 = vunpack.c.l.b16 %v1975
    %v2016 = vunpack.c.l.b16 %v1976
    %v2017 = vunpack.c.l.b16 %v1977
    %v2018 = vunpack.c.l.b16 %v1978
    %v2019 = vunpack.c.l.b16 %v1979
    %v2020 = vunpack.c.l.b16 %v1980
    %v2021 = vunpack.c.l.b16 %v1981
    %v2022 = vunpack.c.l.b16 %v1982
    %v2023 = vunpack.c.l.b16 %v1983
    %v2024 = vpack.c.b16 %v2005, %v2004
    %v2025 = vpack.c.b16 %v2007, %v2006
    %v2026 = vpack.c.b16 %v2009, %v2008
    %v2027 = vpack.c.b16 %v2011, %v2010
    %v2028 = vpack.c.b16 %v2013, %v2012
    %v2029 = vpack.c.b16 %v2015, %v2014
    %v2030 = vpack.c.b16 %v2017, %v2016
    %v2031 = vpack.c.b16 %v2019, %v2018
    %v2032 = vpack.c.b16 %v2021, %v2020
    %v2033 = vpack.c.b16 %v2023, %v2022
    %2044 = vmatprep.subr.bf16.mxu0 0
    %2045 = vmatpush1.bf16.msra.mxu0 %v2031
    %2046 = vmatprep.subr.bf16.mxu0 0
    %2047 = vmatpush1.bf16.msra.mxu0 %v2030
    %2048 = vmatprep.subr.bf16.mxu0 0
    %2049 = vmatpush1.bf16.msra.mxu0 %v2029
    %2050 = vmatprep.subr.bf16.mxu0 0
    %2051 = vmatpush1.bf16.msra.mxu0 %v2028
    %2052 = vmatprep.subr.bf16.mxu0 0
    %2053 = vmatpush1.bf16.msra.mxu0 %v2027
    %2054 = vmatprep.subr.bf16.mxu0 0
    %2055 = vmatpush1.bf16.msra.mxu0 %v2026
    %2056 = vmatprep.subr.bf16.mxu0 0
    %2057 = vmatpush1.bf16.msra.mxu0 %v2025
    %2058 = vmatprep.subr.bf16.mxu0 0
    %2059 = vmatpush1.bf16.msra.mxu0 %v2024
    %2060 = vmatprep.subr.bf16.mxu0 0
    %2061 = vmatpush2.bf16.msra.mxu0 0
    %2062 = vmatprep.subr.bf16.mxu0 0
    %2063 = vmatpush2.bf16.msra.mxu0 0
    %2064 = vmatprep.subr.bf16.mxu0 0
    %2065 = vmatpush2.bf16.msra.mxu0 0
    %2066 = vmatprep.subr.bf16.mxu0 0
    %2067 = vmatpush2.bf16.msra.mxu0 0
    %2068 = vmatprep.subr.bf16.mxu0 0
    %2069 = vmatpush2.bf16.msra.mxu0 0
    %2070 = vmatprep.subr.bf16.mxu0 0
    %2071 = vmatpush2.bf16.msra.mxu0 0
    %2072 = vmatprep.subr.bf16.mxu0 0
    %2073 = vmatpush2.bf16.msra.mxu0 %v2033
    %2074 = vmatprep.subr.bf16.mxu0 0
    %2075 = vmatpush2.bf16.msra.mxu0 %v2032
    %2076 = vmatprep.mubr.bf16.mxu0 %v1910
    %2077 = vmatmul.mubr.bf16.gmra.mxu0 %v1826
    %v2078 = vpop.f32.mrf.mxu0
    %v2079 = vadd.f32 0.0, %v2078
    %v2080 = vpop.f32.mrf.mxu0
    %v2081 = vpop.f32.mrf.mxu0
    %v2082 = vadd.f32 0.0, %v2081
    %v2083 = vpop.f32.mrf.mxu0
    %2084 = vdwg.mxu0
    %v2085 = vpack.c.bf16 %v2082, %v2079
    %v2087 = vunpack.c.l.b16 %v2085
    %v2088 = vunpack.c.h.b16 %v2085
    %v2089 = vpack.c.b16 %v2087, %v2087
    %v2090 = vpack.c.b16 %v2088, %v2088
    %2093 = vst.msk [vmem:[#allocation3 + $0x30] sm:$0xf] %vm317, %v2089
    %2094 = vst.msk [vmem:[#allocation3 + $0x34] sm:$0xf] %vm317, %v2090
    %s2095 = scalar_lea.vmem %s0, 224
    %v2096 = vld [vmem:[%s2095] sm:$0xff]
    %v2097 = vld [vmem:[%s2095 + $0x8] sm:$0xff]
    %v2098 = vld [vmem:[%s2095 + $0x10] sm:$0xff]
    %v2099 = vld [vmem:[%s2095 + $0x18] sm:$0xff]
    %v2100 = vpack.c.bf16 %v2098, %v2096
    %v2101 = vpack.c.bf16 %v2099, %v2097
    %s2102 = scalar_lea.vmem [#allocation7], 560
    %v2103 = vld [vmem:[%s2102] sm:$0xf]
    %v2104 = vld [vmem:[%s2102 + $0x4] sm:$0xf]
    %v2105 = vld [vmem:[%s2102 + $0x8] sm:$0xf]
    %v2106 = vld [vmem:[%s2102 + $0xc] sm:$0xf]
    %v2107 = vld [vmem:[%s2102 + $0x10] sm:$0xf]
    %v2108 = vld [vmem:[%s2102 + $0x14] sm:$0xf]
    %v2109 = vld [vmem:[%s2102 + $0x18] sm:$0xf]
    %v2110 = vld [vmem:[%s2102 + $0x1c] sm:$0xf]
    %v2111 = vld [vmem:[%s2102 + $0x20] sm:$0xf]
    %v2112 = vld [vmem:[%s2102 + $0x24] sm:$0xf]
    %v2113 = vld [vmem:[%s2102 + $0x28] sm:$0xf]
    %v2114 = vld [vmem:[%s2102 + $0x2c] sm:$0xf]
    %v2115 = vld [vmem:[%s2102 + $0x30] sm:$0xf]
    %v2116 = vld [vmem:[%s2102 + $0x34] sm:$0xf]
    %v2117 = vld [vmem:[%s2102 + $0x38] sm:$0xf]
    %v2118 = vld [vmem:[%s2102 + $0x3c] sm:$0xf]
    %v2119 = vld [vmem:[%s2102 + $0x40] sm:$0xf]
    %v2120 = vld [vmem:[%s2102 + $0x44] sm:$0xf]
    %v2121 = vld [vmem:[%s2102 + $0x48] sm:$0xf]
    %v2122 = vld [vmem:[%s2102 + $0x4c] sm:$0xf]
    %v2143 = vunpack.c.l.b16 %v2103
    %v2144 = vunpack.c.l.b16 %v2104
    %v2145 = vunpack.c.l.b16 %v2105
    %v2146 = vunpack.c.l.b16 %v2106
    %v2147 = vunpack.c.l.b16 %v2107
    %v2148 = vunpack.c.l.b16 %v2108
    %v2149 = vunpack.c.l.b16 %v2109
    %v2150 = vunpack.c.l.b16 %v2110
    %v2151 = vunpack.c.l.b16 %v2111
    %v2152 = vunpack.c.l.b16 %v2112
    %v2153 = vunpack.c.l.b16 %v2113
    %v2154 = vunpack.c.l.b16 %v2114
    %v2155 = vunpack.c.l.b16 %v2115
    %v2156 = vunpack.c.l.b16 %v2116
    %v2157 = vunpack.c.l.b16 %v2117
    %v2158 = vunpack.c.l.b16 %v2118
    %v2159 = vunpack.c.l.b16 %v2119
    %v2160 = vunpack.c.l.b16 %v2120
    %v2161 = vunpack.c.l.b16 %v2121
    %v2162 = vunpack.c.l.b16 %v2122
    %v2163 = vpack.c.b16 %v2144, %v2143
    %v2164 = vpack.c.b16 %v2146, %v2145
    %v2165 = vpack.c.b16 %v2148, %v2147
    %v2166 = vpack.c.b16 %v2150, %v2149
    %v2167 = vpack.c.b16 %v2152, %v2151
    %v2168 = vpack.c.b16 %v2154, %v2153
    %v2169 = vpack.c.b16 %v2156, %v2155
    %v2170 = vpack.c.b16 %v2158, %v2157
    %v2171 = vpack.c.b16 %v2160, %v2159
    %v2172 = vpack.c.b16 %v2162, %v2161
    %v2184 = vsel %vm264, %v2101, 0
    %2186 = vmatprep.subr.bf16.mxu0 0
    %2187 = vmatpush1.bf16.msra.mxu0 %v2170
    %2188 = vmatprep.subr.bf16.mxu0 0
    %2189 = vmatpush1.bf16.msra.mxu0 %v2169
    %2190 = vmatprep.subr.bf16.mxu0 0
    %2191 = vmatpush1.bf16.msra.mxu0 %v2168
    %2192 = vmatprep.subr.bf16.mxu0 0
    %2193 = vmatpush1.bf16.msra.mxu0 %v2167
    %2194 = vmatprep.subr.bf16.mxu0 0
    %2195 = vmatpush1.bf16.msra.mxu0 %v2166
    %2196 = vmatprep.subr.bf16.mxu0 0
    %2197 = vmatpush1.bf16.msra.mxu0 %v2165
    %2198 = vmatprep.subr.bf16.mxu0 0
    %2199 = vmatpush1.bf16.msra.mxu0 %v2164
    %2200 = vmatprep.subr.bf16.mxu0 0
    %2201 = vmatpush1.bf16.msra.mxu0 %v2163
    %2202 = vmatprep.subr.bf16.mxu0 0
    %2203 = vmatpush2.bf16.msra.mxu0 0
    %2204 = vmatprep.subr.bf16.mxu0 0
    %2205 = vmatpush2.bf16.msra.mxu0 0
    %2206 = vmatprep.subr.bf16.mxu0 0
    %2207 = vmatpush2.bf16.msra.mxu0 0
    %2208 = vmatprep.subr.bf16.mxu0 0
    %2209 = vmatpush2.bf16.msra.mxu0 0
    %2210 = vmatprep.subr.bf16.mxu0 0
    %2211 = vmatpush2.bf16.msra.mxu0 0
    %2212 = vmatprep.subr.bf16.mxu0 0
    %2213 = vmatpush2.bf16.msra.mxu0 0
    %2214 = vmatprep.subr.bf16.mxu0 0
    %2215 = vmatpush2.bf16.msra.mxu0 %v2172
    %2216 = vmatprep.subr.bf16.mxu0 0
    %2217 = vmatpush2.bf16.msra.mxu0 %v2171
    %2218 = vmatprep.mubr.bf16.mxu0 %v2184
    %2219 = vmatmul.mubr.bf16.gmra.mxu0 %v2100
    %v2220 = vpop.f32.mrf.mxu0
    %v2221 = vadd.f32 0.0, %v2220
    %v2222 = vpop.f32.mrf.mxu0
    %v2223 = vpop.f32.mrf.mxu0
    %v2224 = vadd.f32 0.0, %v2223
    %v2225 = vpop.f32.mrf.mxu0
    %2226 = vdwg.mxu0
    %v2227 = vpack.c.bf16 %v2224, %v2221
    %v2229 = vunpack.c.l.b16 %v2227
    %v2230 = vunpack.c.h.b16 %v2227
    %v2231 = vpack.c.b16 %v2229, %v2229
    %v2232 = vpack.c.b16 %v2230, %v2230
    %2235 = vst.msk [vmem:[#allocation2 + $0x38] sm:$0xf] %vm317, %v2231
    %2236 = vst.msk [vmem:[#allocation2 + $0x3c] sm:$0xf] %vm317, %v2232
    %s2237 = scalar_lea.vmem [#allocation10], 560
    %v2238 = vld [vmem:[%s2237] sm:$0xf]
    %v2239 = vld [vmem:[%s2237 + $0x4] sm:$0xf]
    %v2240 = vld [vmem:[%s2237 + $0x8] sm:$0xf]
    %v2241 = vld [vmem:[%s2237 + $0xc] sm:$0xf]
    %v2242 = vld [vmem:[%s2237 + $0x10] sm:$0xf]
    %v2243 = vld [vmem:[%s2237 + $0x14] sm:$0xf]
    %v2244 = vld [vmem:[%s2237 + $0x18] sm:$0xf]
    %v2245 = vld [vmem:[%s2237 + $0x1c] sm:$0xf]
    %v2246 = vld [vmem:[%s2237 + $0x20] sm:$0xf]
    %v2247 = vld [vmem:[%s2237 + $0x24] sm:$0xf]
    %v2248 = vld [vmem:[%s2237 + $0x28] sm:$0xf]
    %v2249 = vld [vmem:[%s2237 + $0x2c] sm:$0xf]
    %v2250 = vld [vmem:[%s2237 + $0x30] sm:$0xf]
    %v2251 = vld [vmem:[%s2237 + $0x34] sm:$0xf]
    %v2252 = vld [vmem:[%s2237 + $0x38] sm:$0xf]
    %v2253 = vld [vmem:[%s2237 + $0x3c] sm:$0xf]
    %v2254 = vld [vmem:[%s2237 + $0x40] sm:$0xf]
    %v2255 = vld [vmem:[%s2237 + $0x44] sm:$0xf]
    %v2256 = vld [vmem:[%s2237 + $0x48] sm:$0xf]
    %v2257 = vld [vmem:[%s2237 + $0x4c] sm:$0xf]
    %v2278 = vunpack.c.l.b16 %v2238
    %v2279 = vunpack.c.l.b16 %v2239
    %v2280 = vunpack.c.l.b16 %v2240
    %v2281 = vunpack.c.l.b16 %v2241
    %v2282 = vunpack.c.l.b16 %v2242
    %v2283 = vunpack.c.l.b16 %v2243
    %v2284 = vunpack.c.l.b16 %v2244
    %v2285 = vunpack.c.l.b16 %v2245
    %v2286 = vunpack.c.l.b16 %v2246
    %v2287 = vunpack.c.l.b16 %v2247
    %v2288 = vunpack.c.l.b16 %v2248
    %v2289 = vunpack.c.l.b16 %v2249
    %v2290 = vunpack.c.l.b16 %v2250
    %v2291 = vunpack.c.l.b16 %v2251
    %v2292 = vunpack.c.l.b16 %v2252
    %v2293 = vunpack.c.l.b16 %v2253
    %v2294 = vunpack.c.l.b16 %v2254
    %v2295 = vunpack.c.l.b16 %v2255
    %v2296 = vunpack.c.l.b16 %v2256
    %v2297 = vunpack.c.l.b16 %v2257
    %v2298 = vpack.c.b16 %v2279, %v2278
    %v2299 = vpack.c.b16 %v2281, %v2280
    %v2300 = vpack.c.b16 %v2283, %v2282
    %v2301 = vpack.c.b16 %v2285, %v2284
    %v2302 = vpack.c.b16 %v2287, %v2286
    %v2303 = vpack.c.b16 %v2289, %v2288
    %v2304 = vpack.c.b16 %v2291, %v2290
    %v2305 = vpack.c.b16 %v2293, %v2292
    %v2306 = vpack.c.b16 %v2295, %v2294
    %v2307 = vpack.c.b16 %v2297, %v2296
    %2318 = vmatprep.subr.bf16.mxu0 0
    %2319 = vmatpush1.bf16.msra.mxu0 %v2305
    %2320 = vmatprep.subr.bf16.mxu0 0
    %2321 = vmatpush1.bf16.msra.mxu0 %v2304
    %2322 = vmatprep.subr.bf16.mxu0 0
    %2323 = vmatpush1.bf16.msra.mxu0 %v2303
    %2324 = vmatprep.subr.bf16.mxu0 0
    %2325 = vmatpush1.bf16.msra.mxu0 %v2302
    %2326 = vmatprep.subr.bf16.mxu0 0
    %2327 = vmatpush1.bf16.msra.mxu0 %v2301
    %2328 = vmatprep.subr.bf16.mxu0 0
    %2329 = vmatpush1.bf16.msra.mxu0 %v2300
    %2330 = vmatprep.subr.bf16.mxu0 0
    %2331 = vmatpush1.bf16.msra.mxu0 %v2299
    %2332 = vmatprep.subr.bf16.mxu0 0
    %2333 = vmatpush1.bf16.msra.mxu0 %v2298
    %2334 = vmatprep.subr.bf16.mxu0 0
    %2335 = vmatpush2.bf16.msra.mxu0 0
    %2336 = vmatprep.subr.bf16.mxu0 0
    %2337 = vmatpush2.bf16.msra.mxu0 0
    %2338 = vmatprep.subr.bf16.mxu0 0
    %2339 = vmatpush2.bf16.msra.mxu0 0
    %2340 = vmatprep.subr.bf16.mxu0 0
    %2341 = vmatpush2.bf16.msra.mxu0 0
    %2342 = vmatprep.subr.bf16.mxu0 0
    %2343 = vmatpush2.bf16.msra.mxu0 0
    %2344 = vmatprep.subr.bf16.mxu0 0
    %2345 = vmatpush2.bf16.msra.mxu0 0
    %2346 = vmatprep.subr.bf16.mxu0 0
    %2347 = vmatpush2.bf16.msra.mxu0 %v2307
    %2348 = vmatprep.subr.bf16.mxu0 0
    %2349 = vmatpush2.bf16.msra.mxu0 %v2306
    %2350 = vmatprep.mubr.bf16.mxu0 %v2184
    %2351 = vmatmul.mubr.bf16.gmra.mxu0 %v2100
    %v2352 = vpop.f32.mrf.mxu0
    %v2353 = vadd.f32 0.0, %v2352
    %v2354 = vpop.f32.mrf.mxu0
    %v2355 = vpop.f32.mrf.mxu0
    %v2356 = vadd.f32 0.0, %v2355
    %v2357 = vpop.f32.mrf.mxu0
    %2358 = vdwg.mxu0
    %v2359 = vpack.c.bf16 %v2356, %v2353
    %v2361 = vunpack.c.l.b16 %v2359
    %v2362 = vunpack.c.h.b16 %v2359
    %v2363 = vpack.c.b16 %v2361, %v2361
    %v2364 = vpack.c.b16 %v2362, %v2362
    %2367 = vst.msk [vmem:[#allocation3 + $0x38] sm:$0xf] %vm317, %v2363
    %2368 = vst.msk [vmem:[#allocation3 + $0x3c] sm:$0xf] %vm317, %v2364
    %s2369 = scalar_lea.vmem %s0, 256
    %v2370 = vld [vmem:[%s2369] sm:$0xff]
    %v2371 = vld [vmem:[%s2369 + $0x8] sm:$0xff]
    %v2372 = vld [vmem:[%s2369 + $0x10] sm:$0xff]
    %v2373 = vld [vmem:[%s2369 + $0x18] sm:$0xff]
    %v2374 = vpack.c.bf16 %v2372, %v2370
    %v2375 = vpack.c.bf16 %v2373, %v2371
    %s2376 = scalar_lea.vmem [#allocation7], 640
    %v2377 = vld [vmem:[%s2376] sm:$0xf]
    %v2378 = vld [vmem:[%s2376 + $0x4] sm:$0xf]
    %v2379 = vld [vmem:[%s2376 + $0x8] sm:$0xf]
    %v2380 = vld [vmem:[%s2376 + $0xc] sm:$0xf]
    %v2381 = vld [vmem:[%s2376 + $0x10] sm:$0xf]
    %v2382 = vld [vmem:[%s2376 + $0x14] sm:$0xf]
    %v2383 = vld [vmem:[%s2376 + $0x18] sm:$0xf]
    %v2384 = vld [vmem:[%s2376 + $0x1c] sm:$0xf]
    %v2385 = vld [vmem:[%s2376 + $0x20] sm:$0xf]
    %v2386 = vld [vmem:[%s2376 + $0x24] sm:$0xf]
    %v2387 = vld [vmem:[%s2376 + $0x28] sm:$0xf]
    %v2388 = vld [vmem:[%s2376 + $0x2c] sm:$0xf]
    %v2389 = vld [vmem:[%s2376 + $0x30] sm:$0xf]
    %v2390 = vld [vmem:[%s2376 + $0x34] sm:$0xf]
    %v2391 = vld [vmem:[%s2376 + $0x38] sm:$0xf]
    %v2392 = vld [vmem:[%s2376 + $0x3c] sm:$0xf]
    %v2393 = vld [vmem:[%s2376 + $0x40] sm:$0xf]
    %v2394 = vld [vmem:[%s2376 + $0x44] sm:$0xf]
    %v2395 = vld [vmem:[%s2376 + $0x48] sm:$0xf]
    %v2396 = vld [vmem:[%s2376 + $0x4c] sm:$0xf]
    %v2417 = vunpack.c.l.b16 %v2377
    %v2418 = vunpack.c.l.b16 %v2378
    %v2419 = vunpack.c.l.b16 %v2379
    %v2420 = vunpack.c.l.b16 %v2380
    %v2421 = vunpack.c.l.b16 %v2381
    %v2422 = vunpack.c.l.b16 %v2382
    %v2423 = vunpack.c.l.b16 %v2383
    %v2424 = vunpack.c.l.b16 %v2384
    %v2425 = vunpack.c.l.b16 %v2385
    %v2426 = vunpack.c.l.b16 %v2386
    %v2427 = vunpack.c.l.b16 %v2387
    %v2428 = vunpack.c.l.b16 %v2388
    %v2429 = vunpack.c.l.b16 %v2389
    %v2430 = vunpack.c.l.b16 %v2390
    %v2431 = vunpack.c.l.b16 %v2391
    %v2432 = vunpack.c.l.b16 %v2392
    %v2433 = vunpack.c.l.b16 %v2393
    %v2434 = vunpack.c.l.b16 %v2394
    %v2435 = vunpack.c.l.b16 %v2395
    %v2436 = vunpack.c.l.b16 %v2396
    %v2437 = vpack.c.b16 %v2418, %v2417
    %v2438 = vpack.c.b16 %v2420, %v2419
    %v2439 = vpack.c.b16 %v2422, %v2421
    %v2440 = vpack.c.b16 %v2424, %v2423
    %v2441 = vpack.c.b16 %v2426, %v2425
    %v2442 = vpack.c.b16 %v2428, %v2427
    %v2443 = vpack.c.b16 %v2430, %v2429
    %v2444 = vpack.c.b16 %v2432, %v2431
    %v2445 = vpack.c.b16 %v2434, %v2433
    %v2446 = vpack.c.b16 %v2436, %v2435
    %v2458 = vsel %vm264, %v2375, 0
    %2460 = vmatprep.subr.bf16.mxu0 0
    %2461 = vmatpush1.bf16.msra.mxu0 %v2444
    %2462 = vmatprep.subr.bf16.mxu0 0
    %2463 = vmatpush1.bf16.msra.mxu0 %v2443
    %2464 = vmatprep.subr.bf16.mxu0 0
    %2465 = vmatpush1.bf16.msra.mxu0 %v2442
    %2466 = vmatprep.subr.bf16.mxu0 0
    %2467 = vmatpush1.bf16.msra.mxu0 %v2441
    %2468 = vmatprep.subr.bf16.mxu0 0
    %2469 = vmatpush1.bf16.msra.mxu0 %v2440
    %2470 = vmatprep.subr.bf16.mxu0 0
    %2471 = vmatpush1.bf16.msra.mxu0 %v2439
    %2472 = vmatprep.subr.bf16.mxu0 0
    %2473 = vmatpush1.bf16.msra.mxu0 %v2438
    %2474 = vmatprep.subr.bf16.mxu0 0
    %2475 = vmatpush1.bf16.msra.mxu0 %v2437
    %2476 = vmatprep.subr.bf16.mxu0 0
    %2477 = vmatpush2.bf16.msra.mxu0 0
    %2478 = vmatprep.subr.bf16.mxu0 0
    %2479 = vmatpush2.bf16.msra.mxu0 0
    %2480 = vmatprep.subr.bf16.mxu0 0
    %2481 = vmatpush2.bf16.msra.mxu0 0
    %2482 = vmatprep.subr.bf16.mxu0 0
    %2483 = vmatpush2.bf16.msra.mxu0 0
    %2484 = vmatprep.subr.bf16.mxu0 0
    %2485 = vmatpush2.bf16.msra.mxu0 0
    %2486 = vmatprep.subr.bf16.mxu0 0
    %2487 = vmatpush2.bf16.msra.mxu0 0
    %2488 = vmatprep.subr.bf16.mxu0 0
    %2489 = vmatpush2.bf16.msra.mxu0 %v2446
    %2490 = vmatprep.subr.bf16.mxu0 0
    %2491 = vmatpush2.bf16.msra.mxu0 %v2445
    %2492 = vmatprep.mubr.bf16.mxu0 %v2458
    %2493 = vmatmul.mubr.bf16.gmra.mxu0 %v2374
    %v2494 = vpop.f32.mrf.mxu0
    %v2495 = vadd.f32 0.0, %v2494
    %v2496 = vpop.f32.mrf.mxu0
    %v2497 = vpop.f32.mrf.mxu0
    %v2498 = vadd.f32 0.0, %v2497
    %v2499 = vpop.f32.mrf.mxu0
    %2500 = vdwg.mxu0
    %v2501 = vpack.c.bf16 %v2498, %v2495
    %v2503 = vunpack.c.l.b16 %v2501
    %v2504 = vunpack.c.h.b16 %v2501
    %v2505 = vpack.c.b16 %v2503, %v2503
    %v2506 = vpack.c.b16 %v2504, %v2504
    %2509 = vst.msk [vmem:[#allocation2 + $0x40] sm:$0xf] %vm317, %v2505
    %2510 = vst.msk [vmem:[#allocation2 + $0x44] sm:$0xf] %vm317, %v2506
    %s2511 = scalar_lea.vmem [#allocation10], 640
    %v2512 = vld [vmem:[%s2511] sm:$0xf]
    %v2513 = vld [vmem:[%s2511 + $0x4] sm:$0xf]
    %v2514 = vld [vmem:[%s2511 + $0x8] sm:$0xf]
    %v2515 = vld [vmem:[%s2511 + $0xc] sm:$0xf]
    %v2516 = vld [vmem:[%s2511 + $0x10] sm:$0xf]
    %v2517 = vld [vmem:[%s2511 + $0x14] sm:$0xf]
    %v2518 = vld [vmem:[%s2511 + $0x18] sm:$0xf]
    %v2519 = vld [vmem:[%s2511 + $0x1c] sm:$0xf]
    %v2520 = vld [vmem:[%s2511 + $0x20] sm:$0xf]
    %v2521 = vld [vmem:[%s2511 + $0x24] sm:$0xf]
    %v2522 = vld [vmem:[%s2511 + $0x28] sm:$0xf]
    %v2523 = vld [vmem:[%s2511 + $0x2c] sm:$0xf]
    %v2524 = vld [vmem:[%s2511 + $0x30] sm:$0xf]
    %v2525 = vld [vmem:[%s2511 + $0x34] sm:$0xf]
    %v2526 = vld [vmem:[%s2511 + $0x38] sm:$0xf]
    %v2527 = vld [vmem:[%s2511 + $0x3c] sm:$0xf]
    %v2528 = vld [vmem:[%s2511 + $0x40] sm:$0xf]
    %v2529 = vld [vmem:[%s2511 + $0x44] sm:$0xf]
    %v2530 = vld [vmem:[%s2511 + $0x48] sm:$0xf]
    %v2531 = vld [vmem:[%s2511 + $0x4c] sm:$0xf]
    %v2552 = vunpack.c.l.b16 %v2512
    %v2553 = vunpack.c.l.b16 %v2513
    %v2554 = vunpack.c.l.b16 %v2514
    %v2555 = vunpack.c.l.b16 %v2515
    %v2556 = vunpack.c.l.b16 %v2516
    %v2557 = vunpack.c.l.b16 %v2517
    %v2558 = vunpack.c.l.b16 %v2518
    %v2559 = vunpack.c.l.b16 %v2519
    %v2560 = vunpack.c.l.b16 %v2520
    %v2561 = vunpack.c.l.b16 %v2521
    %v2562 = vunpack.c.l.b16 %v2522
    %v2563 = vunpack.c.l.b16 %v2523
    %v2564 = vunpack.c.l.b16 %v2524
    %v2565 = vunpack.c.l.b16 %v2525
    %v2566 = vunpack.c.l.b16 %v2526
    %v2567 = vunpack.c.l.b16 %v2527
    %v2568 = vunpack.c.l.b16 %v2528
    %v2569 = vunpack.c.l.b16 %v2529
    %v2570 = vunpack.c.l.b16 %v2530
    %v2571 = vunpack.c.l.b16 %v2531
    %v2572 = vpack.c.b16 %v2553, %v2552
    %v2573 = vpack.c.b16 %v2555, %v2554
    %v2574 = vpack.c.b16 %v2557, %v2556
    %v2575 = vpack.c.b16 %v2559, %v2558
    %v2576 = vpack.c.b16 %v2561, %v2560
    %v2577 = vpack.c.b16 %v2563, %v2562
    %v2578 = vpack.c.b16 %v2565, %v2564
    %v2579 = vpack.c.b16 %v2567, %v2566
    %v2580 = vpack.c.b16 %v2569, %v2568
    %v2581 = vpack.c.b16 %v2571, %v2570
    %2592 = vmatprep.subr.bf16.mxu0 0
    %2593 = vmatpush1.bf16.msra.mxu0 %v2579
    %2594 = vmatprep.subr.bf16.mxu0 0
    %2595 = vmatpush1.bf16.msra.mxu0 %v2578
    %2596 = vmatprep.subr.bf16.mxu0 0
    %2597 = vmatpush1.bf16.msra.mxu0 %v2577
    %2598 = vmatprep.subr.bf16.mxu0 0
    %2599 = vmatpush1.bf16.msra.mxu0 %v2576
    %2600 = vmatprep.subr.bf16.mxu0 0
    %2601 = vmatpush1.bf16.msra.mxu0 %v2575
    %2602 = vmatprep.subr.bf16.mxu0 0
    %2603 = vmatpush1.bf16.msra.mxu0 %v2574
    %2604 = vmatprep.subr.bf16.mxu0 0
    %2605 = vmatpush1.bf16.msra.mxu0 %v2573
    %2606 = vmatprep.subr.bf16.mxu0 0
    %2607 = vmatpush1.bf16.msra.mxu0 %v2572
    %2608 = vmatprep.subr.bf16.mxu0 0
    %2609 = vmatpush2.bf16.msra.mxu0 0
    %2610 = vmatprep.subr.bf16.mxu0 0
    %2611 = vmatpush2.bf16.msra.mxu0 0
    %2612 = vmatprep.subr.bf16.mxu0 0
    %2613 = vmatpush2.bf16.msra.mxu0 0
    %2614 = vmatprep.subr.bf16.mxu0 0
    %2615 = vmatpush2.bf16.msra.mxu0 0
    %2616 = vmatprep.subr.bf16.mxu0 0
    %2617 = vmatpush2.bf16.msra.mxu0 0
    %2618 = vmatprep.subr.bf16.mxu0 0
    %2619 = vmatpush2.bf16.msra.mxu0 0
    %2620 = vmatprep.subr.bf16.mxu0 0
    %2621 = vmatpush2.bf16.msra.mxu0 %v2581
    %2622 = vmatprep.subr.bf16.mxu0 0
    %2623 = vmatpush2.bf16.msra.mxu0 %v2580
    %2624 = vmatprep.mubr.bf16.mxu0 %v2458
    %2625 = vmatmul.mubr.bf16.gmra.mxu0 %v2374
    %v2626 = vpop.f32.mrf.mxu0
    %v2627 = vadd.f32 0.0, %v2626
    %v2628 = vpop.f32.mrf.mxu0
    %v2629 = vpop.f32.mrf.mxu0
    %v2630 = vadd.f32 0.0, %v2629
    %v2631 = vpop.f32.mrf.mxu0
    %2632 = vdwg.mxu0
    %v2633 = vpack.c.bf16 %v2630, %v2627
    %v2635 = vunpack.c.l.b16 %v2633
    %v2636 = vunpack.c.h.b16 %v2633
    %v2637 = vpack.c.b16 %v2635, %v2635
    %v2638 = vpack.c.b16 %v2636, %v2636
    %2641 = vst.msk [vmem:[#allocation3 + $0x40] sm:$0xf] %vm317, %v2637
    %2642 = vst.msk [vmem:[#allocation3 + $0x44] sm:$0xf] %vm317, %v2638
    %v2643 = vld [vmem:[%s3] sm:$0xff]
    %v2644 = vld [vmem:[%s3 + $0x8] sm:$0xff]
    %v2645 = vld [vmem:[%s3 + $0x10] sm:$0xff]
    %v2646 = vld [vmem:[%s3 + $0x18] sm:$0xff]
    %v2647 = vld [vmem:[%s3 + $0x20] sm:$0xff]
    %v2648 = vld [vmem:[%s3 + $0x28] sm:$0xff]
    %v2649 = vld [vmem:[%s3 + $0x30] sm:$0xff]
    %v2650 = vld [vmem:[%s3 + $0x38] sm:$0xff]
    %v2651 = vld [vmem:[%s3 + $0x40] sm:$0xff]
    %v2652 = vld [vmem:[%s3 + $0x48] sm:$0xff]
    %v2653 = vld [vmem:[%s3 + $0x50] sm:$0xff]
    %v2654 = vld [vmem:[%s3 + $0x58] sm:$0xff]
    %v2655 = vld [vmem:[%s3 + $0x60] sm:$0xff]
    %v2656 = vld [vmem:[%s3 + $0x68] sm:$0xff]
    %v2657 = vld [vmem:[%s3 + $0x70] sm:$0xff]
    %v2658 = vld [vmem:[%s3 + $0x78] sm:$0xff]
    %v2659 = vld [vmem:[#allocation2] sm:$0xf]
    %v2660 = vld [vmem:[#allocation2 + $0x4] sm:$0xf]
    %v2661 = vld [vmem:[#allocation2 + $0x8] sm:$0xf]
    %v2662 = vld [vmem:[#allocation2 + $0xc] sm:$0xf]
    %v2663 = vld [vmem:[#allocation2 + $0x10] sm:$0xf]
    %v2664 = vld [vmem:[#allocation2 + $0x14] sm:$0xf]
    %v2665 = vld [vmem:[#allocation2 + $0x18] sm:$0xf]
    %v2666 = vld [vmem:[#allocation2 + $0x1c] sm:$0xf]
    %v2667 = vld [vmem:[#allocation2 + $0x20] sm:$0xf]
    %v2668 = vld [vmem:[#allocation2 + $0x24] sm:$0xf]
    %v2669 = vld [vmem:[#allocation2 + $0x28] sm:$0xf]
    %v2670 = vld [vmem:[#allocation2 + $0x2c] sm:$0xf]
    %v2671 = vld [vmem:[#allocation2 + $0x30] sm:$0xf]
    %v2672 = vld [vmem:[#allocation2 + $0x34] sm:$0xf]
    %v2673 = vld [vmem:[#allocation2 + $0x38] sm:$0xf]
    %v2674 = vld [vmem:[#allocation2 + $0x3c] sm:$0xf]
    %v2675 = vld [vmem:[#allocation2 + $0x40] sm:$0xf]
    %v2676 = vld [vmem:[#allocation2 + $0x44] sm:$0xf]
    %v2677 = vld [vmem:[%s4] sm:$0xff]
    %v2678 = vld [vmem:[%s4 + $0x8] sm:$0xff]
    %v2679 = vld [vmem:[%s4 + $0x10] sm:$0xff]
    %v2680 = vld [vmem:[%s4 + $0x18] sm:$0xff]
    %v2681 = vld [vmem:[%s4 + $0x20] sm:$0xff]
    %v2682 = vld [vmem:[%s4 + $0x28] sm:$0xff]
    %v2683 = vld [vmem:[%s4 + $0x30] sm:$0xff]
    %v2684 = vld [vmem:[%s4 + $0x38] sm:$0xff]
    %v2685 = vld [vmem:[%s4 + $0x40] sm:$0xff]
    %v2686 = vld [vmem:[%s4 + $0x48] sm:$0xff]
    %v2687 = vld [vmem:[%s4 + $0x50] sm:$0xff]
    %v2688 = vld [vmem:[%s4 + $0x58] sm:$0xff]
    %v2689 = vld [vmem:[%s4 + $0x60] sm:$0xff]
    %v2690 = vld [vmem:[%s4 + $0x68] sm:$0xff]
    %v2691 = vld [vmem:[%s4 + $0x70] sm:$0xff]
    %v2692 = vld [vmem:[%s4 + $0x78] sm:$0xff]
    %v2693 = vld [vmem:[#allocation3] sm:$0xf]
    %v2694 = vld [vmem:[#allocation3 + $0x4] sm:$0xf]
    %v2695 = vld [vmem:[#allocation3 + $0x8] sm:$0xf]
    %v2696 = vld [vmem:[#allocation3 + $0xc] sm:$0xf]
    %v2697 = vld [vmem:[#allocation3 + $0x10] sm:$0xf]
    %v2698 = vld [vmem:[#allocation3 + $0x14] sm:$0xf]
    %v2699 = vld [vmem:[#allocation3 + $0x18] sm:$0xf]
    %v2700 = vld [vmem:[#allocation3 + $0x1c] sm:$0xf]
    %v2701 = vld [vmem:[#allocation3 + $0x20] sm:$0xf]
    %v2702 = vld [vmem:[#allocation3 + $0x24] sm:$0xf]
    %v2703 = vld [vmem:[#allocation3 + $0x28] sm:$0xf]
    %v2704 = vld [vmem:[#allocation3 + $0x2c] sm:$0xf]
    %v2705 = vld [vmem:[#allocation3 + $0x30] sm:$0xf]
    %v2706 = vld [vmem:[#allocation3 + $0x34] sm:$0xf]
    %v2707 = vld [vmem:[#allocation3 + $0x38] sm:$0xf]
    %v2708 = vld [vmem:[#allocation3 + $0x3c] sm:$0xf]
    %v2709 = vld [vmem:[#allocation3 + $0x40] sm:$0xf]
    %v2710 = vld [vmem:[#allocation3 + $0x44] sm:$0xf]
    %v2727 = vunpack.c.l.b16 %v2677
    %v2728 = vunpack.c.h.b16 %v2677
    %v2729 = vunpack.c.l.b16 %v2678
    %v2730 = vunpack.c.h.b16 %v2678
    %v2731 = vunpack.c.l.b16 %v2679
    %v2732 = vunpack.c.h.b16 %v2679
    %v2733 = vunpack.c.l.b16 %v2680
    %v2734 = vunpack.c.h.b16 %v2680
    %v2735 = vunpack.c.l.b16 %v2681
    %v2736 = vunpack.c.h.b16 %v2681
    %v2737 = vunpack.c.l.b16 %v2682
    %v2738 = vunpack.c.h.b16 %v2682
    %v2739 = vunpack.c.l.b16 %v2683
    %v2740 = vunpack.c.h.b16 %v2683
    %v2741 = vunpack.c.l.b16 %v2684
    %v2742 = vunpack.c.h.b16 %v2684
    %v2743 = vunpack.c.l.b16 %v2685
    %v2744 = vunpack.c.h.b16 %v2685
    %v2745 = vunpack.c.l.b16 %v2686
    %v2746 = vunpack.c.h.b16 %v2686
    %v2747 = vunpack.c.l.b16 %v2687
    %v2748 = vunpack.c.h.b16 %v2687
    %v2749 = vunpack.c.l.b16 %v2688
    %v2750 = vunpack.c.h.b16 %v2688
    %v2751 = vunpack.c.l.b16 %v2689
    %v2752 = vunpack.c.h.b16 %v2689
    %v2753 = vunpack.c.l.b16 %v2690
    %v2754 = vunpack.c.h.b16 %v2690
    %v2755 = vunpack.c.l.b16 %v2691
    %v2756 = vunpack.c.h.b16 %v2691
    %v2757 = vunpack.c.l.b16 %v2692
    %v2758 = vunpack.c.h.b16 %v2692
    %v2759 = vpack.c.b16 %v2729, %v2727
    %v2760 = vpack.c.b16 %v2730, %v2728
    %v2761 = vpack.c.b16 %v2733, %v2731
    %v2762 = vpack.c.b16 %v2734, %v2732
    %v2763 = vpack.c.b16 %v2737, %v2735
    %v2764 = vpack.c.b16 %v2738, %v2736
    %v2765 = vpack.c.b16 %v2741, %v2739
    %v2766 = vpack.c.b16 %v2742, %v2740
    %v2767 = vpack.c.b16 %v2745, %v2743
    %v2768 = vpack.c.b16 %v2746, %v2744
    %v2769 = vpack.c.b16 %v2749, %v2747
    %v2770 = vpack.c.b16 %v2750, %v2748
    %v2771 = vpack.c.b16 %v2753, %v2751
    %v2772 = vpack.c.b16 %v2754, %v2752
    %v2773 = vpack.c.b16 %v2757, %v2755
    %v2774 = vpack.c.b16 %v2758, %v2756
    %v2801 = vunpack.c.l.b16 %v2693
    %v2802 = vunpack.c.l.b16 %v2694
    %v2803 = vunpack.c.l.b16 %v2695
    %v2804 = vunpack.c.l.b16 %v2696
    %v2805 = vunpack.c.l.b16 %v2697
    %v2806 = vunpack.c.l.b16 %v2698
    %v2807 = vunpack.c.l.b16 %v2699
    %v2808 = vunpack.c.l.b16 %v2700
    %v2809 = vunpack.c.l.b16 %v2701
    %v2810 = vunpack.c.l.b16 %v2702
    %v2811 = vunpack.c.l.b16 %v2703
    %v2812 = vunpack.c.l.b16 %v2704
    %v2813 = vunpack.c.l.b16 %v2705
    %v2814 = vunpack.c.l.b16 %v2706
    %v2815 = vunpack.c.l.b16 %v2707
    %v2816 = vunpack.c.l.b16 %v2708
    %v2817 = vunpack.c.l.b16 %v2709
    %v2818 = vunpack.c.l.b16 %v2710
    %v2819 = vpack.c.b16 %v2802, %v2801
    %v2820 = vpack.c.b16 %v2804, %v2803
    %v2821 = vpack.c.b16 %v2806, %v2805
    %v2822 = vpack.c.b16 %v2808, %v2807
    %v2823 = vpack.c.b16 %v2810, %v2809
    %v2824 = vpack.c.b16 %v2812, %v2811
    %v2825 = vpack.c.b16 %v2814, %v2813
    %v2826 = vpack.c.b16 %v2816, %v2815
    %v2827 = vpack.c.b16 %v2818, %v2817
    %vm2837 = vcmask 130048
    %v2839 = vsel %vm2837, %v2760, 0
    %v2842 = vsel %vm2837, %v2762, 0
    %v2845 = vsel %vm2837, %v2764, 0
    %v2848 = vsel %vm2837, %v2766, 0
    %v2851 = vsel %vm2837, %v2768, 0
    %v2854 = vsel %vm2837, %v2770, 0
    %v2857 = vsel %vm2837, %v2772, 0
    %v2860 = vsel %vm2837, %v2774, 0
    %2862 = vmatprep.subr.bf16.mxu0 0
    %2863 = vmatpush1.bf16.msra.mxu0 %v2826
    %2864 = vmatprep.subr.bf16.mxu0 0
    %2865 = vmatpush1.bf16.msra.mxu0 %v2825
    %2866 = vmatprep.subr.bf16.mxu0 0
    %2867 = vmatpush1.bf16.msra.mxu0 %v2824
    %2868 = vmatprep.subr.bf16.mxu0 0
    %2869 = vmatpush1.bf16.msra.mxu0 %v2823
    %2870 = vmatprep.subr.bf16.mxu0 0
    %2871 = vmatpush1.bf16.msra.mxu0 %v2822
    %2872 = vmatprep.subr.bf16.mxu0 0
    %2873 = vmatpush1.bf16.msra.mxu0 %v2821
    %2874 = vmatprep.subr.bf16.mxu0 0
    %2875 = vmatpush1.bf16.msra.mxu0 %v2820
    %2876 = vmatprep.subr.bf16.mxu0 0
    %2877 = vmatpush1.bf16.msra.mxu0 %v2819
    %2878 = vmatprep.subr.bf16.mxu0 0
    %2879 = vmatpush2.bf16.msra.mxu0 0
    %2880 = vmatprep.subr.bf16.mxu0 0
    %2881 = vmatpush2.bf16.msra.mxu0 0
    %2882 = vmatprep.subr.bf16.mxu0 0
    %2883 = vmatpush2.bf16.msra.mxu0 0
    %2884 = vmatprep.subr.bf16.mxu0 0
    %2885 = vmatpush2.bf16.msra.mxu0 0
    %2886 = vmatprep.subr.bf16.mxu0 0
    %2887 = vmatpush2.bf16.msra.mxu0 0
    %2888 = vmatprep.subr.bf16.mxu0 0
    %2889 = vmatpush2.bf16.msra.mxu0 0
    %2890 = vmatprep.subr.bf16.mxu0 0
    %2891 = vmatpush2.bf16.msra.mxu0 0
    %2892 = vmatprep.subr.bf16.mxu0 0
    %2893 = vmatpush2.bf16.msra.mxu0 %v2827
    %2894 = vmatprep.mubr.bf16.mxu0 %v2839
    %2895 = vmatmul.mubr.bf16.gmra.mxu0 %v2759
    %v2896 = vpop.f32.mrf.mxu0
    %v2897 = vadd.f32 0.0, %v2896
    %v2898 = vpop.f32.mrf.mxu0
    %v2899 = vpop.f32.mrf.mxu0
    %v2900 = vadd.f32 0.0, %v2899
    %v2901 = vpop.f32.mrf.mxu0
    %2902 = vmatprep.mubr.bf16.mxu0 %v2842
    %2903 = vmatmul.mubr.bf16.gmra.mxu0 %v2761
    %v2904 = vpop.f32.mrf.mxu0
    %v2905 = vadd.f32 0.0, %v2904
    %v2906 = vpop.f32.mrf.mxu0
    %v2907 = vpop.f32.mrf.mxu0
    %v2908 = vadd.f32 0.0, %v2907
    %v2909 = vpop.f32.mrf.mxu0
    %2910 = vmatprep.mubr.bf16.mxu0 %v2845
    %2911 = vmatmul.mubr.bf16.gmra.mxu0 %v2763
    %v2912 = vpop.f32.mrf.mxu0
    %v2913 = vadd.f32 0.0, %v2912
    %v2914 = vpop.f32.mrf.mxu0
    %v2915 = vpop.f32.mrf.mxu0
    %v2916 = vadd.f32 0.0, %v2915
    %v2917 = vpop.f32.mrf.mxu0
    %2918 = vmatprep.mubr.bf16.mxu0 %v2848
    %2919 = vmatmul.mubr.bf16.gmra.mxu0 %v2765
    %v2920 = vpop.f32.mrf.mxu0
    %v2921 = vadd.f32 0.0, %v2920
    %v2922 = vpop.f32.mrf.mxu0
    %v2923 = vpop.f32.mrf.mxu0
    %v2924 = vadd.f32 0.0, %v2923
    %v2925 = vpop.f32.mrf.mxu0
    %2926 = vmatprep.mubr.bf16.mxu0 %v2851
    %2927 = vmatmul.mubr.bf16.gmra.mxu0 %v2767
    %v2928 = vpop.f32.mrf.mxu0
    %v2929 = vadd.f32 0.0, %v2928
    %v2930 = vpop.f32.mrf.mxu0
    %v2931 = vpop.f32.mrf.mxu0
    %v2932 = vadd.f32 0.0, %v2931
    %v2933 = vpop.f32.mrf.mxu0
    %2934 = vmatprep.mubr.bf16.mxu0 %v2854
    %2935 = vmatmul.mubr.bf16.gmra.mxu0 %v2769
    %v2936 = vpop.f32.mrf.mxu0
    %v2937 = vadd.f32 0.0, %v2936
    %v2938 = vpop.f32.mrf.mxu0
    %v2939 = vpop.f32.mrf.mxu0
    %v2940 = vadd.f32 0.0, %v2939
    %v2941 = vpop.f32.mrf.mxu0
    %2942 = vmatprep.mubr.bf16.mxu0 %v2857
    %2943 = vmatmul.mubr.bf16.gmra.mxu0 %v2771
    %v2944 = vpop.f32.mrf.mxu0
    %v2945 = vadd.f32 0.0, %v2944
    %v2946 = vpop.f32.mrf.mxu0
    %v2947 = vpop.f32.mrf.mxu0
    %v2948 = vadd.f32 0.0, %v2947
    %v2949 = vpop.f32.mrf.mxu0
    %2950 = vmatprep.mubr.bf16.mxu0 %v2860
    %2951 = vmatmul.mubr.bf16.gmra.mxu0 %v2773
    %v2952 = vpop.f32.mrf.mxu0
    %v2953 = vadd.f32 0.0, %v2952
    %v2954 = vpop.f32.mrf.mxu0
    %v2955 = vpop.f32.mrf.mxu0
    %v2956 = vadd.f32 0.0, %v2955
    %v2957 = vpop.f32.mrf.mxu0
    %2958 = vdwg.mxu0
    %v2975 = vunpack.c.l.b16 %v2643
    %v2976 = vunpack.c.h.b16 %v2643
    %v2977 = vunpack.c.l.b16 %v2644
    %v2978 = vunpack.c.h.b16 %v2644
    %v2979 = vunpack.c.l.b16 %v2645
    %v2980 = vunpack.c.h.b16 %v2645
    %v2981 = vunpack.c.l.b16 %v2646
    %v2982 = vunpack.c.h.b16 %v2646
    %v2983 = vunpack.c.l.b16 %v2647
    %v2984 = vunpack.c.h.b16 %v2647
    %v2985 = vunpack.c.l.b16 %v2648
    %v2986 = vunpack.c.h.b16 %v2648
    %v2987 = vunpack.c.l.b16 %v2649
    %v2988 = vunpack.c.h.b16 %v2649
    %v2989 = vunpack.c.l.b16 %v2650
    %v2990 = vunpack.c.h.b16 %v2650
    %v2991 = vunpack.c.l.b16 %v2651
    %v2992 = vunpack.c.h.b16 %v2651
    %v2993 = vunpack.c.l.b16 %v2652
    %v2994 = vunpack.c.h.b16 %v2652
    %v2995 = vunpack.c.l.b16 %v2653
    %v2996 = vunpack.c.h.b16 %v2653
    %v2997 = vunpack.c.l.b16 %v2654
    %v2998 = vunpack.c.h.b16 %v2654
    %v2999 = vunpack.c.l.b16 %v2655
    %v3000 = vunpack.c.h.b16 %v2655
    %v3001 = vunpack.c.l.b16 %v2656
    %v3002 = vunpack.c.h.b16 %v2656
    %v3003 = vunpack.c.l.b16 %v2657
    %v3004 = vunpack.c.h.b16 %v2657
    %v3005 = vunpack.c.l.b16 %v2658
    %v3006 = vunpack.c.h.b16 %v2658
    %v3007 = vpack.c.b16 %v2977, %v2975
    %v3008 = vpack.c.b16 %v2978, %v2976
    %v3009 = vpack.c.b16 %v2981, %v2979
    %v3010 = vpack.c.b16 %v2982, %v2980
    %v3011 = vpack.c.b16 %v2985, %v2983
    %v3012 = vpack.c.b16 %v2986, %v2984
    %v3013 = vpack.c.b16 %v2989, %v2987
    %v3014 = vpack.c.b16 %v2990, %v2988
    %v3015 = vpack.c.b16 %v2993, %v2991
    %v3016 = vpack.c.b16 %v2994, %v2992
    %v3017 = vpack.c.b16 %v2997, %v2995
    %v3018 = vpack.c.b16 %v2998, %v2996
    %v3019 = vpack.c.b16 %v3001, %v2999
    %v3020 = vpack.c.b16 %v3002, %v3000
    %v3021 = vpack.c.b16 %v3005, %v3003
    %v3022 = vpack.c.b16 %v3006, %v3004
    %v3049 = vunpack.c.l.b16 %v2659
    %v3050 = vunpack.c.l.b16 %v2660
    %v3051 = vunpack.c.l.b16 %v2661
    %v3052 = vunpack.c.l.b16 %v2662
    %v3053 = vunpack.c.l.b16 %v2663
    %v3054 = vunpack.c.l.b16 %v2664
    %v3055 = vunpack.c.l.b16 %v2665
    %v3056 = vunpack.c.l.b16 %v2666
    %v3057 = vunpack.c.l.b16 %v2667
    %v3058 = vunpack.c.l.b16 %v2668
    %v3059 = vunpack.c.l.b16 %v2669
    %v3060 = vunpack.c.l.b16 %v2670
    %v3061 = vunpack.c.l.b16 %v2671
    %v3062 = vunpack.c.l.b16 %v2672
    %v3063 = vunpack.c.l.b16 %v2673
    %v3064 = vunpack.c.l.b16 %v2674
    %v3065 = vunpack.c.l.b16 %v2675
    %v3066 = vunpack.c.l.b16 %v2676
    %v3067 = vpack.c.b16 %v3050, %v3049
    %v3068 = vpack.c.b16 %v3052, %v3051
    %v3069 = vpack.c.b16 %v3054, %v3053
    %v3070 = vpack.c.b16 %v3056, %v3055
    %v3071 = vpack.c.b16 %v3058, %v3057
    %v3072 = vpack.c.b16 %v3060, %v3059
    %v3073 = vpack.c.b16 %v3062, %v3061
    %v3074 = vpack.c.b16 %v3064, %v3063
    %v3075 = vpack.c.b16 %v3066, %v3065
    %v3086 = vsel %vm2837, %v3008, 0
    %v3089 = vsel %vm2837, %v3010, 0
    %v3092 = vsel %vm2837, %v3012, 0
    %v3095 = vsel %vm2837, %v3014, 0
    %v3098 = vsel %vm2837, %v3016, 0
    %v3101 = vsel %vm2837, %v3018, 0
    %v3104 = vsel %vm2837, %v3020, 0
    %v3107 = vsel %vm2837, %v3022, 0
    %3109 = vmatprep.subr.bf16.mxu0 0
    %3110 = vmatpush1.bf16.msra.mxu0 %v3074
    %3111 = vmatprep.subr.bf16.mxu0 0
    %3112 = vmatpush1.bf16.msra.mxu0 %v3073
    %3113 = vmatprep.subr.bf16.mxu0 0
    %3114 = vmatpush1.bf16.msra.mxu0 %v3072
    %3115 = vmatprep.subr.bf16.mxu0 0
    %3116 = vmatpush1.bf16.msra.mxu0 %v3071
    %3117 = vmatprep.subr.bf16.mxu0 0
    %3118 = vmatpush1.bf16.msra.mxu0 %v3070
    %3119 = vmatprep.subr.bf16.mxu0 0
    %3120 = vmatpush1.bf16.msra.mxu0 %v3069
    %3121 = vmatprep.subr.bf16.mxu0 0
    %3122 = vmatpush1.bf16.msra.mxu0 %v3068
    %3123 = vmatprep.subr.bf16.mxu0 0
    %3124 = vmatpush1.bf16.msra.mxu0 %v3067
    %3125 = vmatprep.subr.bf16.mxu0 0
    %3126 = vmatpush2.bf16.msra.mxu0 0
    %3127 = vmatprep.subr.bf16.mxu0 0
    %3128 = vmatpush2.bf16.msra.mxu0 0
    %3129 = vmatprep.subr.bf16.mxu0 0
    %3130 = vmatpush2.bf16.msra.mxu0 0
    %3131 = vmatprep.subr.bf16.mxu0 0
    %3132 = vmatpush2.bf16.msra.mxu0 0
    %3133 = vmatprep.subr.bf16.mxu0 0
    %3134 = vmatpush2.bf16.msra.mxu0 0
    %3135 = vmatprep.subr.bf16.mxu0 0
    %3136 = vmatpush2.bf16.msra.mxu0 0
    %3137 = vmatprep.subr.bf16.mxu0 0
    %3138 = vmatpush2.bf16.msra.mxu0 0
    %3139 = vmatprep.subr.bf16.mxu0 0
    %3140 = vmatpush2.bf16.msra.mxu0 %v3075
    %3141 = vmatprep.mubr.bf16.mxu0 %v3086
    %3142 = vmatmul.mubr.bf16.gmra.mxu0 %v3007
    %v3143 = vpop.f32.mrf.mxu0
    %v3144 = vadd.f32 %v2897, %v3143
    %v3145 = vpop.f32.mrf.mxu0
    %v3146 = vpop.f32.mrf.mxu0
    %v3147 = vadd.f32 %v2900, %v3146
    %v3148 = vpop.f32.mrf.mxu0
    %3149 = vmatprep.mubr.bf16.mxu0 %v3089
    %3150 = vmatmul.mubr.bf16.gmra.mxu0 %v3009
    %v3151 = vpop.f32.mrf.mxu0
    %v3152 = vadd.f32 %v2905, %v3151
    %v3153 = vpop.f32.mrf.mxu0
    %v3154 = vpop.f32.mrf.mxu0
    %v3155 = vadd.f32 %v2908, %v3154
    %v3156 = vpop.f32.mrf.mxu0
    %3157 = vmatprep.mubr.bf16.mxu0 %v3092
    %3158 = vmatmul.mubr.bf16.gmra.mxu0 %v3011
    %v3159 = vpop.f32.mrf.mxu0
    %v3160 = vadd.f32 %v2913, %v3159
    %v3161 = vpop.f32.mrf.mxu0
    %v3162 = vpop.f32.mrf.mxu0
    %v3163 = vadd.f32 %v2916, %v3162
    %v3164 = vpop.f32.mrf.mxu0
    %3165 = vmatprep.mubr.bf16.mxu0 %v3095
    %3166 = vmatmul.mubr.bf16.gmra.mxu0 %v3013
    %v3167 = vpop.f32.mrf.mxu0
    %v3168 = vadd.f32 %v2921, %v3167
    %v3169 = vpop.f32.mrf.mxu0
    %v3170 = vpop.f32.mrf.mxu0
    %v3171 = vadd.f32 %v2924, %v3170
    %v3172 = vpop.f32.mrf.mxu0
    %3173 = vmatprep.mubr.bf16.mxu0 %v3098
    %3174 = vmatmul.mubr.bf16.gmra.mxu0 %v3015
    %v3175 = vpop.f32.mrf.mxu0
    %v3176 = vadd.f32 %v2929, %v3175
    %v3177 = vpop.f32.mrf.mxu0
    %v3178 = vpop.f32.mrf.mxu0
    %v3179 = vadd.f32 %v2932, %v3178
    %v3180 = vpop.f32.mrf.mxu0
    %3181 = vmatprep.mubr.bf16.mxu0 %v3101
    %3182 = vmatmul.mubr.bf16.gmra.mxu0 %v3017
    %v3183 = vpop.f32.mrf.mxu0
    %v3184 = vadd.f32 %v2937, %v3183
    %v3185 = vpop.f32.mrf.mxu0
    %v3186 = vpop.f32.mrf.mxu0
    %v3187 = vadd.f32 %v2940, %v3186
    %v3188 = vpop.f32.mrf.mxu0
    %3189 = vmatprep.mubr.bf16.mxu0 %v3104
    %3190 = vmatmul.mubr.bf16.gmra.mxu0 %v3019
    %v3191 = vpop.f32.mrf.mxu0
    %v3192 = vadd.f32 %v2945, %v3191
    %v3193 = vpop.f32.mrf.mxu0
    %v3194 = vpop.f32.mrf.mxu0
    %v3195 = vadd.f32 %v2948, %v3194
    %v3196 = vpop.f32.mrf.mxu0
    %3197 = vmatprep.mubr.bf16.mxu0 %v3107
    %3198 = vmatmul.mubr.bf16.gmra.mxu0 %v3021
    %v3199 = vpop.f32.mrf.mxu0
    %v3200 = vadd.f32 %v2953, %v3199
    %v3201 = vpop.f32.mrf.mxu0
    %v3202 = vpop.f32.mrf.mxu0
    %v3203 = vadd.f32 %v2956, %v3202
    %v3204 = vpop.f32.mrf.mxu0
    %3205 = vdwg.mxu0
    %v3206 = vpack.c.bf16 %v3147, %v3144
    %v3207 = vpack.c.bf16 %v3155, %v3152
    %v3208 = vpack.c.bf16 %v3163, %v3160
    %v3209 = vpack.c.bf16 %v3171, %v3168
    %v3210 = vpack.c.bf16 %v3179, %v3176
    %v3211 = vpack.c.bf16 %v3187, %v3184
    %v3212 = vpack.c.bf16 %v3195, %v3192
    %v3213 = vpack.c.bf16 %v3203, %v3200
    %v3222 = vunpack.c.l.b16 %v3206
    %v3223 = vunpack.c.h.b16 %v3206
    %v3224 = vunpack.c.l.b16 %v3207
    %v3225 = vunpack.c.h.b16 %v3207
    %v3226 = vunpack.c.l.b16 %v3208
    %v3227 = vunpack.c.h.b16 %v3208
    %v3228 = vunpack.c.l.b16 %v3209
    %v3229 = vunpack.c.h.b16 %v3209
    %v3230 = vunpack.c.l.b16 %v3210
    %v3231 = vunpack.c.h.b16 %v3210
    %v3232 = vunpack.c.l.b16 %v3211
    %v3233 = vunpack.c.h.b16 %v3211
    %v3234 = vunpack.c.l.b16 %v3212
    %v3235 = vunpack.c.h.b16 %v3212
    %v3236 = vunpack.c.l.b16 %v3213
    %v3237 = vunpack.c.h.b16 %v3213
    %v3238 = vpack.c.b16 %v3222, %v3222
    %v3239 = vpack.c.b16 %v3223, %v3223
    %v3240 = vpack.c.b16 %v3224, %v3224
    %v3241 = vpack.c.b16 %v3225, %v3225
    %v3242 = vpack.c.b16 %v3226, %v3226
    %v3243 = vpack.c.b16 %v3227, %v3227
    %v3244 = vpack.c.b16 %v3228, %v3228
    %v3245 = vpack.c.b16 %v3229, %v3229
    %v3246 = vpack.c.b16 %v3230, %v3230
    %v3247 = vpack.c.b16 %v3231, %v3231
    %v3248 = vpack.c.b16 %v3232, %v3232
    %v3249 = vpack.c.b16 %v3233, %v3233
    %v3250 = vpack.c.b16 %v3234, %v3234
    %v3251 = vpack.c.b16 %v3235, %v3235
    %v3252 = vpack.c.b16 %v3236, %v3236
    %v3253 = vpack.c.b16 %v3237, %v3237
    %3270 = vst.msk [vmem:[#allocation4] sm:$0xf] %vm317, %v3238
    %3271 = vst.msk [vmem:[#allocation4 + $0x4] sm:$0xf] %vm317, %v3239
    %3272 = vst.msk [vmem:[#allocation4 + $0x8] sm:$0xf] %vm317, %v3240
    %3273 = vst.msk [vmem:[#allocation4 + $0xc] sm:$0xf] %vm317, %v3241
    %3274 = vst.msk [vmem:[#allocation4 + $0x10] sm:$0xf] %vm317, %v3242
    %3275 = vst.msk [vmem:[#allocation4 + $0x14] sm:$0xf] %vm317, %v3243
    %3276 = vst.msk [vmem:[#allocation4 + $0x18] sm:$0xf] %vm317, %v3244
    %3277 = vst.msk [vmem:[#allocation4 + $0x1c] sm:$0xf] %vm317, %v3245
    %3278 = vst.msk [vmem:[#allocation4 + $0x20] sm:$0xf] %vm317, %v3246
    %3279 = vst.msk [vmem:[#allocation4 + $0x24] sm:$0xf] %vm317, %v3247
    %3280 = vst.msk [vmem:[#allocation4 + $0x28] sm:$0xf] %vm317, %v3248
    %3281 = vst.msk [vmem:[#allocation4 + $0x2c] sm:$0xf] %vm317, %v3249
    %3282 = vst.msk [vmem:[#allocation4 + $0x30] sm:$0xf] %vm317, %v3250
    %3283 = vst.msk [vmem:[#allocation4 + $0x34] sm:$0xf] %vm317, %v3251
    %3284 = vst.msk [vmem:[#allocation4 + $0x38] sm:$0xf] %vm317, %v3252
    %3285 = vst.msk [vmem:[#allocation4 + $0x3c] sm:$0xf] %vm317, %v3253
    %v3286 = vld [vmem:[#allocation4] sm:$0xf]
    %v3287 = vld [vmem:[#allocation4 + $0x4] sm:$0xf]
    %v3288 = vld [vmem:[#allocation12] sm:$0xf]
    %v3289 = vld [vmem:[#allocation12 + $0x4] sm:$0xf]
    %v3290 = vld [vmem:[#allocation12 + $0x8] sm:$0xf]
    %v3291 = vld [vmem:[#allocation12 + $0xc] sm:$0xf]
    %v3292 = vld [vmem:[#allocation12 + $0x10] sm:$0xf]
    %v3293 = vld [vmem:[#allocation12 + $0x14] sm:$0xf]
    %v3294 = vld [vmem:[#allocation12 + $0x18] sm:$0xf]
    %v3295 = vld [vmem:[#allocation12 + $0x1c] sm:$0xf]
    %v3296 = vld [vmem:[#allocation12 + $0x20] sm:$0xf]
    %v3297 = vld [vmem:[#allocation12 + $0x24] sm:$0xf]
    %v3300 = vunpack.c.l.b16 %v3286
    %v3301 = vunpack.c.l.b16 %v3287
    %v3302 = vpack.c.b16 %v3301, %v3300
    %v3313 = vunpack.c.l.b16 %v3288
    %v3314 = vunpack.c.l.b16 %v3289
    %v3315 = vunpack.c.l.b16 %v3290
    %v3316 = vunpack.c.l.b16 %v3291
    %v3317 = vunpack.c.l.b16 %v3292
    %v3318 = vunpack.c.l.b16 %v3293
    %v3319 = vunpack.c.l.b16 %v3294
    %v3320 = vunpack.c.l.b16 %v3295
    %v3321 = vunpack.c.l.b16 %v3296
    %v3322 = vunpack.c.l.b16 %v3297
    %v3323 = vpack.c.b16 %v3314, %v3313
    %v3324 = vpack.c.b16 %v3316, %v3315
    %v3325 = vpack.c.b16 %v3318, %v3317
    %v3326 = vpack.c.b16 %v3320, %v3319
    %v3327 = vpack.c.b16 %v3322, %v3321
    %vm3333 = vcmask 654336
    %v3335 = vsel %vm3333, %v3302, 0
    %3337 = vmatprep.subr.bf16.mxu0 0
    %3338 = vmatpush1.bf16.msra.mxu0 0
    %3339 = vmatprep.subr.bf16.mxu0 0
    %3340 = vmatpush1.bf16.msra.mxu0 0
    %3341 = vmatprep.subr.bf16.mxu0 0
    %3342 = vmatpush1.bf16.msra.mxu0 0
    %3343 = vmatprep.subr.bf16.mxu0 0
    %3344 = vmatpush1.bf16.msra.mxu0 %v3327
    %3345 = vmatprep.subr.bf16.mxu0 0
    %3346 = vmatpush1.bf16.msra.mxu0 %v3326
    %3347 = vmatprep.subr.bf16.mxu0 0
    %3348 = vmatpush1.bf16.msra.mxu0 %v3325
    %3349 = vmatprep.subr.bf16.mxu0 0
    %3350 = vmatpush1.bf16.msra.mxu0 %v3324
    %3351 = vmatprep.subr.bf16.mxu0 0
    %3352 = vmatpush1.bf16.msra.mxu0 %v3323
    %3353 = vmatprep.subr.bf16.mxu0 0
    %3354 = vmatpush2.bf16.msra.mxu0 0
    %3355 = vmatprep.subr.bf16.mxu0 0
    %3356 = vmatpush2.bf16.msra.mxu0 0
    %3357 = vmatprep.subr.bf16.mxu0 0
    %3358 = vmatpush2.bf16.msra.mxu0 0
    %3359 = vmatprep.subr.bf16.mxu0 0
    %3360 = vmatpush2.bf16.msra.mxu0 0
    %3361 = vmatprep.subr.bf16.mxu0 0
    %3362 = vmatpush2.bf16.msra.mxu0 0
    %3363 = vmatprep.subr.bf16.mxu0 0
    %3364 = vmatpush2.bf16.msra.mxu0 0
    %3365 = vmatprep.subr.bf16.mxu0 0
    %3366 = vmatpush2.bf16.msra.mxu0 0
    %3367 = vmatprep.subr.bf16.mxu0 0
    %3368 = vmatpush2.bf16.msra.mxu0 0
    %3369 = vmatprep.mubr.bf16.mxu0 0
    %3370 = vmatmul.mubr.bf16.gmra.mxu0 %v3335
    %v3371 = vpop.f32.mrf.mxu0
    %v3372 = vadd.f32 0.0, %v3371
    %v3373 = vpop.f32.mrf.mxu0
    %v3374 = vpop.f32.mrf.mxu0
    %v3375 = vadd.f32 0.0, %v3374
    %v3376 = vpop.f32.mrf.mxu0
    %3377 = vdwg.mxu0
    %v3378 = vpack.c.bf16 %v3375, %v3372
    %v3380 = vunpack.c.l.b16 %v3378
    %v3381 = vunpack.c.h.b16 %v3378
    %v3382 = vpack.c.b16 %v3380, %v3380
    %v3383 = vpack.c.b16 %v3381, %v3381
    %vm3386 = vcmask 322560
    %3387 = vst.msk [vmem:[#allocation5] sm:$0xf] %vm3386, %v3382
    %3388 = vst.msk [vmem:[#allocation5 + $0x4] sm:$0xf] %vm3386, %v3383
    %v3389 = vld [vmem:[%s6] sm:$0xf]
    %v3390 = vld [vmem:[%s6 + $0x4] sm:$0xf]
    %v3391 = vld [vmem:[%s6 + $0x8] sm:$0xf]
    %v3392 = vld [vmem:[%s6 + $0xc] sm:$0xf]
    %v3393 = vld [vmem:[%s6 + $0x10] sm:$0xf]
    %v3394 = vld [vmem:[%s6 + $0x14] sm:$0xf]
    %v3395 = vld [vmem:[%s6 + $0x18] sm:$0xf]
    %v3396 = vld [vmem:[%s6 + $0x1c] sm:$0xf]
    %v3397 = vld [vmem:[%s6 + $0x20] sm:$0xf]
    %v3398 = vld [vmem:[%s6 + $0x24] sm:$0xf]
    %v3409 = vunpack.c.l.b16 %v3389
    %v3410 = vunpack.c.l.b16 %v3390
    %v3411 = vunpack.c.l.b16 %v3391
    %v3412 = vunpack.c.l.b16 %v3392
    %v3413 = vunpack.c.l.b16 %v3393
    %v3414 = vunpack.c.l.b16 %v3394
    %v3415 = vunpack.c.l.b16 %v3395
    %v3416 = vunpack.c.l.b16 %v3396
    %v3417 = vunpack.c.l.b16 %v3397
    %v3418 = vunpack.c.l.b16 %v3398
    %v3419 = vpack.c.b16 %v3410, %v3409
    %v3420 = vpack.c.b16 %v3412, %v3411
    %v3421 = vpack.c.b16 %v3414, %v3413
    %v3422 = vpack.c.b16 %v3416, %v3415
    %v3423 = vpack.c.b16 %v3418, %v3417
    %3429 = vmatprep.subr.bf16.mxu0 0
    %3430 = vmatpush1.bf16.msra.mxu0 0
    %3431 = vmatprep.subr.bf16.mxu0 0
    %3432 = vmatpush1.bf16.msra.mxu0 0
    %3433 = vmatprep.subr.bf16.mxu0 0
    %3434 = vmatpush1.bf16.msra.mxu0 0
    %3435 = vmatprep.subr.bf16.mxu0 0
    %3436 = vmatpush1.bf16.msra.mxu0 %v3423
    %3437 = vmatprep.subr.bf16.mxu0 0
    %3438 = vmatpush1.bf16.msra.mxu0 %v3422
    %3439 = vmatprep.subr.bf16.mxu0 0
    %3440 = vmatpush1.bf16.msra.mxu0 %v3421
    %3441 = vmatprep.subr.bf16.mxu0 0
    %3442 = vmatpush1.bf16.msra.mxu0 %v3420
    %3443 = vmatprep.subr.bf16.mxu0 0
    %3444 = vmatpush1.bf16.msra.mxu0 %v3419
    %3445 = vmatprep.subr.bf16.mxu0 0
    %3446 = vmatpush2.bf16.msra.mxu0 0
    %3447 = vmatprep.subr.bf16.mxu0 0
    %3448 = vmatpush2.bf16.msra.mxu0 0
    %3449 = vmatprep.subr.bf16.mxu0 0
    %3450 = vmatpush2.bf16.msra.mxu0 0
    %3451 = vmatprep.subr.bf16.mxu0 0
    %3452 = vmatpush2.bf16.msra.mxu0 0
    %3453 = vmatprep.subr.bf16.mxu0 0
    %3454 = vmatpush2.bf16.msra.mxu0 0
    %3455 = vmatprep.subr.bf16.mxu0 0
    %3456 = vmatpush2.bf16.msra.mxu0 0
    %3457 = vmatprep.subr.bf16.mxu0 0
    %3458 = vmatpush2.bf16.msra.mxu0 0
    %3459 = vmatprep.subr.bf16.mxu0 0
    %3460 = vmatpush2.bf16.msra.mxu0 0
    %3461 = vmatprep.mubr.bf16.mxu0 0
    %3462 = vmatmul.mubr.bf16.gmra.mxu0 %v3335
    %v3463 = vpop.f32.mrf.mxu0
    %v3464 = vadd.f32 0.0, %v3463
    %v3465 = vpop.f32.mrf.mxu0
    %v3466 = vpop.f32.mrf.mxu0
    %v3467 = vadd.f32 0.0, %v3466
    %v3468 = vpop.f32.mrf.mxu0
    %3469 = vdwg.mxu0
    %v3470 = vpack.c.bf16 %v3467, %v3464
    %v3472 = vunpack.c.l.b16 %v3470
    %v3473 = vunpack.c.h.b16 %v3470
    %v3474 = vpack.c.b16 %v3472, %v3472
    %v3475 = vpack.c.b16 %v3473, %v3473
    %3478 = vst.msk [vmem:[#allocation6] sm:$0xf] %vm3386, %v3474
    %3479 = vst.msk [vmem:[#allocation6 + $0x4] sm:$0xf] %vm3386, %v3475
    %v3480 = vld [vmem:[#allocation4 + $0x8] sm:$0xf]
    %v3481 = vld [vmem:[#allocation4 + $0xc] sm:$0xf]
    %s3482 = scalar_lea.vmem [#allocation12], 40
    %v3483 = vld [vmem:[%s3482] sm:$0xf]
    %v3484 = vld [vmem:[%s3482 + $0x4] sm:$0xf]
    %v3485 = vld [vmem:[%s3482 + $0x8] sm:$0xf]
    %v3486 = vld [vmem:[%s3482 + $0xc] sm:$0xf]
    %v3487 = vld [vmem:[%s3482 + $0x10] sm:$0xf]
    %v3488 = vld [vmem:[%s3482 + $0x14] sm:$0xf]
    %v3489 = vld [vmem:[%s3482 + $0x18] sm:$0xf]
    %v3490 = vld [vmem:[%s3482 + $0x1c] sm:$0xf]
    %v3491 = vld [vmem:[%s3482 + $0x20] sm:$0xf]
    %v3492 = vld [vmem:[%s3482 + $0x24] sm:$0xf]
    %v3495 = vunpack.c.l.b16 %v3480
    %v3496 = vunpack.c.l.b16 %v3481
    %v3497 = vpack.c.b16 %v3496, %v3495
    %v3508 = vunpack.c.l.b16 %v3483
    %v3509 = vunpack.c.l.b16 %v3484
    %v3510 = vunpack.c.l.b16 %v3485
    %v3511 = vunpack.c.l.b16 %v3486
    %v3512 = vunpack.c.l.b16 %v3487
    %v3513 = vunpack.c.l.b16 %v3488
    %v3514 = vunpack.c.l.b16 %v3489
    %v3515 = vunpack.c.l.b16 %v3490
    %v3516 = vunpack.c.l.b16 %v3491
    %v3517 = vunpack.c.l.b16 %v3492
    %v3518 = vpack.c.b16 %v3509, %v3508
    %v3519 = vpack.c.b16 %v3511, %v3510
    %v3520 = vpack.c.b16 %v3513, %v3512
    %v3521 = vpack.c.b16 %v3515, %v3514
    %v3522 = vpack.c.b16 %v3517, %v3516
    %v3529 = vsel %vm3333, %v3497, 0
    %3531 = vmatprep.subr.bf16.mxu0 0
    %3532 = vmatpush1.bf16.msra.mxu0 0
    %3533 = vmatprep.subr.bf16.mxu0 0
    %3534 = vmatpush1.bf16.msra.mxu0 0
    %3535 = vmatprep.subr.bf16.mxu0 0
    %3536 = vmatpush1.bf16.msra.mxu0 0
    %3537 = vmatprep.subr.bf16.mxu0 0
    %3538 = vmatpush1.bf16.msra.mxu0 %v3522
    %3539 = vmatprep.subr.bf16.mxu0 0
    %3540 = vmatpush1.bf16.msra.mxu0 %v3521
    %3541 = vmatprep.subr.bf16.mxu0 0
    %3542 = vmatpush1.bf16.msra.mxu0 %v3520
    %3543 = vmatprep.subr.bf16.mxu0 0
    %3544 = vmatpush1.bf16.msra.mxu0 %v3519
    %3545 = vmatprep.subr.bf16.mxu0 0
    %3546 = vmatpush1.bf16.msra.mxu0 %v3518
    %3547 = vmatprep.subr.bf16.mxu0 0
    %3548 = vmatpush2.bf16.msra.mxu0 0
    %3549 = vmatprep.subr.bf16.mxu0 0
    %3550 = vmatpush2.bf16.msra.mxu0 0
    %3551 = vmatprep.subr.bf16.mxu0 0
    %3552 = vmatpush2.bf16.msra.mxu0 0
    %3553 = vmatprep.subr.bf16.mxu0 0
    %3554 = vmatpush2.bf16.msra.mxu0 0
    %3555 = vmatprep.subr.bf16.mxu0 0
    %3556 = vmatpush2.bf16.msra.mxu0 0
    %3557 = vmatprep.subr.bf16.mxu0 0
    %3558 = vmatpush2.bf16.msra.mxu0 0
    %3559 = vmatprep.subr.bf16.mxu0 0
    %3560 = vmatpush2.bf16.msra.mxu0 0
    %3561 = vmatprep.subr.bf16.mxu0 0
    %3562 = vmatpush2.bf16.msra.mxu0 0
    %3563 = vmatprep.mubr.bf16.mxu0 0
    %3564 = vmatmul.mubr.bf16.gmra.mxu0 %v3529
    %v3565 = vpop.f32.mrf.mxu0
    %v3566 = vadd.f32 0.0, %v3565
    %v3567 = vpop.f32.mrf.mxu0
    %v3568 = vpop.f32.mrf.mxu0
    %v3569 = vadd.f32 0.0, %v3568
    %v3570 = vpop.f32.mrf.mxu0
    %3571 = vdwg.mxu0
    %v3572 = vpack.c.bf16 %v3569, %v3566
    %v3574 = vunpack.c.l.b16 %v3572
    %v3575 = vunpack.c.h.b16 %v3572
    %v3576 = vpack.c.b16 %v3574, %v3574
    %v3577 = vpack.c.b16 %v3575, %v3575
    %3580 = vst.msk [vmem:[#allocation5 + $0x8] sm:$0xf] %vm3386, %v3576
    %3581 = vst.msk [vmem:[#allocation5 + $0xc] sm:$0xf] %vm3386, %v3577
    %s3582 = scalar_lea.vmem %s6, 40
    %v3583 = vld [vmem:[%s3582] sm:$0xf]
    %v3584 = vld [vmem:[%s3582 + $0x4] sm:$0xf]
    %v3585 = vld [vmem:[%s3582 + $0x8] sm:$0xf]
    %v3586 = vld [vmem:[%s3582 + $0xc] sm:$0xf]
    %v3587 = vld [vmem:[%s3582 + $0x10] sm:$0xf]
    %v3588 = vld [vmem:[%s3582 + $0x14] sm:$0xf]
    %v3589 = vld [vmem:[%s3582 + $0x18] sm:$0xf]
    %v3590 = vld [vmem:[%s3582 + $0x1c] sm:$0xf]
    %v3591 = vld [vmem:[%s3582 + $0x20] sm:$0xf]
    %v3592 = vld [vmem:[%s3582 + $0x24] sm:$0xf]
    %v3603 = vunpack.c.l.b16 %v3583
    %v3604 = vunpack.c.l.b16 %v3584
    %v3605 = vunpack.c.l.b16 %v3585
    %v3606 = vunpack.c.l.b16 %v3586
    %v3607 = vunpack.c.l.b16 %v3587
    %v3608 = vunpack.c.l.b16 %v3588
    %v3609 = vunpack.c.l.b16 %v3589
    %v3610 = vunpack.c.l.b16 %v3590
    %v3611 = vunpack.c.l.b16 %v3591
    %v3612 = vunpack.c.l.b16 %v3592
    %v3613 = vpack.c.b16 %v3604, %v3603
    %v3614 = vpack.c.b16 %v3606, %v3605
    %v3615 = vpack.c.b16 %v3608, %v3607
    %v3616 = vpack.c.b16 %v3610, %v3609
    %v3617 = vpack.c.b16 %v3612, %v3611
    %3623 = vmatprep.subr.bf16.mxu0 0
    %3624 = vmatpush1.bf16.msra.mxu0 0
    %3625 = vmatprep.subr.bf16.mxu0 0
    %3626 = vmatpush1.bf16.msra.mxu0 0
    %3627 = vmatprep.subr.bf16.mxu0 0
    %3628 = vmatpush1.bf16.msra.mxu0 0
    %3629 = vmatprep.subr.bf16.mxu0 0
    %3630 = vmatpush1.bf16.msra.mxu0 %v3617
    %3631 = vmatprep.subr.bf16.mxu0 0
    %3632 = vmatpush1.bf16.msra.mxu0 %v3616
    %3633 = vmatprep.subr.bf16.mxu0 0
    %3634 = vmatpush1.bf16.msra.mxu0 %v3615
    %3635 = vmatprep.subr.bf16.mxu0 0
    %3636 = vmatpush1.bf16.msra.mxu0 %v3614
    %3637 = vmatprep.subr.bf16.mxu0 0
    %3638 = vmatpush1.bf16.msra.mxu0 %v3613
    %3639 = vmatprep.subr.bf16.mxu0 0
    %3640 = vmatpush2.bf16.msra.mxu0 0
    %3641 = vmatprep.subr.bf16.mxu0 0
    %3642 = vmatpush2.bf16.msra.mxu0 0
    %3643 = vmatprep.subr.bf16.mxu0 0
    %3644 = vmatpush2.bf16.msra.mxu0 0
    %3645 = vmatprep.subr.bf16.mxu0 0
    %3646 = vmatpush2.bf16.msra.mxu0 0
    %3647 = vmatprep.subr.bf16.mxu0 0
    %3648 = vmatpush2.bf16.msra.mxu0 0
    %3649 = vmatprep.subr.bf16.mxu0 0
    %3650 = vmatpush2.bf16.msra.mxu0 0
    %3651 = vmatprep.subr.bf16.mxu0 0
    %3652 = vmatpush2.bf16.msra.mxu0 0
    %3653 = vmatprep.subr.bf16.mxu0 0
    %3654 = vmatpush2.bf16.msra.mxu0 0
    %3655 = vmatprep.mubr.bf16.mxu0 0
    %3656 = vmatmul.mubr.bf16.gmra.mxu0 %v3529
    %v3657 = vpop.f32.mrf.mxu0
    %v3658 = vadd.f32 0.0, %v3657
    %v3659 = vpop.f32.mrf.mxu0
    %v3660 = vpop.f32.mrf.mxu0
    %v3661 = vadd.f32 0.0, %v3660
    %v3662 = vpop.f32.mrf.mxu0
    %3663 = vdwg.mxu0
    %v3664 = vpack.c.bf16 %v3661, %v3658
    %v3666 = vunpack.c.l.b16 %v3664
    %v3667 = vunpack.c.h.b16 %v3664
    %v3668 = vpack.c.b16 %v3666, %v3666
    %v3669 = vpack.c.b16 %v3667, %v3667
    %3672 = vst.msk [vmem:[#allocation6 + $0x8] sm:$0xf] %vm3386, %v3668
    %3673 = vst.msk [vmem:[#allocation6 + $0xc] sm:$0xf] %vm3386, %v3669
    %v3674 = vld [vmem:[#allocation4 + $0x10] sm:$0xf]
    %v3675 = vld [vmem:[#allocation4 + $0x14] sm:$0xf]
    %s3676 = scalar_lea.vmem [#allocation12], 80
    %v3677 = vld [vmem:[%s3676] sm:$0xf]
    %v3678 = vld [vmem:[%s3676 + $0x4] sm:$0xf]
    %v3679 = vld [vmem:[%s3676 + $0x8] sm:$0xf]
    %v3680 = vld [vmem:[%s3676 + $0xc] sm:$0xf]
    %v3681 = vld [vmem:[%s3676 + $0x10] sm:$0xf]
    %v3682 = vld [vmem:[%s3676 + $0x14] sm:$0xf]
    %v3683 = vld [vmem:[%s3676 + $0x18] sm:$0xf]
    %v3684 = vld [vmem:[%s3676 + $0x1c] sm:$0xf]
    %v3685 = vld [vmem:[%s3676 + $0x20] sm:$0xf]
    %v3686 = vld [vmem:[%s3676 + $0x24] sm:$0xf]
    %v3689 = vunpack.c.l.b16 %v3674
    %v3690 = vunpack.c.l.b16 %v3675
    %v3691 = vpack.c.b16 %v3690, %v3689
    %v3702 = vunpack.c.l.b16 %v3677
    %v3703 = vunpack.c.l.b16 %v3678
    %v3704 = vunpack.c.l.b16 %v3679
    %v3705 = vunpack.c.l.b16 %v3680
    %v3706 = vunpack.c.l.b16 %v3681
    %v3707 = vunpack.c.l.b16 %v3682
    %v3708 = vunpack.c.l.b16 %v3683
    %v3709 = vunpack.c.l.b16 %v3684
    %v3710 = vunpack.c.l.b16 %v3685
    %v3711 = vunpack.c.l.b16 %v3686
    %v3712 = vpack.c.b16 %v3703, %v3702
    %v3713 = vpack.c.b16 %v3705, %v3704
    %v3714 = vpack.c.b16 %v3707, %v3706
    %v3715 = vpack.c.b16 %v3709, %v3708
    %v3716 = vpack.c.b16 %v3711, %v3710
    %v3723 = vsel %vm3333, %v3691, 0
    %3725 = vmatprep.subr.bf16.mxu0 0
    %3726 = vmatpush1.bf16.msra.mxu0 0
    %3727 = vmatprep.subr.bf16.mxu0 0
    %3728 = vmatpush1.bf16.msra.mxu0 0
    %3729 = vmatprep.subr.bf16.mxu0 0
    %3730 = vmatpush1.bf16.msra.mxu0 0
    %3731 = vmatprep.subr.bf16.mxu0 0
    %3732 = vmatpush1.bf16.msra.mxu0 %v3716
    %3733 = vmatprep.subr.bf16.mxu0 0
    %3734 = vmatpush1.bf16.msra.mxu0 %v3715
    %3735 = vmatprep.subr.bf16.mxu0 0
    %3736 = vmatpush1.bf16.msra.mxu0 %v3714
    %3737 = vmatprep.subr.bf16.mxu0 0
    %3738 = vmatpush1.bf16.msra.mxu0 %v3713
    %3739 = vmatprep.subr.bf16.mxu0 0
    %3740 = vmatpush1.bf16.msra.mxu0 %v3712
    %3741 = vmatprep.subr.bf16.mxu0 0
    %3742 = vmatpush2.bf16.msra.mxu0 0
    %3743 = vmatprep.subr.bf16.mxu0 0
    %3744 = vmatpush2.bf16.msra.mxu0 0
    %3745 = vmatprep.subr.bf16.mxu0 0
    %3746 = vmatpush2.bf16.msra.mxu0 0
    %3747 = vmatprep.subr.bf16.mxu0 0
    %3748 = vmatpush2.bf16.msra.mxu0 0
    %3749 = vmatprep.subr.bf16.mxu0 0
    %3750 = vmatpush2.bf16.msra.mxu0 0
    %3751 = vmatprep.subr.bf16.mxu0 0
    %3752 = vmatpush2.bf16.msra.mxu0 0
    %3753 = vmatprep.subr.bf16.mxu0 0
    %3754 = vmatpush2.bf16.msra.mxu0 0
    %3755 = vmatprep.subr.bf16.mxu0 0
    %3756 = vmatpush2.bf16.msra.mxu0 0
    %3757 = vmatprep.mubr.bf16.mxu0 0
    %3758 = vmatmul.mubr.bf16.gmra.mxu0 %v3723
    %v3759 = vpop.f32.mrf.mxu0
    %v3760 = vadd.f32 0.0, %v3759
    %v3761 = vpop.f32.mrf.mxu0
    %v3762 = vpop.f32.mrf.mxu0
    %v3763 = vadd.f32 0.0, %v3762
    %v3764 = vpop.f32.mrf.mxu0
    %3765 = vdwg.mxu0
    %v3766 = vpack.c.bf16 %v3763, %v3760
    %v3768 = vunpack.c.l.b16 %v3766
    %v3769 = vunpack.c.h.b16 %v3766
    %v3770 = vpack.c.b16 %v3768, %v3768
    %v3771 = vpack.c.b16 %v3769, %v3769
    %3774 = vst.msk [vmem:[#allocation5 + $0x10] sm:$0xf] %vm3386, %v3770
    %3775 = vst.msk [vmem:[#allocation5 + $0x14] sm:$0xf] %vm3386, %v3771
    %s3776 = scalar_lea.vmem %s6, 80
    %v3777 = vld [vmem:[%s3776] sm:$0xf]
    %v3778 = vld [vmem:[%s3776 + $0x4] sm:$0xf]
    %v3779 = vld [vmem:[%s3776 + $0x8] sm:$0xf]
    %v3780 = vld [vmem:[%s3776 + $0xc] sm:$0xf]
    %v3781 = vld [vmem:[%s3776 + $0x10] sm:$0xf]
    %v3782 = vld [vmem:[%s3776 + $0x14] sm:$0xf]
    %v3783 = vld [vmem:[%s3776 + $0x18] sm:$0xf]
    %v3784 = vld [vmem:[%s3776 + $0x1c] sm:$0xf]
    %v3785 = vld [vmem:[%s3776 + $0x20] sm:$0xf]
    %v3786 = vld [vmem:[%s3776 + $0x24] sm:$0xf]
    %v3797 = vunpack.c.l.b16 %v3777
    %v3798 = vunpack.c.l.b16 %v3778
    %v3799 = vunpack.c.l.b16 %v3779
    %v3800 = vunpack.c.l.b16 %v3780
    %v3801 = vunpack.c.l.b16 %v3781
    %v3802 = vunpack.c.l.b16 %v3782
    %v3803 = vunpack.c.l.b16 %v3783
    %v3804 = vunpack.c.l.b16 %v3784
    %v3805 = vunpack.c.l.b16 %v3785
    %v3806 = vunpack.c.l.b16 %v3786
    %v3807 = vpack.c.b16 %v3798, %v3797
    %v3808 = vpack.c.b16 %v3800, %v3799
    %v3809 = vpack.c.b16 %v3802, %v3801
    %v3810 = vpack.c.b16 %v3804, %v3803
    %v3811 = vpack.c.b16 %v3806, %v3805
    %3817 = vmatprep.subr.bf16.mxu0 0
    %3818 = vmatpush1.bf16.msra.mxu0 0
    %3819 = vmatprep.subr.bf16.mxu0 0
    %3820 = vmatpush1.bf16.msra.mxu0 0
    %3821 = vmatprep.subr.bf16.mxu0 0
    %3822 = vmatpush1.bf16.msra.mxu0 0
    %3823 = vmatprep.subr.bf16.mxu0 0
    %3824 = vmatpush1.bf16.msra.mxu0 %v3811
    %3825 = vmatprep.subr.bf16.mxu0 0
    %3826 = vmatpush1.bf16.msra.mxu0 %v3810
    %3827 = vmatprep.subr.bf16.mxu0 0
    %3828 = vmatpush1.bf16.msra.mxu0 %v3809
    %3829 = vmatprep.subr.bf16.mxu0 0
    %3830 = vmatpush1.bf16.msra.mxu0 %v3808
    %3831 = vmatprep.subr.bf16.mxu0 0
    %3832 = vmatpush1.bf16.msra.mxu0 %v3807
    %3833 = vmatprep.subr.bf16.mxu0 0
    %3834 = vmatpush2.bf16.msra.mxu0 0
    %3835 = vmatprep.subr.bf16.mxu0 0
    %3836 = vmatpush2.bf16.msra.mxu0 0
    %3837 = vmatprep.subr.bf16.mxu0 0
    %3838 = vmatpush2.bf16.msra.mxu0 0
    %3839 = vmatprep.subr.bf16.mxu0 0
    %3840 = vmatpush2.bf16.msra.mxu0 0
    %3841 = vmatprep.subr.bf16.mxu0 0
    %3842 = vmatpush2.bf16.msra.mxu0 0
    %3843 = vmatprep.subr.bf16.mxu0 0
    %3844 = vmatpush2.bf16.msra.mxu0 0
    %3845 = vmatprep.subr.bf16.mxu0 0
    %3846 = vmatpush2.bf16.msra.mxu0 0
    %3847 = vmatprep.subr.bf16.mxu0 0
    %3848 = vmatpush2.bf16.msra.mxu0 0
    %3849 = vmatprep.mubr.bf16.mxu0 0
    %3850 = vmatmul.mubr.bf16.gmra.mxu0 %v3723
    %v3851 = vpop.f32.mrf.mxu0
    %v3852 = vadd.f32 0.0, %v3851
    %v3853 = vpop.f32.mrf.mxu0
    %v3854 = vpop.f32.mrf.mxu0
    %v3855 = vadd.f32 0.0, %v3854
    %v3856 = vpop.f32.mrf.mxu0
    %3857 = vdwg.mxu0
    %v3858 = vpack.c.bf16 %v3855, %v3852
    %v3860 = vunpack.c.l.b16 %v3858
    %v3861 = vunpack.c.h.b16 %v3858
    %v3862 = vpack.c.b16 %v3860, %v3860
    %v3863 = vpack.c.b16 %v3861, %v3861
    %3866 = vst.msk [vmem:[#allocation6 + $0x10] sm:$0xf] %vm3386, %v3862
    %3867 = vst.msk [vmem:[#allocation6 + $0x14] sm:$0xf] %vm3386, %v3863
    %v3868 = vld [vmem:[#allocation4 + $0x18] sm:$0xf]
    %v3869 = vld [vmem:[#allocation4 + $0x1c] sm:$0xf]
    %s3870 = scalar_lea.vmem [#allocation12], 120
    %v3871 = vld [vmem:[%s3870] sm:$0xf]
    %v3872 = vld [vmem:[%s3870 + $0x4] sm:$0xf]
    %v3873 = vld [vmem:[%s3870 + $0x8] sm:$0xf]
    %v3874 = vld [vmem:[%s3870 + $0xc] sm:$0xf]
    %v3875 = vld [vmem:[%s3870 + $0x10] sm:$0xf]
    %v3876 = vld [vmem:[%s3870 + $0x14] sm:$0xf]
    %v3877 = vld [vmem:[%s3870 + $0x18] sm:$0xf]
    %v3878 = vld [vmem:[%s3870 + $0x1c] sm:$0xf]
    %v3879 = vld [vmem:[%s3870 + $0x20] sm:$0xf]
    %v3880 = vld [vmem:[%s3870 + $0x24] sm:$0xf]
    %v3883 = vunpack.c.l.b16 %v3868
    %v3884 = vunpack.c.l.b16 %v3869
    %v3885 = vpack.c.b16 %v3884, %v3883
    %v3896 = vunpack.c.l.b16 %v3871
    %v3897 = vunpack.c.l.b16 %v3872
    %v3898 = vunpack.c.l.b16 %v3873
    %v3899 = vunpack.c.l.b16 %v3874
    %v3900 = vunpack.c.l.b16 %v3875
    %v3901 = vunpack.c.l.b16 %v3876
    %v3902 = vunpack.c.l.b16 %v3877
    %v3903 = vunpack.c.l.b16 %v3878
    %v3904 = vunpack.c.l.b16 %v3879
    %v3905 = vunpack.c.l.b16 %v3880
    %v3906 = vpack.c.b16 %v3897, %v3896
    %v3907 = vpack.c.b16 %v3899, %v3898
    %v3908 = vpack.c.b16 %v3901, %v3900
    %v3909 = vpack.c.b16 %v3903, %v3902
    %v3910 = vpack.c.b16 %v3905, %v3904
    %v3917 = vsel %vm3333, %v3885, 0
    %3919 = vmatprep.subr.bf16.mxu0 0
    %3920 = vmatpush1.bf16.msra.mxu0 0
    %3921 = vmatprep.subr.bf16.mxu0 0
    %3922 = vmatpush1.bf16.msra.mxu0 0
    %3923 = vmatprep.subr.bf16.mxu0 0
    %3924 = vmatpush1.bf16.msra.mxu0 0
    %3925 = vmatprep.subr.bf16.mxu0 0
    %3926 = vmatpush1.bf16.msra.mxu0 %v3910
    %3927 = vmatprep.subr.bf16.mxu0 0
    %3928 = vmatpush1.bf16.msra.mxu0 %v3909
    %3929 = vmatprep.subr.bf16.mxu0 0
    %3930 = vmatpush1.bf16.msra.mxu0 %v3908
    %3931 = vmatprep.subr.bf16.mxu0 0
    %3932 = vmatpush1.bf16.msra.mxu0 %v3907
    %3933 = vmatprep.subr.bf16.mxu0 0
    %3934 = vmatpush1.bf16.msra.mxu0 %v3906
    %3935 = vmatprep.subr.bf16.mxu0 0
    %3936 = vmatpush2.bf16.msra.mxu0 0
    %3937 = vmatprep.subr.bf16.mxu0 0
    %3938 = vmatpush2.bf16.msra.mxu0 0
    %3939 = vmatprep.subr.bf16.mxu0 0
    %3940 = vmatpush2.bf16.msra.mxu0 0
    %3941 = vmatprep.subr.bf16.mxu0 0
    %3942 = vmatpush2.bf16.msra.mxu0 0
    %3943 = vmatprep.subr.bf16.mxu0 0
    %3944 = vmatpush2.bf16.msra.mxu0 0
    %3945 = vmatprep.subr.bf16.mxu0 0
    %3946 = vmatpush2.bf16.msra.mxu0 0
    %3947 = vmatprep.subr.bf16.mxu0 0
    %3948 = vmatpush2.bf16.msra.mxu0 0
    %3949 = vmatprep.subr.bf16.mxu0 0
    %3950 = vmatpush2.bf16.msra.mxu0 0
    %3951 = vmatprep.mubr.bf16.mxu0 0
    %3952 = vmatmul.mubr.bf16.gmra.mxu0 %v3917
    %v3953 = vpop.f32.mrf.mxu0
    %v3954 = vadd.f32 0.0, %v3953
    %v3955 = vpop.f32.mrf.mxu0
    %v3956 = vpop.f32.mrf.mxu0
    %v3957 = vadd.f32 0.0, %v3956
    %v3958 = vpop.f32.mrf.mxu0
    %3959 = vdwg.mxu0
    %v3960 = vpack.c.bf16 %v3957, %v3954
    %v3962 = vunpack.c.l.b16 %v3960
    %v3963 = vunpack.c.h.b16 %v3960
    %v3964 = vpack.c.b16 %v3962, %v3962
    %v3965 = vpack.c.b16 %v3963, %v3963
    %3968 = vst.msk [vmem:[#allocation5 + $0x18] sm:$0xf] %vm3386, %v3964
    %3969 = vst.msk [vmem:[#allocation5 + $0x1c] sm:$0xf] %vm3386, %v3965
    %s3970 = scalar_lea.vmem %s6, 120
    %v3971 = vld [vmem:[%s3970] sm:$0xf]
    %v3972 = vld [vmem:[%s3970 + $0x4] sm:$0xf]
    %v3973 = vld [vmem:[%s3970 + $0x8] sm:$0xf]
    %v3974 = vld [vmem:[%s3970 + $0xc] sm:$0xf]
    %v3975 = vld [vmem:[%s3970 + $0x10] sm:$0xf]
    %v3976 = vld [vmem:[%s3970 + $0x14] sm:$0xf]
    %v3977 = vld [vmem:[%s3970 + $0x18] sm:$0xf]
    %v3978 = vld [vmem:[%s3970 + $0x1c] sm:$0xf]
    %v3979 = vld [vmem:[%s3970 + $0x20] sm:$0xf]
    %v3980 = vld [vmem:[%s3970 + $0x24] sm:$0xf]
    %v3991 = vunpack.c.l.b16 %v3971
    %v3992 = vunpack.c.l.b16 %v3972
    %v3993 = vunpack.c.l.b16 %v3973
    %v3994 = vunpack.c.l.b16 %v3974
    %v3995 = vunpack.c.l.b16 %v3975
    %v3996 = vunpack.c.l.b16 %v3976
    %v3997 = vunpack.c.l.b16 %v3977
    %v3998 = vunpack.c.l.b16 %v3978
    %v3999 = vunpack.c.l.b16 %v3979
    %v4000 = vunpack.c.l.b16 %v3980
    %v4001 = vpack.c.b16 %v3992, %v3991
    %v4002 = vpack.c.b16 %v3994, %v3993
    %v4003 = vpack.c.b16 %v3996, %v3995
    %v4004 = vpack.c.b16 %v3998, %v3997
    %v4005 = vpack.c.b16 %v4000, %v3999
    %4011 = vmatprep.subr.bf16.mxu0 0
    %4012 = vmatpush1.bf16.msra.mxu0 0
    %4013 = vmatprep.subr.bf16.mxu0 0
    %4014 = vmatpush1.bf16.msra.mxu0 0
    %4015 = vmatprep.subr.bf16.mxu0 0
    %4016 = vmatpush1.bf16.msra.mxu0 0
    %4017 = vmatprep.subr.bf16.mxu0 0
    %4018 = vmatpush1.bf16.msra.mxu0 %v4005
    %4019 = vmatprep.subr.bf16.mxu0 0
    %4020 = vmatpush1.bf16.msra.mxu0 %v4004
    %4021 = vmatprep.subr.bf16.mxu0 0
    %4022 = vmatpush1.bf16.msra.mxu0 %v4003
    %4023 = vmatprep.subr.bf16.mxu0 0
    %4024 = vmatpush1.bf16.msra.mxu0 %v4002
    %4025 = vmatprep.subr.bf16.mxu0 0
    %4026 = vmatpush1.bf16.msra.mxu0 %v4001
    %4027 = vmatprep.subr.bf16.mxu0 0
    %4028 = vmatpush2.bf16.msra.mxu0 0
    %4029 = vmatprep.subr.bf16.mxu0 0
    %4030 = vmatpush2.bf16.msra.mxu0 0
    %4031 = vmatprep.subr.bf16.mxu0 0
    %4032 = vmatpush2.bf16.msra.mxu0 0
    %4033 = vmatprep.subr.bf16.mxu0 0
    %4034 = vmatpush2.bf16.msra.mxu0 0
    %4035 = vmatprep.subr.bf16.mxu0 0
    %4036 = vmatpush2.bf16.msra.mxu0 0
    %4037 = vmatprep.subr.bf16.mxu0 0
    %4038 = vmatpush2.bf16.msra.mxu0 0
    %4039 = vmatprep.subr.bf16.mxu0 0
    %4040 = vmatpush2.bf16.msra.mxu0 0
    %4041 = vmatprep.subr.bf16.mxu0 0
    %4042 = vmatpush2.bf16.msra.mxu0 0
    %4043 = vmatprep.mubr.bf16.mxu0 0
    %4044 = vmatmul.mubr.bf16.gmra.mxu0 %v3917
    %v4045 = vpop.f32.mrf.mxu0
    %v4046 = vadd.f32 0.0, %v4045
    %v4047 = vpop.f32.mrf.mxu0
    %v4048 = vpop.f32.mrf.mxu0
    %v4049 = vadd.f32 0.0, %v4048
    %v4050 = vpop.f32.mrf.mxu0
    %4051 = vdwg.mxu0
    %v4052 = vpack.c.bf16 %v4049, %v4046
    %v4054 = vunpack.c.l.b16 %v4052
    %v4055 = vunpack.c.h.b16 %v4052
    %v4056 = vpack.c.b16 %v4054, %v4054
    %v4057 = vpack.c.b16 %v4055, %v4055
    %4060 = vst.msk [vmem:[#allocation6 + $0x18] sm:$0xf] %vm3386, %v4056
    %4061 = vst.msk [vmem:[#allocation6 + $0x1c] sm:$0xf] %vm3386, %v4057
    %v4062 = vld [vmem:[#allocation4 + $0x20] sm:$0xf]
    %v4063 = vld [vmem:[#allocation4 + $0x24] sm:$0xf]
    %s4064 = scalar_lea.vmem [#allocation12], 160
    %v4065 = vld [vmem:[%s4064] sm:$0xf]
    %v4066 = vld [vmem:[%s4064 + $0x4] sm:$0xf]
    %v4067 = vld [vmem:[%s4064 + $0x8] sm:$0xf]
    %v4068 = vld [vmem:[%s4064 + $0xc] sm:$0xf]
    %v4069 = vld [vmem:[%s4064 + $0x10] sm:$0xf]
    %v4070 = vld [vmem:[%s4064 + $0x14] sm:$0xf]
    %v4071 = vld [vmem:[%s4064 + $0x18] sm:$0xf]
    %v4072 = vld [vmem:[%s4064 + $0x1c] sm:$0xf]
    %v4073 = vld [vmem:[%s4064 + $0x20] sm:$0xf]
    %v4074 = vld [vmem:[%s4064 + $0x24] sm:$0xf]
    %v4077 = vunpack.c.l.b16 %v4062
    %v4078 = vunpack.c.l.b16 %v4063
    %v4079 = vpack.c.b16 %v4078, %v4077
    %v4090 = vunpack.c.l.b16 %v4065
    %v4091 = vunpack.c.l.b16 %v4066
    %v4092 = vunpack.c.l.b16 %v4067
    %v4093 = vunpack.c.l.b16 %v4068
    %v4094 = vunpack.c.l.b16 %v4069
    %v4095 = vunpack.c.l.b16 %v4070
    %v4096 = vunpack.c.l.b16 %v4071
    %v4097 = vunpack.c.l.b16 %v4072
    %v4098 = vunpack.c.l.b16 %v4073
    %v4099 = vunpack.c.l.b16 %v4074
    %v4100 = vpack.c.b16 %v4091, %v4090
    %v4101 = vpack.c.b16 %v4093, %v4092
    %v4102 = vpack.c.b16 %v4095, %v4094
    %v4103 = vpack.c.b16 %v4097, %v4096
    %v4104 = vpack.c.b16 %v4099, %v4098
    %v4111 = vsel %vm3333, %v4079, 0
    %4113 = vmatprep.subr.bf16.mxu0 0
    %4114 = vmatpush1.bf16.msra.mxu0 0
    %4115 = vmatprep.subr.bf16.mxu0 0
    %4116 = vmatpush1.bf16.msra.mxu0 0
    %4117 = vmatprep.subr.bf16.mxu0 0
    %4118 = vmatpush1.bf16.msra.mxu0 0
    %4119 = vmatprep.subr.bf16.mxu0 0
    %4120 = vmatpush1.bf16.msra.mxu0 %v4104
    %4121 = vmatprep.subr.bf16.mxu0 0
    %4122 = vmatpush1.bf16.msra.mxu0 %v4103
    %4123 = vmatprep.subr.bf16.mxu0 0
    %4124 = vmatpush1.bf16.msra.mxu0 %v4102
    %4125 = vmatprep.subr.bf16.mxu0 0
    %4126 = vmatpush1.bf16.msra.mxu0 %v4101
    %4127 = vmatprep.subr.bf16.mxu0 0
    %4128 = vmatpush1.bf16.msra.mxu0 %v4100
    %4129 = vmatprep.subr.bf16.mxu0 0
    %4130 = vmatpush2.bf16.msra.mxu0 0
    %4131 = vmatprep.subr.bf16.mxu0 0
    %4132 = vmatpush2.bf16.msra.mxu0 0
    %4133 = vmatprep.subr.bf16.mxu0 0
    %4134 = vmatpush2.bf16.msra.mxu0 0
    %4135 = vmatprep.subr.bf16.mxu0 0
    %4136 = vmatpush2.bf16.msra.mxu0 0
    %4137 = vmatprep.subr.bf16.mxu0 0
    %4138 = vmatpush2.bf16.msra.mxu0 0
    %4139 = vmatprep.subr.bf16.mxu0 0
    %4140 = vmatpush2.bf16.msra.mxu0 0
    %4141 = vmatprep.subr.bf16.mxu0 0
    %4142 = vmatpush2.bf16.msra.mxu0 0
    %4143 = vmatprep.subr.bf16.mxu0 0
    %4144 = vmatpush2.bf16.msra.mxu0 0
    %4145 = vmatprep.mubr.bf16.mxu0 0
    %4146 = vmatmul.mubr.bf16.gmra.mxu0 %v4111
    %v4147 = vpop.f32.mrf.mxu0
    %v4148 = vadd.f32 0.0, %v4147
    %v4149 = vpop.f32.mrf.mxu0
    %v4150 = vpop.f32.mrf.mxu0
    %v4151 = vadd.f32 0.0, %v4150
    %v4152 = vpop.f32.mrf.mxu0
    %4153 = vdwg.mxu0
    %v4154 = vpack.c.bf16 %v4151, %v4148
    %v4156 = vunpack.c.l.b16 %v4154
    %v4157 = vunpack.c.h.b16 %v4154
    %v4158 = vpack.c.b16 %v4156, %v4156
    %v4159 = vpack.c.b16 %v4157, %v4157
    %4162 = vst.msk [vmem:[#allocation5 + $0x20] sm:$0xf] %vm3386, %v4158
    %4163 = vst.msk [vmem:[#allocation5 + $0x24] sm:$0xf] %vm3386, %v4159
    %s4164 = scalar_lea.vmem %s6, 160
    %v4165 = vld [vmem:[%s4164] sm:$0xf]
    %v4166 = vld [vmem:[%s4164 + $0x4] sm:$0xf]
    %v4167 = vld [vmem:[%s4164 + $0x8] sm:$0xf]
    %v4168 = vld [vmem:[%s4164 + $0xc] sm:$0xf]
    %v4169 = vld [vmem:[%s4164 + $0x10] sm:$0xf]
    %v4170 = vld [vmem:[%s4164 + $0x14] sm:$0xf]
    %v4171 = vld [vmem:[%s4164 + $0x18] sm:$0xf]
    %v4172 = vld [vmem:[%s4164 + $0x1c] sm:$0xf]
    %v4173 = vld [vmem:[%s4164 + $0x20] sm:$0xf]
    %v4174 = vld [vmem:[%s4164 + $0x24] sm:$0xf]
    %v4185 = vunpack.c.l.b16 %v4165
    %v4186 = vunpack.c.l.b16 %v4166
    %v4187 = vunpack.c.l.b16 %v4167
    %v4188 = vunpack.c.l.b16 %v4168
    %v4189 = vunpack.c.l.b16 %v4169
    %v4190 = vunpack.c.l.b16 %v4170
    %v4191 = vunpack.c.l.b16 %v4171
    %v4192 = vunpack.c.l.b16 %v4172
    %v4193 = vunpack.c.l.b16 %v4173
    %v4194 = vunpack.c.l.b16 %v4174
    %v4195 = vpack.c.b16 %v4186, %v4185
    %v4196 = vpack.c.b16 %v4188, %v4187
    %v4197 = vpack.c.b16 %v4190, %v4189
    %v4198 = vpack.c.b16 %v4192, %v4191
    %v4199 = vpack.c.b16 %v4194, %v4193
    %4205 = vmatprep.subr.bf16.mxu0 0
    %4206 = vmatpush1.bf16.msra.mxu0 0
    %4207 = vmatprep.subr.bf16.mxu0 0
    %4208 = vmatpush1.bf16.msra.mxu0 0
    %4209 = vmatprep.subr.bf16.mxu0 0
    %4210 = vmatpush1.bf16.msra.mxu0 0
    %4211 = vmatprep.subr.bf16.mxu0 0
    %4212 = vmatpush1.bf16.msra.mxu0 %v4199
    %4213 = vmatprep.subr.bf16.mxu0 0
    %4214 = vmatpush1.bf16.msra.mxu0 %v4198
    %4215 = vmatprep.subr.bf16.mxu0 0
    %4216 = vmatpush1.bf16.msra.mxu0 %v4197
    %4217 = vmatprep.subr.bf16.mxu0 0
    %4218 = vmatpush1.bf16.msra.mxu0 %v4196
    %4219 = vmatprep.subr.bf16.mxu0 0
    %4220 = vmatpush1.bf16.msra.mxu0 %v4195
    %4221 = vmatprep.subr.bf16.mxu0 0
    %4222 = vmatpush2.bf16.msra.mxu0 0
    %4223 = vmatprep.subr.bf16.mxu0 0
    %4224 = vmatpush2.bf16.msra.mxu0 0
    %4225 = vmatprep.subr.bf16.mxu0 0
    %4226 = vmatpush2.bf16.msra.mxu0 0
    %4227 = vmatprep.subr.bf16.mxu0 0
    %4228 = vmatpush2.bf16.msra.mxu0 0
    %4229 = vmatprep.subr.bf16.mxu0 0
    %4230 = vmatpush2.bf16.msra.mxu0 0
    %4231 = vmatprep.subr.bf16.mxu0 0
    %4232 = vmatpush2.bf16.msra.mxu0 0
    %4233 = vmatprep.subr.bf16.mxu0 0
    %4234 = vmatpush2.bf16.msra.mxu0 0
    %4235 = vmatprep.subr.bf16.mxu0 0
    %4236 = vmatpush2.bf16.msra.mxu0 0
    %4237 = vmatprep.mubr.bf16.mxu0 0
    %4238 = vmatmul.mubr.bf16.gmra.mxu0 %v4111
    %v4239 = vpop.f32.mrf.mxu0
    %v4240 = vadd.f32 0.0, %v4239
    %v4241 = vpop.f32.mrf.mxu0
    %v4242 = vpop.f32.mrf.mxu0
    %v4243 = vadd.f32 0.0, %v4242
    %v4244 = vpop.f32.mrf.mxu0
    %4245 = vdwg.mxu0
    %v4246 = vpack.c.bf16 %v4243, %v4240
    %v4248 = vunpack.c.l.b16 %v4246
    %v4249 = vunpack.c.h.b16 %v4246
    %v4250 = vpack.c.b16 %v4248, %v4248
    %v4251 = vpack.c.b16 %v4249, %v4249
    %4254 = vst.msk [vmem:[#allocation6 + $0x20] sm:$0xf] %vm3386, %v4250
    %4255 = vst.msk [vmem:[#allocation6 + $0x24] sm:$0xf] %vm3386, %v4251
    %v4256 = vld [vmem:[#allocation4 + $0x28] sm:$0xf]
    %v4257 = vld [vmem:[#allocation4 + $0x2c] sm:$0xf]
    %s4258 = scalar_lea.vmem [#allocation12], 200
    %v4259 = vld [vmem:[%s4258] sm:$0xf]
    %v4260 = vld [vmem:[%s4258 + $0x4] sm:$0xf]
    %v4261 = vld [vmem:[%s4258 + $0x8] sm:$0xf]
    %v4262 = vld [vmem:[%s4258 + $0xc] sm:$0xf]
    %v4263 = vld [vmem:[%s4258 + $0x10] sm:$0xf]
    %v4264 = vld [vmem:[%s4258 + $0x14] sm:$0xf]
    %v4265 = vld [vmem:[%s4258 + $0x18] sm:$0xf]
    %v4266 = vld [vmem:[%s4258 + $0x1c] sm:$0xf]
    %v4267 = vld [vmem:[%s4258 + $0x20] sm:$0xf]
    %v4268 = vld [vmem:[%s4258 + $0x24] sm:$0xf]
    %v4271 = vunpack.c.l.b16 %v4256
    %v4272 = vunpack.c.l.b16 %v4257
    %v4273 = vpack.c.b16 %v4272, %v4271
    %v4284 = vunpack.c.l.b16 %v4259
    %v4285 = vunpack.c.l.b16 %v4260
    %v4286 = vunpack.c.l.b16 %v4261
    %v4287 = vunpack.c.l.b16 %v4262
    %v4288 = vunpack.c.l.b16 %v4263
    %v4289 = vunpack.c.l.b16 %v4264
    %v4290 = vunpack.c.l.b16 %v4265
    %v4291 = vunpack.c.l.b16 %v4266
    %v4292 = vunpack.c.l.b16 %v4267
    %v4293 = vunpack.c.l.b16 %v4268
    %v4294 = vpack.c.b16 %v4285, %v4284
    %v4295 = vpack.c.b16 %v4287, %v4286
    %v4296 = vpack.c.b16 %v4289, %v4288
    %v4297 = vpack.c.b16 %v4291, %v4290
    %v4298 = vpack.c.b16 %v4293, %v4292
    %v4305 = vsel %vm3333, %v4273, 0
    %4307 = vmatprep.subr.bf16.mxu0 0
    %4308 = vmatpush1.bf16.msra.mxu0 0
    %4309 = vmatprep.subr.bf16.mxu0 0
    %4310 = vmatpush1.bf16.msra.mxu0 0
    %4311 = vmatprep.subr.bf16.mxu0 0
    %4312 = vmatpush1.bf16.msra.mxu0 0
    %4313 = vmatprep.subr.bf16.mxu0 0
    %4314 = vmatpush1.bf16.msra.mxu0 %v4298
    %4315 = vmatprep.subr.bf16.mxu0 0
    %4316 = vmatpush1.bf16.msra.mxu0 %v4297
    %4317 = vmatprep.subr.bf16.mxu0 0
    %4318 = vmatpush1.bf16.msra.mxu0 %v4296
    %4319 = vmatprep.subr.bf16.mxu0 0
    %4320 = vmatpush1.bf16.msra.mxu0 %v4295
    %4321 = vmatprep.subr.bf16.mxu0 0
    %4322 = vmatpush1.bf16.msra.mxu0 %v4294
    %4323 = vmatprep.subr.bf16.mxu0 0
    %4324 = vmatpush2.bf16.msra.mxu0 0
    %4325 = vmatprep.subr.bf16.mxu0 0
    %4326 = vmatpush2.bf16.msra.mxu0 0
    %4327 = vmatprep.subr.bf16.mxu0 0
    %4328 = vmatpush2.bf16.msra.mxu0 0
    %4329 = vmatprep.subr.bf16.mxu0 0
    %4330 = vmatpush2.bf16.msra.mxu0 0
    %4331 = vmatprep.subr.bf16.mxu0 0
    %4332 = vmatpush2.bf16.msra.mxu0 0
    %4333 = vmatprep.subr.bf16.mxu0 0
    %4334 = vmatpush2.bf16.msra.mxu0 0
    %4335 = vmatprep.subr.bf16.mxu0 0
    %4336 = vmatpush2.bf16.msra.mxu0 0
    %4337 = vmatprep.subr.bf16.mxu0 0
    %4338 = vmatpush2.bf16.msra.mxu0 0
    %4339 = vmatprep.mubr.bf16.mxu0 0
    %4340 = vmatmul.mubr.bf16.gmra.mxu0 %v4305
    %v4341 = vpop.f32.mrf.mxu0
    %v4342 = vadd.f32 0.0, %v4341
    %v4343 = vpop.f32.mrf.mxu0
    %v4344 = vpop.f32.mrf.mxu0
    %v4345 = vadd.f32 0.0, %v4344
    %v4346 = vpop.f32.mrf.mxu0
    %4347 = vdwg.mxu0
    %v4348 = vpack.c.bf16 %v4345, %v4342
    %v4350 = vunpack.c.l.b16 %v4348
    %v4351 = vunpack.c.h.b16 %v4348
    %v4352 = vpack.c.b16 %v4350, %v4350
    %v4353 = vpack.c.b16 %v4351, %v4351
    %4356 = vst.msk [vmem:[#allocation5 + $0x28] sm:$0xf] %vm3386, %v4352
    %4357 = vst.msk [vmem:[#allocation5 + $0x2c] sm:$0xf] %vm3386, %v4353
    %s4358 = scalar_lea.vmem %s6, 200
    %v4359 = vld [vmem:[%s4358] sm:$0xf]
    %v4360 = vld [vmem:[%s4358 + $0x4] sm:$0xf]
    %v4361 = vld [vmem:[%s4358 + $0x8] sm:$0xf]
    %v4362 = vld [vmem:[%s4358 + $0xc] sm:$0xf]
    %v4363 = vld [vmem:[%s4358 + $0x10] sm:$0xf]
    %v4364 = vld [vmem:[%s4358 + $0x14] sm:$0xf]
    %v4365 = vld [vmem:[%s4358 + $0x18] sm:$0xf]
    %v4366 = vld [vmem:[%s4358 + $0x1c] sm:$0xf]
    %v4367 = vld [vmem:[%s4358 + $0x20] sm:$0xf]
    %v4368 = vld [vmem:[%s4358 + $0x24] sm:$0xf]
    %v4379 = vunpack.c.l.b16 %v4359
    %v4380 = vunpack.c.l.b16 %v4360
    %v4381 = vunpack.c.l.b16 %v4361
    %v4382 = vunpack.c.l.b16 %v4362
    %v4383 = vunpack.c.l.b16 %v4363
    %v4384 = vunpack.c.l.b16 %v4364
    %v4385 = vunpack.c.l.b16 %v4365
    %v4386 = vunpack.c.l.b16 %v4366
    %v4387 = vunpack.c.l.b16 %v4367
    %v4388 = vunpack.c.l.b16 %v4368
    %v4389 = vpack.c.b16 %v4380, %v4379
    %v4390 = vpack.c.b16 %v4382, %v4381
    %v4391 = vpack.c.b16 %v4384, %v4383
    %v4392 = vpack.c.b16 %v4386, %v4385
    %v4393 = vpack.c.b16 %v4388, %v4387
    %4399 = vmatprep.subr.bf16.mxu0 0
    %4400 = vmatpush1.bf16.msra.mxu0 0
    %4401 = vmatprep.subr.bf16.mxu0 0
    %4402 = vmatpush1.bf16.msra.mxu0 0
    %4403 = vmatprep.subr.bf16.mxu0 0
    %4404 = vmatpush1.bf16.msra.mxu0 0
    %4405 = vmatprep.subr.bf16.mxu0 0
    %4406 = vmatpush1.bf16.msra.mxu0 %v4393
    %4407 = vmatprep.subr.bf16.mxu0 0
    %4408 = vmatpush1.bf16.msra.mxu0 %v4392
    %4409 = vmatprep.subr.bf16.mxu0 0
    %4410 = vmatpush1.bf16.msra.mxu0 %v4391
    %4411 = vmatprep.subr.bf16.mxu0 0
    %4412 = vmatpush1.bf16.msra.mxu0 %v4390
    %4413 = vmatprep.subr.bf16.mxu0 0
    %4414 = vmatpush1.bf16.msra.mxu0 %v4389
    %4415 = vmatprep.subr.bf16.mxu0 0
    %4416 = vmatpush2.bf16.msra.mxu0 0
    %4417 = vmatprep.subr.bf16.mxu0 0
    %4418 = vmatpush2.bf16.msra.mxu0 0
    %4419 = vmatprep.subr.bf16.mxu0 0
    %4420 = vmatpush2.bf16.msra.mxu0 0
    %4421 = vmatprep.subr.bf16.mxu0 0
    %4422 = vmatpush2.bf16.msra.mxu0 0
    %4423 = vmatprep.subr.bf16.mxu0 0
    %4424 = vmatpush2.bf16.msra.mxu0 0
    %4425 = vmatprep.subr.bf16.mxu0 0
    %4426 = vmatpush2.bf16.msra.mxu0 0
    %4427 = vmatprep.subr.bf16.mxu0 0
    %4428 = vmatpush2.bf16.msra.mxu0 0
    %4429 = vmatprep.subr.bf16.mxu0 0
    %4430 = vmatpush2.bf16.msra.mxu0 0
    %4431 = vmatprep.mubr.bf16.mxu0 0
    %4432 = vmatmul.mubr.bf16.gmra.mxu0 %v4305
    %v4433 = vpop.f32.mrf.mxu0
    %v4434 = vadd.f32 0.0, %v4433
    %v4435 = vpop.f32.mrf.mxu0
    %v4436 = vpop.f32.mrf.mxu0
    %v4437 = vadd.f32 0.0, %v4436
    %v4438 = vpop.f32.mrf.mxu0
    %4439 = vdwg.mxu0
    %v4440 = vpack.c.bf16 %v4437, %v4434
    %v4442 = vunpack.c.l.b16 %v4440
    %v4443 = vunpack.c.h.b16 %v4440
    %v4444 = vpack.c.b16 %v4442, %v4442
    %v4445 = vpack.c.b16 %v4443, %v4443
    %4448 = vst.msk [vmem:[#allocation6 + $0x28] sm:$0xf] %vm3386, %v4444
    %4449 = vst.msk [vmem:[#allocation6 + $0x2c] sm:$0xf] %vm3386, %v4445
    %v4450 = vld [vmem:[#allocation4 + $0x30] sm:$0xf]
    %v4451 = vld [vmem:[#allocation4 + $0x34] sm:$0xf]
    %s4452 = scalar_lea.vmem [#allocation12], 240
    %v4453 = vld [vmem:[%s4452] sm:$0xf]
    %v4454 = vld [vmem:[%s4452 + $0x4] sm:$0xf]
    %v4455 = vld [vmem:[%s4452 + $0x8] sm:$0xf]
    %v4456 = vld [vmem:[%s4452 + $0xc] sm:$0xf]
    %v4457 = vld [vmem:[%s4452 + $0x10] sm:$0xf]
    %v4458 = vld [vmem:[%s4452 + $0x14] sm:$0xf]
    %v4459 = vld [vmem:[%s4452 + $0x18] sm:$0xf]
    %v4460 = vld [vmem:[%s4452 + $0x1c] sm:$0xf]
    %v4461 = vld [vmem:[%s4452 + $0x20] sm:$0xf]
    %v4462 = vld [vmem:[%s4452 + $0x24] sm:$0xf]
    %v4465 = vunpack.c.l.b16 %v4450
    %v4466 = vunpack.c.l.b16 %v4451
    %v4467 = vpack.c.b16 %v4466, %v4465
    %v4478 = vunpack.c.l.b16 %v4453
    %v4479 = vunpack.c.l.b16 %v4454
    %v4480 = vunpack.c.l.b16 %v4455
    %v4481 = vunpack.c.l.b16 %v4456
    %v4482 = vunpack.c.l.b16 %v4457
    %v4483 = vunpack.c.l.b16 %v4458
    %v4484 = vunpack.c.l.b16 %v4459
    %v4485 = vunpack.c.l.b16 %v4460
    %v4486 = vunpack.c.l.b16 %v4461
    %v4487 = vunpack.c.l.b16 %v4462
    %v4488 = vpack.c.b16 %v4479, %v4478
    %v4489 = vpack.c.b16 %v4481, %v4480
    %v4490 = vpack.c.b16 %v4483, %v4482
    %v4491 = vpack.c.b16 %v4485, %v4484
    %v4492 = vpack.c.b16 %v4487, %v4486
    %v4499 = vsel %vm3333, %v4467, 0
    %4501 = vmatprep.subr.bf16.mxu0 0
    %4502 = vmatpush1.bf16.msra.mxu0 0
    %4503 = vmatprep.subr.bf16.mxu0 0
    %4504 = vmatpush1.bf16.msra.mxu0 0
    %4505 = vmatprep.subr.bf16.mxu0 0
    %4506 = vmatpush1.bf16.msra.mxu0 0
    %4507 = vmatprep.subr.bf16.mxu0 0
    %4508 = vmatpush1.bf16.msra.mxu0 %v4492
    %4509 = vmatprep.subr.bf16.mxu0 0
    %4510 = vmatpush1.bf16.msra.mxu0 %v4491
    %4511 = vmatprep.subr.bf16.mxu0 0
    %4512 = vmatpush1.bf16.msra.mxu0 %v4490
    %4513 = vmatprep.subr.bf16.mxu0 0
    %4514 = vmatpush1.bf16.msra.mxu0 %v4489
    %4515 = vmatprep.subr.bf16.mxu0 0
    %4516 = vmatpush1.bf16.msra.mxu0 %v4488
    %4517 = vmatprep.subr.bf16.mxu0 0
    %4518 = vmatpush2.bf16.msra.mxu0 0
    %4519 = vmatprep.subr.bf16.mxu0 0
    %4520 = vmatpush2.bf16.msra.mxu0 0
    %4521 = vmatprep.subr.bf16.mxu0 0
    %4522 = vmatpush2.bf16.msra.mxu0 0
    %4523 = vmatprep.subr.bf16.mxu0 0
    %4524 = vmatpush2.bf16.msra.mxu0 0
    %4525 = vmatprep.subr.bf16.mxu0 0
    %4526 = vmatpush2.bf16.msra.mxu0 0
    %4527 = vmatprep.subr.bf16.mxu0 0
    %4528 = vmatpush2.bf16.msra.mxu0 0
    %4529 = vmatprep.subr.bf16.mxu0 0
    %4530 = vmatpush2.bf16.msra.mxu0 0
    %4531 = vmatprep.subr.bf16.mxu0 0
    %4532 = vmatpush2.bf16.msra.mxu0 0
    %4533 = vmatprep.mubr.bf16.mxu0 0
    %4534 = vmatmul.mubr.bf16.gmra.mxu0 %v4499
    %v4535 = vpop.f32.mrf.mxu0
    %v4536 = vadd.f32 0.0, %v4535
    %v4537 = vpop.f32.mrf.mxu0
    %v4538 = vpop.f32.mrf.mxu0
    %v4539 = vadd.f32 0.0, %v4538
    %v4540 = vpop.f32.mrf.mxu0
    %4541 = vdwg.mxu0
    %v4542 = vpack.c.bf16 %v4539, %v4536
    %v4544 = vunpack.c.l.b16 %v4542
    %v4545 = vunpack.c.h.b16 %v4542
    %v4546 = vpack.c.b16 %v4544, %v4544
    %v4547 = vpack.c.b16 %v4545, %v4545
    %4550 = vst.msk [vmem:[#allocation5 + $0x30] sm:$0xf] %vm3386, %v4546
    %4551 = vst.msk [vmem:[#allocation5 + $0x34] sm:$0xf] %vm3386, %v4547
    %s4552 = scalar_lea.vmem %s6, 240
    %v4553 = vld [vmem:[%s4552] sm:$0xf]
    %v4554 = vld [vmem:[%s4552 + $0x4] sm:$0xf]
    %v4555 = vld [vmem:[%s4552 + $0x8] sm:$0xf]
    %v4556 = vld [vmem:[%s4552 + $0xc] sm:$0xf]
    %v4557 = vld [vmem:[%s4552 + $0x10] sm:$0xf]
    %v4558 = vld [vmem:[%s4552 + $0x14] sm:$0xf]
    %v4559 = vld [vmem:[%s4552 + $0x18] sm:$0xf]
    %v4560 = vld [vmem:[%s4552 + $0x1c] sm:$0xf]
    %v4561 = vld [vmem:[%s4552 + $0x20] sm:$0xf]
    %v4562 = vld [vmem:[%s4552 + $0x24] sm:$0xf]
    %v4573 = vunpack.c.l.b16 %v4553
    %v4574 = vunpack.c.l.b16 %v4554
    %v4575 = vunpack.c.l.b16 %v4555
    %v4576 = vunpack.c.l.b16 %v4556
    %v4577 = vunpack.c.l.b16 %v4557
    %v4578 = vunpack.c.l.b16 %v4558
    %v4579 = vunpack.c.l.b16 %v4559
    %v4580 = vunpack.c.l.b16 %v4560
    %v4581 = vunpack.c.l.b16 %v4561
    %v4582 = vunpack.c.l.b16 %v4562
    %v4583 = vpack.c.b16 %v4574, %v4573
    %v4584 = vpack.c.b16 %v4576, %v4575
    %v4585 = vpack.c.b16 %v4578, %v4577
    %v4586 = vpack.c.b16 %v4580, %v4579
    %v4587 = vpack.c.b16 %v4582, %v4581
    %4593 = vmatprep.subr.bf16.mxu0 0
    %4594 = vmatpush1.bf16.msra.mxu0 0
    %4595 = vmatprep.subr.bf16.mxu0 0
    %4596 = vmatpush1.bf16.msra.mxu0 0
    %4597 = vmatprep.subr.bf16.mxu0 0
    %4598 = vmatpush1.bf16.msra.mxu0 0
    %4599 = vmatprep.subr.bf16.mxu0 0
    %4600 = vmatpush1.bf16.msra.mxu0 %v4587
    %4601 = vmatprep.subr.bf16.mxu0 0
    %4602 = vmatpush1.bf16.msra.mxu0 %v4586
    %4603 = vmatprep.subr.bf16.mxu0 0
    %4604 = vmatpush1.bf16.msra.mxu0 %v4585
    %4605 = vmatprep.subr.bf16.mxu0 0
    %4606 = vmatpush1.bf16.msra.mxu0 %v4584
    %4607 = vmatprep.subr.bf16.mxu0 0
    %4608 = vmatpush1.bf16.msra.mxu0 %v4583
    %4609 = vmatprep.subr.bf16.mxu0 0
    %4610 = vmatpush2.bf16.msra.mxu0 0
    %4611 = vmatprep.subr.bf16.mxu0 0
    %4612 = vmatpush2.bf16.msra.mxu0 0
    %4613 = vmatprep.subr.bf16.mxu0 0
    %4614 = vmatpush2.bf16.msra.mxu0 0
    %4615 = vmatprep.subr.bf16.mxu0 0
    %4616 = vmatpush2.bf16.msra.mxu0 0
    %4617 = vmatprep.subr.bf16.mxu0 0
    %4618 = vmatpush2.bf16.msra.mxu0 0
    %4619 = vmatprep.subr.bf16.mxu0 0
    %4620 = vmatpush2.bf16.msra.mxu0 0
    %4621 = vmatprep.subr.bf16.mxu0 0
    %4622 = vmatpush2.bf16.msra.mxu0 0
    %4623 = vmatprep.subr.bf16.mxu0 0
    %4624 = vmatpush2.bf16.msra.mxu0 0
    %4625 = vmatprep.mubr.bf16.mxu0 0
    %4626 = vmatmul.mubr.bf16.gmra.mxu0 %v4499
    %v4627 = vpop.f32.mrf.mxu0
    %v4628 = vadd.f32 0.0, %v4627
    %v4629 = vpop.f32.mrf.mxu0
    %v4630 = vpop.f32.mrf.mxu0
    %v4631 = vadd.f32 0.0, %v4630
    %v4632 = vpop.f32.mrf.mxu0
    %4633 = vdwg.mxu0
    %v4634 = vpack.c.bf16 %v4631, %v4628
    %v4636 = vunpack.c.l.b16 %v4634
    %v4637 = vunpack.c.h.b16 %v4634
    %v4638 = vpack.c.b16 %v4636, %v4636
    %v4639 = vpack.c.b16 %v4637, %v4637
    %4642 = vst.msk [vmem:[#allocation6 + $0x30] sm:$0xf] %vm3386, %v4638
    %4643 = vst.msk [vmem:[#allocation6 + $0x34] sm:$0xf] %vm3386, %v4639
    %v4644 = vld [vmem:[#allocation4 + $0x38] sm:$0xf]
    %v4645 = vld [vmem:[#allocation4 + $0x3c] sm:$0xf]
    %s4646 = scalar_lea.vmem [#allocation12], 280
    %v4647 = vld [vmem:[%s4646] sm:$0xf]
    %v4648 = vld [vmem:[%s4646 + $0x4] sm:$0xf]
    %v4649 = vld [vmem:[%s4646 + $0x8] sm:$0xf]
    %v4650 = vld [vmem:[%s4646 + $0xc] sm:$0xf]
    %v4651 = vld [vmem:[%s4646 + $0x10] sm:$0xf]
    %v4652 = vld [vmem:[%s4646 + $0x14] sm:$0xf]
    %v4653 = vld [vmem:[%s4646 + $0x18] sm:$0xf]
    %v4654 = vld [vmem:[%s4646 + $0x1c] sm:$0xf]
    %v4655 = vld [vmem:[%s4646 + $0x20] sm:$0xf]
    %v4656 = vld [vmem:[%s4646 + $0x24] sm:$0xf]
    %v4659 = vunpack.c.l.b16 %v4644
    %v4660 = vunpack.c.l.b16 %v4645
    %v4661 = vpack.c.b16 %v4660, %v4659
    %v4672 = vunpack.c.l.b16 %v4647
    %v4673 = vunpack.c.l.b16 %v4648
    %v4674 = vunpack.c.l.b16 %v4649
    %v4675 = vunpack.c.l.b16 %v4650
    %v4676 = vunpack.c.l.b16 %v4651
    %v4677 = vunpack.c.l.b16 %v4652
    %v4678 = vunpack.c.l.b16 %v4653
    %v4679 = vunpack.c.l.b16 %v4654
    %v4680 = vunpack.c.l.b16 %v4655
    %v4681 = vunpack.c.l.b16 %v4656
    %v4682 = vpack.c.b16 %v4673, %v4672
    %v4683 = vpack.c.b16 %v4675, %v4674
    %v4684 = vpack.c.b16 %v4677, %v4676
    %v4685 = vpack.c.b16 %v4679, %v4678
    %v4686 = vpack.c.b16 %v4681, %v4680
    %v4693 = vsel %vm3333, %v4661, 0
    %4695 = vmatprep.subr.bf16.mxu0 0
    %4696 = vmatpush1.bf16.msra.mxu0 0
    %4697 = vmatprep.subr.bf16.mxu0 0
    %4698 = vmatpush1.bf16.msra.mxu0 0
    %4699 = vmatprep.subr.bf16.mxu0 0
    %4700 = vmatpush1.bf16.msra.mxu0 0
    %4701 = vmatprep.subr.bf16.mxu0 0
    %4702 = vmatpush1.bf16.msra.mxu0 %v4686
    %4703 = vmatprep.subr.bf16.mxu0 0
    %4704 = vmatpush1.bf16.msra.mxu0 %v4685
    %4705 = vmatprep.subr.bf16.mxu0 0
    %4706 = vmatpush1.bf16.msra.mxu0 %v4684
    %4707 = vmatprep.subr.bf16.mxu0 0
    %4708 = vmatpush1.bf16.msra.mxu0 %v4683
    %4709 = vmatprep.subr.bf16.mxu0 0
    %4710 = vmatpush1.bf16.msra.mxu0 %v4682
    %4711 = vmatprep.subr.bf16.mxu0 0
    %4712 = vmatpush2.bf16.msra.mxu0 0
    %4713 = vmatprep.subr.bf16.mxu0 0
    %4714 = vmatpush2.bf16.msra.mxu0 0
    %4715 = vmatprep.subr.bf16.mxu0 0
    %4716 = vmatpush2.bf16.msra.mxu0 0
    %4717 = vmatprep.subr.bf16.mxu0 0
    %4718 = vmatpush2.bf16.msra.mxu0 0
    %4719 = vmatprep.subr.bf16.mxu0 0
    %4720 = vmatpush2.bf16.msra.mxu0 0
    %4721 = vmatprep.subr.bf16.mxu0 0
    %4722 = vmatpush2.bf16.msra.mxu0 0
    %4723 = vmatprep.subr.bf16.mxu0 0
    %4724 = vmatpush2.bf16.msra.mxu0 0
    %4725 = vmatprep.subr.bf16.mxu0 0
    %4726 = vmatpush2.bf16.msra.mxu0 0
    %4727 = vmatprep.mubr.bf16.mxu0 0
    %4728 = vmatmul.mubr.bf16.gmra.mxu0 %v4693
    %v4729 = vpop.f32.mrf.mxu0
    %v4730 = vadd.f32 0.0, %v4729
    %v4731 = vpop.f32.mrf.mxu0
    %v4732 = vpop.f32.mrf.mxu0
    %v4733 = vadd.f32 0.0, %v4732
    %v4734 = vpop.f32.mrf.mxu0
    %4735 = vdwg.mxu0
    %v4736 = vpack.c.bf16 %v4733, %v4730
    %v4738 = vunpack.c.l.b16 %v4736
    %v4739 = vunpack.c.h.b16 %v4736
    %v4740 = vpack.c.b16 %v4738, %v4738
    %v4741 = vpack.c.b16 %v4739, %v4739
    %4744 = vst.msk [vmem:[#allocation5 + $0x38] sm:$0xf] %vm3386, %v4740
    %4745 = vst.msk [vmem:[#allocation5 + $0x3c] sm:$0xf] %vm3386, %v4741
    %s4746 = scalar_lea.vmem %s6, 280
    %v4747 = vld [vmem:[%s4746] sm:$0xf]
    %v4748 = vld [vmem:[%s4746 + $0x4] sm:$0xf]
    %v4749 = vld [vmem:[%s4746 + $0x8] sm:$0xf]
    %v4750 = vld [vmem:[%s4746 + $0xc] sm:$0xf]
    %v4751 = vld [vmem:[%s4746 + $0x10] sm:$0xf]
    %v4752 = vld [vmem:[%s4746 + $0x14] sm:$0xf]
    %v4753 = vld [vmem:[%s4746 + $0x18] sm:$0xf]
    %v4754 = vld [vmem:[%s4746 + $0x1c] sm:$0xf]
    %v4755 = vld [vmem:[%s4746 + $0x20] sm:$0xf]
    %v4756 = vld [vmem:[%s4746 + $0x24] sm:$0xf]
    %v4767 = vunpack.c.l.b16 %v4747
    %v4768 = vunpack.c.l.b16 %v4748
    %v4769 = vunpack.c.l.b16 %v4749
    %v4770 = vunpack.c.l.b16 %v4750
    %v4771 = vunpack.c.l.b16 %v4751
    %v4772 = vunpack.c.l.b16 %v4752
    %v4773 = vunpack.c.l.b16 %v4753
    %v4774 = vunpack.c.l.b16 %v4754
    %v4775 = vunpack.c.l.b16 %v4755
    %v4776 = vunpack.c.l.b16 %v4756
    %v4777 = vpack.c.b16 %v4768, %v4767
    %v4778 = vpack.c.b16 %v4770, %v4769
    %v4779 = vpack.c.b16 %v4772, %v4771
    %v4780 = vpack.c.b16 %v4774, %v4773
    %v4781 = vpack.c.b16 %v4776, %v4775
    %4787 = vmatprep.subr.bf16.mxu0 0
    %4788 = vmatpush1.bf16.msra.mxu0 0
    %4789 = vmatprep.subr.bf16.mxu0 0
    %4790 = vmatpush1.bf16.msra.mxu0 0
    %4791 = vmatprep.subr.bf16.mxu0 0
    %4792 = vmatpush1.bf16.msra.mxu0 0
    %4793 = vmatprep.subr.bf16.mxu0 0
    %4794 = vmatpush1.bf16.msra.mxu0 %v4781
    %4795 = vmatprep.subr.bf16.mxu0 0
    %4796 = vmatpush1.bf16.msra.mxu0 %v4780
    %4797 = vmatprep.subr.bf16.mxu0 0
    %4798 = vmatpush1.bf16.msra.mxu0 %v4779
    %4799 = vmatprep.subr.bf16.mxu0 0
    %4800 = vmatpush1.bf16.msra.mxu0 %v4778
    %4801 = vmatprep.subr.bf16.mxu0 0
    %4802 = vmatpush1.bf16.msra.mxu0 %v4777
    %4803 = vmatprep.subr.bf16.mxu0 0
    %4804 = vmatpush2.bf16.msra.mxu0 0
    %4805 = vmatprep.subr.bf16.mxu0 0
    %4806 = vmatpush2.bf16.msra.mxu0 0
    %4807 = vmatprep.subr.bf16.mxu0 0
    %4808 = vmatpush2.bf16.msra.mxu0 0
    %4809 = vmatprep.subr.bf16.mxu0 0
    %4810 = vmatpush2.bf16.msra.mxu0 0
    %4811 = vmatprep.subr.bf16.mxu0 0
    %4812 = vmatpush2.bf16.msra.mxu0 0
    %4813 = vmatprep.subr.bf16.mxu0 0
    %4814 = vmatpush2.bf16.msra.mxu0 0
    %4815 = vmatprep.subr.bf16.mxu0 0
    %4816 = vmatpush2.bf16.msra.mxu0 0
    %4817 = vmatprep.subr.bf16.mxu0 0
    %4818 = vmatpush2.bf16.msra.mxu0 0
    %4819 = vmatprep.mubr.bf16.mxu0 0
    %4820 = vmatmul.mubr.bf16.gmra.mxu0 %v4693
    %v4821 = vpop.f32.mrf.mxu0
    %v4822 = vadd.f32 0.0, %v4821
    %v4823 = vpop.f32.mrf.mxu0
    %v4824 = vpop.f32.mrf.mxu0
    %v4825 = vadd.f32 0.0, %v4824
    %v4826 = vpop.f32.mrf.mxu0
    %4827 = vdwg.mxu0
    %v4828 = vpack.c.bf16 %v4825, %v4822
    %v4830 = vunpack.c.l.b16 %v4828
    %v4831 = vunpack.c.h.b16 %v4828
    %v4832 = vpack.c.b16 %v4830, %v4830
    %v4833 = vpack.c.b16 %v4831, %v4831
    %4836 = vst.msk [vmem:[#allocation6 + $0x38] sm:$0xf] %vm3386, %v4832
    %4837 = vst.msk [vmem:[#allocation6 + $0x3c] sm:$0xf] %vm3386, %v4833
    %v4838 = vld [vmem:[#allocation13] sm:$0xf]
    %v4839 = vld [vmem:[#allocation13 + $0x4] sm:$0xf]
    %v4840 = vld [vmem:[#allocation13 + $0x8] sm:$0xf]
    %v4841 = vld [vmem:[#allocation13 + $0xc] sm:$0xf]
    %v4842 = vld [vmem:[#allocation13 + $0x10] sm:$0xf]
    %v4843 = vld [vmem:[#allocation13 + $0x14] sm:$0xf]
    %v4844 = vld [vmem:[#allocation13 + $0x18] sm:$0xf]
    %v4845 = vld [vmem:[#allocation13 + $0x1c] sm:$0xf]
    %v4846 = vld [vmem:[#allocation5] sm:$0xf]
    %v4847 = vld [vmem:[#allocation5 + $0x4] sm:$0xf]
    %v4848 = vld [vmem:[#allocation5 + $0x8] sm:$0xf]
    %v4849 = vld [vmem:[#allocation5 + $0xc] sm:$0xf]
    %v4850 = vld [vmem:[#allocation5 + $0x10] sm:$0xf]
    %v4851 = vld [vmem:[#allocation5 + $0x14] sm:$0xf]
    %v4852 = vld [vmem:[#allocation5 + $0x18] sm:$0xf]
    %v4853 = vld [vmem:[#allocation5 + $0x1c] sm:$0xf]
    %v4854 = vld [vmem:[#allocation5 + $0x20] sm:$0xf]
    %v4855 = vld [vmem:[#allocation5 + $0x24] sm:$0xf]
    %v4856 = vld [vmem:[#allocation5 + $0x28] sm:$0xf]
    %v4857 = vld [vmem:[#allocation5 + $0x2c] sm:$0xf]
    %v4858 = vld [vmem:[#allocation5 + $0x30] sm:$0xf]
    %v4859 = vld [vmem:[#allocation5 + $0x34] sm:$0xf]
    %v4860 = vld [vmem:[#allocation5 + $0x38] sm:$0xf]
    %v4861 = vld [vmem:[#allocation5 + $0x3c] sm:$0xf]
    %v4862 = vld [vmem:[#allocation15] sm:$0xf]
    %v4863 = vld [vmem:[#allocation15 + $0x4] sm:$0xf]
    %v4864 = vld [vmem:[#allocation15 + $0x8] sm:$0xf]
    %v4865 = vld [vmem:[#allocation15 + $0xc] sm:$0xf]
    %v4866 = vld [vmem:[#allocation15 + $0x10] sm:$0xf]
    %v4867 = vld [vmem:[#allocation15 + $0x14] sm:$0xf]
    %v4868 = vld [vmem:[#allocation15 + $0x18] sm:$0xf]
    %v4869 = vld [vmem:[#allocation15 + $0x1c] sm:$0xf]
    %v4870 = vld [vmem:[#allocation6] sm:$0xf]
    %v4871 = vld [vmem:[#allocation6 + $0x4] sm:$0xf]
    %v4872 = vld [vmem:[#allocation6 + $0x8] sm:$0xf]
    %v4873 = vld [vmem:[#allocation6 + $0xc] sm:$0xf]
    %v4874 = vld [vmem:[#allocation6 + $0x10] sm:$0xf]
    %v4875 = vld [vmem:[#allocation6 + $0x14] sm:$0xf]
    %v4876 = vld [vmem:[#allocation6 + $0x18] sm:$0xf]
    %v4877 = vld [vmem:[#allocation6 + $0x1c] sm:$0xf]
    %v4878 = vld [vmem:[#allocation6 + $0x20] sm:$0xf]
    %v4879 = vld [vmem:[#allocation6 + $0x24] sm:$0xf]
    %v4880 = vld [vmem:[#allocation6 + $0x28] sm:$0xf]
    %v4881 = vld [vmem:[#allocation6 + $0x2c] sm:$0xf]
    %v4882 = vld [vmem:[#allocation6 + $0x30] sm:$0xf]
    %v4883 = vld [vmem:[#allocation6 + $0x34] sm:$0xf]
    %v4884 = vld [vmem:[#allocation6 + $0x38] sm:$0xf]
    %v4885 = vld [vmem:[#allocation6 + $0x3c] sm:$0xf]
    %v4894 = vunpack.c.l.b16 %v4862
    %v4895 = vunpack.c.l.b16 %v4863
    %v4896 = vunpack.c.l.b16 %v4864
    %v4897 = vunpack.c.l.b16 %v4865
    %v4898 = vunpack.c.l.b16 %v4866
    %v4899 = vunpack.c.l.b16 %v4867
    %v4900 = vunpack.c.l.b16 %v4868
    %v4901 = vunpack.c.l.b16 %v4869
    %v4902 = vpack.c.b16 %v4895, %v4894
    %v4903 = vpack.c.b16 %v4897, %v4896
    %v4904 = vpack.c.b16 %v4899, %v4898
    %v4905 = vpack.c.b16 %v4901, %v4900
    %v4926 = vunpack.c.l.b16 %v4870
    %v4927 = vunpack.c.l.b16 %v4871
    %v4928 = vunpack.c.l.b16 %v4872
    %v4929 = vunpack.c.l.b16 %v4873
    %v4930 = vunpack.c.l.b16 %v4874
    %v4931 = vunpack.c.l.b16 %v4875
    %v4932 = vunpack.c.l.b16 %v4876
    %v4933 = vunpack.c.l.b16 %v4877
    %v4934 = vunpack.c.l.b16 %v4878
    %v4935 = vunpack.c.l.b16 %v4879
    %v4936 = vunpack.c.l.b16 %v4880
    %v4937 = vunpack.c.l.b16 %v4881
    %v4938 = vunpack.c.l.b16 %v4882
    %v4939 = vunpack.c.l.b16 %v4883
    %v4940 = vunpack.c.l.b16 %v4884
    %v4941 = vunpack.c.l.b16 %v4885
    %v4942 = vpack.c.b16 %v4927, %v4926
    %v4943 = vpack.c.b16 %v4929, %v4928
    %v4944 = vpack.c.b16 %v4931, %v4930
    %v4945 = vpack.c.b16 %v4933, %v4932
    %v4946 = vpack.c.b16 %v4935, %v4934
    %v4947 = vpack.c.b16 %v4937, %v4936
    %v4948 = vpack.c.b16 %v4939, %v4938
    %v4949 = vpack.c.b16 %v4941, %v4940
    %4958 = vmatprep.subr.bf16.mxu0 0
    %4959 = vmatpush1.bf16.msra.mxu0 %v4949
    %4960 = vmatprep.subr.bf16.mxu0 0
    %4961 = vmatpush1.bf16.msra.mxu0 %v4948
    %4962 = vmatprep.subr.bf16.mxu0 0
    %4963 = vmatpush1.bf16.msra.mxu0 %v4947
    %4964 = vmatprep.subr.bf16.mxu0 0
    %4965 = vmatpush1.bf16.msra.mxu0 %v4946
    %4966 = vmatprep.subr.bf16.mxu0 0
    %4967 = vmatpush1.bf16.msra.mxu0 %v4945
    %4968 = vmatprep.subr.bf16.mxu0 0
    %4969 = vmatpush1.bf16.msra.mxu0 %v4944
    %4970 = vmatprep.subr.bf16.mxu0 0
    %4971 = vmatpush1.bf16.msra.mxu0 %v4943
    %4972 = vmatprep.subr.bf16.mxu0 0
    %4973 = vmatpush1.bf16.msra.mxu0 %v4942
    %4974 = vmatprep.subr.bf16.mxu0 0
    %4975 = vmatpush2.bf16.msra.mxu0 0
    %4976 = vmatprep.subr.bf16.mxu0 0
    %4977 = vmatpush2.bf16.msra.mxu0 0
    %4978 = vmatprep.subr.bf16.mxu0 0
    %4979 = vmatpush2.bf16.msra.mxu0 0
    %4980 = vmatprep.subr.bf16.mxu0 0
    %4981 = vmatpush2.bf16.msra.mxu0 0
    %4982 = vmatprep.subr.bf16.mxu0 0
    %4983 = vmatpush2.bf16.msra.mxu0 0
    %4984 = vmatprep.subr.bf16.mxu0 0
    %4985 = vmatpush2.bf16.msra.mxu0 0
    %4986 = vmatprep.subr.bf16.mxu0 0
    %4987 = vmatpush2.bf16.msra.mxu0 0
    %4988 = vmatprep.subr.bf16.mxu0 0
    %4989 = vmatpush2.bf16.msra.mxu0 0
    %4990 = vmatprep.mubr.bf16.mxu0 0
    %4991 = vmatmul.mubr.bf16.gmra.mxu0 %v4902
    %v4992 = vpop.f32.mrf.mxu0
    %v4993 = vadd.f32 0.0, %v4992
    %v4994 = vpop.f32.mrf.mxu0
    %v4995 = vpop.f32.mrf.mxu0
    %v4996 = vadd.f32 0.0, %v4995
    %v4997 = vpop.f32.mrf.mxu0
    %4998 = vmatprep.mubr.bf16.mxu0 0
    %4999 = vmatmul.mubr.bf16.gmra.mxu0 %v4903
    %v5000 = vpop.f32.mrf.mxu0
    %v5001 = vadd.f32 0.0, %v5000
    %v5002 = vpop.f32.mrf.mxu0
    %v5003 = vpop.f32.mrf.mxu0
    %v5004 = vadd.f32 0.0, %v5003
    %v5005 = vpop.f32.mrf.mxu0
    %5006 = vmatprep.mubr.bf16.mxu0 0
    %5007 = vmatmul.mubr.bf16.gmra.mxu0 %v4904
    %v5008 = vpop.f32.mrf.mxu0
    %v5009 = vadd.f32 0.0, %v5008
    %v5010 = vpop.f32.mrf.mxu0
    %v5011 = vpop.f32.mrf.mxu0
    %v5012 = vadd.f32 0.0, %v5011
    %v5013 = vpop.f32.mrf.mxu0
    %5014 = vmatprep.mubr.bf16.mxu0 0
    %5015 = vmatmul.mubr.bf16.gmra.mxu0 %v4905
    %v5016 = vpop.f32.mrf.mxu0
    %v5017 = vadd.f32 0.0, %v5016
    %v5018 = vpop.f32.mrf.mxu0
    %v5019 = vpop.f32.mrf.mxu0
    %v5020 = vadd.f32 0.0, %v5019
    %v5021 = vpop.f32.mrf.mxu0
    %5022 = vdwg.mxu0
    %v5031 = vunpack.c.l.b16 %v4838
    %v5032 = vunpack.c.l.b16 %v4839
    %v5033 = vunpack.c.l.b16 %v4840
    %v5034 = vunpack.c.l.b16 %v4841
    %v5035 = vunpack.c.l.b16 %v4842
    %v5036 = vunpack.c.l.b16 %v4843
    %v5037 = vunpack.c.l.b16 %v4844
    %v5038 = vunpack.c.l.b16 %v4845
    %v5039 = vpack.c.b16 %v5032, %v5031
    %v5040 = vpack.c.b16 %v5034, %v5033
    %v5041 = vpack.c.b16 %v5036, %v5035
    %v5042 = vpack.c.b16 %v5038, %v5037
    %v5063 = vunpack.c.l.b16 %v4846
    %v5064 = vunpack.c.l.b16 %v4847
    %v5065 = vunpack.c.l.b16 %v4848
    %v5066 = vunpack.c.l.b16 %v4849
    %v5067 = vunpack.c.l.b16 %v4850
    %v5068 = vunpack.c.l.b16 %v4851
    %v5069 = vunpack.c.l.b16 %v4852
    %v5070 = vunpack.c.l.b16 %v4853
    %v5071 = vunpack.c.l.b16 %v4854
    %v5072 = vunpack.c.l.b16 %v4855
    %v5073 = vunpack.c.l.b16 %v4856
    %v5074 = vunpack.c.l.b16 %v4857
    %v5075 = vunpack.c.l.b16 %v4858
    %v5076 = vunpack.c.l.b16 %v4859
    %v5077 = vunpack.c.l.b16 %v4860
    %v5078 = vunpack.c.l.b16 %v4861
    %v5079 = vpack.c.b16 %v5064, %v5063
    %v5080 = vpack.c.b16 %v5066, %v5065
    %v5081 = vpack.c.b16 %v5068, %v5067
    %v5082 = vpack.c.b16 %v5070, %v5069
    %v5083 = vpack.c.b16 %v5072, %v5071
    %v5084 = vpack.c.b16 %v5074, %v5073
    %v5085 = vpack.c.b16 %v5076, %v5075
    %v5086 = vpack.c.b16 %v5078, %v5077
    %5095 = vmatprep.subr.bf16.mxu0 0
    %5096 = vmatpush1.bf16.msra.mxu0 %v5086
    %5097 = vmatprep.subr.bf16.mxu0 0
    %5098 = vmatpush1.bf16.msra.mxu0 %v5085
    %5099 = vmatprep.subr.bf16.mxu0 0
    %5100 = vmatpush1.bf16.msra.mxu0 %v5084
    %5101 = vmatprep.subr.bf16.mxu0 0
    %5102 = vmatpush1.bf16.msra.mxu0 %v5083
    %5103 = vmatprep.subr.bf16.mxu0 0
    %5104 = vmatpush1.bf16.msra.mxu0 %v5082
    %5105 = vmatprep.subr.bf16.mxu0 0
    %5106 = vmatpush1.bf16.msra.mxu0 %v5081
    %5107 = vmatprep.subr.bf16.mxu0 0
    %5108 = vmatpush1.bf16.msra.mxu0 %v5080
    %5109 = vmatprep.subr.bf16.mxu0 0
    %5110 = vmatpush1.bf16.msra.mxu0 %v5079
    %5111 = vmatprep.subr.bf16.mxu0 0
    %5112 = vmatpush2.bf16.msra.mxu0 0
    %5113 = vmatprep.subr.bf16.mxu0 0
    %5114 = vmatpush2.bf16.msra.mxu0 0
    %5115 = vmatprep.subr.bf16.mxu0 0
    %5116 = vmatpush2.bf16.msra.mxu0 0
    %5117 = vmatprep.subr.bf16.mxu0 0
    %5118 = vmatpush2.bf16.msra.mxu0 0
    %5119 = vmatprep.subr.bf16.mxu0 0
    %5120 = vmatpush2.bf16.msra.mxu0 0
    %5121 = vmatprep.subr.bf16.mxu0 0
    %5122 = vmatpush2.bf16.msra.mxu0 0
    %5123 = vmatprep.subr.bf16.mxu0 0
    %5124 = vmatpush2.bf16.msra.mxu0 0
    %5125 = vmatprep.subr.bf16.mxu0 0
    %5126 = vmatpush2.bf16.msra.mxu0 0
    %5127 = vmatprep.mubr.bf16.mxu0 0
    %5128 = vmatmul.mubr.bf16.gmra.mxu0 %v5039
    %v5129 = vpop.f32.mrf.mxu0
    %v5130 = vadd.f32 %v4993, %v5129
    %v5131 = vpop.f32.mrf.mxu0
    %v5132 = vpop.f32.mrf.mxu0
    %v5133 = vadd.f32 %v4996, %v5132
    %v5134 = vpop.f32.mrf.mxu0
    %5135 = vmatprep.mubr.bf16.mxu0 0
    %5136 = vmatmul.mubr.bf16.gmra.mxu0 %v5040
    %v5137 = vpop.f32.mrf.mxu0
    %v5138 = vadd.f32 %v5001, %v5137
    %v5139 = vpop.f32.mrf.mxu0
    %v5140 = vpop.f32.mrf.mxu0
    %v5141 = vadd.f32 %v5004, %v5140
    %v5142 = vpop.f32.mrf.mxu0
    %5143 = vmatprep.mubr.bf16.mxu0 0
    %5144 = vmatmul.mubr.bf16.gmra.mxu0 %v5041
    %v5145 = vpop.f32.mrf.mxu0
    %v5146 = vadd.f32 %v5009, %v5145
    %v5147 = vpop.f32.mrf.mxu0
    %v5148 = vpop.f32.mrf.mxu0
    %v5149 = vadd.f32 %v5012, %v5148
    %v5150 = vpop.f32.mrf.mxu0
    %5151 = vmatprep.mubr.bf16.mxu0 0
    %5152 = vmatmul.mubr.bf16.gmra.mxu0 %v5042
    %v5153 = vpop.f32.mrf.mxu0
    %v5154 = vadd.f32 %v5017, %v5153
    %v5155 = vpop.f32.mrf.mxu0
    %v5156 = vpop.f32.mrf.mxu0
    %v5157 = vadd.f32 %v5020, %v5156
    %v5158 = vpop.f32.mrf.mxu0
    %5159 = vdwg.mxu0
    %v5160 = vld [vmem:[#allocation16] sm:$0xff]
    %v5161 = vld [vmem:[#allocation16 + $0x8] sm:$0xff]
    %v5162 = vld [vmem:[#allocation16 + $0x10] sm:$0xff]
    %v5163 = vld [vmem:[#allocation16 + $0x18] sm:$0xff]
    %v5164 = vld [vmem:[#allocation16 + $0x20] sm:$0xff]
    %v5165 = vld [vmem:[#allocation16 + $0x28] sm:$0xff]
    %v5166 = vld [vmem:[#allocation16 + $0x30] sm:$0xff]
    %v5167 = vld [vmem:[#allocation16 + $0x38] sm:$0xff]
    %v5168 = vadd.f32 %v5130, %v5160
    %v5169 = vadd.f32 %v5133, %v5161
    %v5170 = vadd.f32 %v5138, %v5162
    %v5171 = vadd.f32 %v5141, %v5163
    %v5172 = vadd.f32 %v5146, %v5164
    %v5173 = vadd.f32 %v5149, %v5165
    %v5174 = vadd.f32 %v5154, %v5166
    %v5175 = vadd.f32 %v5157, %v5167
    %v5176 = vmax.f32 %v5168, 0.0
    %v5177 = vmax.f32 %v5169, 0.0
    %v5178 = vmax.f32 %v5170, 0.0
    %v5179 = vmax.f32 %v5171, 0.0
    %v5180 = vmax.f32 %v5172, 0.0
    %v5181 = vmax.f32 %v5173, 0.0
    %v5182 = vmax.f32 %v5174, 0.0
    %v5183 = vmax.f32 %v5175, 0.0
    %v5184 = vld [vmem:[#allocation18] sm:$0xff]
    %v5185 = vld [vmem:[#allocation18 + $0x8] sm:$0xff]
    %v5186 = vld [vmem:[#allocation18 + $0x10] sm:$0xff]
    %v5187 = vld [vmem:[#allocation18 + $0x18] sm:$0xff]
    %v5188 = vld [vmem:[#allocation18 + $0x20] sm:$0xff]
    %vm5189 = vcmask 326656
    %v5191 = vsel %vm5189, %v5176, 0
    %v5194 = vsel %vm5189, %v5177, 0
    %v5197 = vsel %vm5189, %v5178, 0
    %v5200 = vsel %vm5189, %v5179, 0
    %v5203 = vsel %vm5189, %v5180, 0
    %v5206 = vsel %vm5189, %v5181, 0
    %v5209 = vsel %vm5189, %v5182, 0
    %v5212 = vsel %vm5189, %v5183, 0
    %5214 = vmatprep.subr.mxu0 0.0
    %5215 = vmatpush1.msra.mxu0 0.0
    %5216 = vmatprep.subr.mxu0 0.0
    %5217 = vmatpush1.msra.mxu0 0.0
    %5218 = vmatprep.subr.mxu0 0.0
    %5219 = vmatpush1.msra.mxu0 0.0
    %5220 = vmatprep.subr.mxu0 0.0
    %5221 = vmatpush1.msra.mxu0 0.0
    %5222 = vmatprep.subr.mxu0 0.0
    %5223 = vmatpush1.msra.mxu0 0.0
    %5224 = vmatprep.subr.mxu0 0.0
    %5225 = vmatpush1.msra.mxu0 0.0
    %5226 = vmatprep.subr.mxu0 0.0
    %5227 = vmatpush1.msra.mxu0 0.0
    %5228 = vmatprep.subr.mxu0 0.0
    %5229 = vmatpush1.msra.mxu0 0.0
    %5230 = vmatprep.subr.mxu0 0.0
    %5231 = vmatpush1.msra.mxu0 0.0
    %5232 = vmatprep.subr.mxu0 0.0
    %5233 = vmatpush1.msra.mxu0 0.0
    %5234 = vmatprep.subr.mxu0 0.0
    %5235 = vmatpush1.msra.mxu0 0.0
    %5236 = vmatprep.subr.mxu0 0.0
    %5237 = vmatpush1.msra.mxu0 %v5188
    %5238 = vmatprep.subr.mxu0 0.0
    %5239 = vmatpush1.msra.mxu0 %v5187
    %5240 = vmatprep.subr.mxu0 0.0
    %5241 = vmatpush1.msra.mxu0 %v5186
    %5242 = vmatprep.subr.mxu0 0.0
    %5243 = vmatpush1.msra.mxu0 %v5185
    %5244 = vmatprep.subr.mxu0 0.0
    %5245 = vmatpush1.msra.mxu0 %v5184
    %5246 = vmatprep.subr.mxu0 0.0
    %5247 = vmatpush2.msra.mxu0 0.0
    %5248 = vmatprep.subr.mxu0 0.0
    %5249 = vmatpush2.msra.mxu0 0.0
    %5250 = vmatprep.subr.mxu0 0.0
    %5251 = vmatpush2.msra.mxu0 0.0
    %5252 = vmatprep.subr.mxu0 0.0
    %5253 = vmatpush2.msra.mxu0 0.0
    %5254 = vmatprep.subr.mxu0 0.0
    %5255 = vmatpush2.msra.mxu0 0.0
    %5256 = vmatprep.subr.mxu0 0.0
    %5257 = vmatpush2.msra.mxu0 0.0
    %5258 = vmatprep.subr.mxu0 0.0
    %5259 = vmatpush2.msra.mxu0 0.0
    %5260 = vmatprep.subr.mxu0 0.0
    %5261 = vmatpush2.msra.mxu0 0.0
    %5262 = vmatprep.subr.mxu0 0.0
    %5263 = vmatpush2.msra.mxu0 0.0
    %5264 = vmatprep.subr.mxu0 0.0
    %5265 = vmatpush2.msra.mxu0 0.0
    %5266 = vmatprep.subr.mxu0 0.0
    %5267 = vmatpush2.msra.mxu0 0.0
    %5268 = vmatprep.subr.mxu0 0.0
    %5269 = vmatpush2.msra.mxu0 0.0
    %5270 = vmatprep.subr.mxu0 0.0
    %5271 = vmatpush2.msra.mxu0 0.0
    %5272 = vmatprep.subr.mxu0 0.0
    %5273 = vmatpush2.msra.mxu0 0.0
    %5274 = vmatprep.subr.mxu0 0.0
    %5275 = vmatpush2.msra.mxu0 0.0
    %5276 = vmatprep.subr.mxu0 0.0
    %5277 = vmatpush2.msra.mxu0 0.0
    %5278 = vmatprep.mubr.f32.mxu0 0.0
    %5279 = vmatmul.mubr.f32.gmra.mxu0 %v5191
    %v5280 = vpop.f32.mrf.mxu0
    %v5281 = vadd.f32 0.0, %v5280
    %v5282 = vpop.f32.mrf.mxu0
    %5283 = vmatprep.mubr.f32.mxu0 0.0
    %5284 = vmatmul.mubr.f32.gmra.mxu0 %v5194
    %v5285 = vpop.f32.mrf.mxu0
    %v5286 = vadd.f32 0.0, %v5285
    %v5287 = vpop.f32.mrf.mxu0
    %5288 = vmatprep.mubr.f32.mxu0 0.0
    %5289 = vmatmul.mubr.f32.gmra.mxu0 %v5197
    %v5290 = vpop.f32.mrf.mxu0
    %v5291 = vadd.f32 0.0, %v5290
    %v5292 = vpop.f32.mrf.mxu0
    %5293 = vmatprep.mubr.f32.mxu0 0.0
    %5294 = vmatmul.mubr.f32.gmra.mxu0 %v5200
    %v5295 = vpop.f32.mrf.mxu0
    %v5296 = vadd.f32 0.0, %v5295
    %v5297 = vpop.f32.mrf.mxu0
    %5298 = vmatprep.mubr.f32.mxu0 0.0
    %5299 = vmatmul.mubr.f32.gmra.mxu0 %v5203
    %v5300 = vpop.f32.mrf.mxu0
    %v5301 = vadd.f32 0.0, %v5300
    %v5302 = vpop.f32.mrf.mxu0
    %5303 = vmatprep.mubr.f32.mxu0 0.0
    %5304 = vmatmul.mubr.f32.gmra.mxu0 %v5206
    %v5305 = vpop.f32.mrf.mxu0
    %v5306 = vadd.f32 0.0, %v5305
    %v5307 = vpop.f32.mrf.mxu0
    %5308 = vmatprep.mubr.f32.mxu0 0.0
    %5309 = vmatmul.mubr.f32.gmra.mxu0 %v5209
    %v5310 = vpop.f32.mrf.mxu0
    %v5311 = vadd.f32 0.0, %v5310
    %v5312 = vpop.f32.mrf.mxu0
    %5313 = vmatprep.mubr.f32.mxu0 0.0
    %5314 = vmatmul.mubr.f32.gmra.mxu0 %v5212
    %v5315 = vpop.f32.mrf.mxu0
    %v5316 = vadd.f32 0.0, %v5315
    %v5317 = vpop.f32.mrf.mxu0
    %5318 = vdwg.mxu0
    %v5319 = vld [vmem:[%s12] sm:$0x3]
    %v5320 = vld [vmem:[#allocation19] sm:$0xff]
    %v5321 = vld [vmem:[#allocation19 + $0x8] sm:$0xff]
    %v5322 = vld [vmem:[#allocation19 + $0x10] sm:$0xff]
    %v5323 = vld [vmem:[#allocation19 + $0x18] sm:$0xff]
    %v5324 = vld [vmem:[#allocation19 + $0x20] sm:$0xff]
    %v5325 = vld [vmem:[#allocation19 + $0x28] sm:$0xff]
    %v5326 = vld [vmem:[#allocation19 + $0x30] sm:$0xff]
    %v5327 = vld [vmem:[#allocation19 + $0x38] sm:$0xff]
    %v5328 = vmul.f32 %v5320, %v5281
    %v5329 = vmul.f32 %v5321, %v5286
    %v5330 = vmul.f32 %v5322, %v5291
    %v5331 = vmul.f32 %v5323, %v5296
    %v5332 = vmul.f32 %v5324, %v5301
    %v5333 = vmul.f32 %v5325, %v5306
    %v5334 = vmul.f32 %v5326, %v5311
    %v5335 = vmul.f32 %v5327, %v5316
    %vm5336 = vcmask 523264
    %v5338 = vsel %vm5336, %v5319, 0
    %5340 = vmatprep.subr.mxu0 0.0
    %5341 = vmatpush1.msra.mxu0 0.0
    %5342 = vmatprep.subr.mxu0 0.0
    %5343 = vmatpush1.msra.mxu0 0.0
    %5344 = vmatprep.subr.mxu0 0.0
    %5345 = vmatpush1.msra.mxu0 0.0
    %5346 = vmatprep.subr.mxu0 0.0
    %5347 = vmatpush1.msra.mxu0 0.0
    %5348 = vmatprep.subr.mxu0 0.0
    %5349 = vmatpush1.msra.mxu0 0.0
    %5350 = vmatprep.subr.mxu0 0.0
    %5351 = vmatpush1.msra.mxu0 0.0
    %5352 = vmatprep.subr.mxu0 0.0
    %5353 = vmatpush1.msra.mxu0 0.0
    %5354 = vmatprep.subr.mxu0 0.0
    %5355 = vmatpush1.msra.mxu0 0.0
    %5356 = vmatprep.subr.mxu0 0.0
    %5357 = vmatpush1.msra.mxu0 %v5335
    %5358 = vmatprep.subr.mxu0 0.0
    %5359 = vmatpush1.msra.mxu0 %v5334
    %5360 = vmatprep.subr.mxu0 0.0
    %5361 = vmatpush1.msra.mxu0 %v5333
    %5362 = vmatprep.subr.mxu0 0.0
    %5363 = vmatpush1.msra.mxu0 %v5332
    %5364 = vmatprep.subr.mxu0 0.0
    %5365 = vmatpush1.msra.mxu0 %v5331
    %5366 = vmatprep.subr.mxu0 0.0
    %5367 = vmatpush1.msra.mxu0 %v5330
    %5368 = vmatprep.subr.mxu0 0.0
    %5369 = vmatpush1.msra.mxu0 %v5329
    %5370 = vmatprep.subr.mxu0 0.0
    %5371 = vmatpush1.msra.mxu0 %v5328
    %5372 = vmatprep.subr.mxu0 0.0
    %5373 = vmatpush2.msra.mxu0 0.0
    %5374 = vmatprep.subr.mxu0 0.0
    %5375 = vmatpush2.msra.mxu0 0.0
    %5376 = vmatprep.subr.mxu0 0.0
    %5377 = vmatpush2.msra.mxu0 0.0
    %5378 = vmatprep.subr.mxu0 0.0
    %5379 = vmatpush2.msra.mxu0 0.0
    %5380 = vmatprep.subr.mxu0 0.0
    %5381 = vmatpush2.msra.mxu0 0.0
    %5382 = vmatprep.subr.mxu0 0.0
    %5383 = vmatpush2.msra.mxu0 0.0
    %5384 = vmatprep.subr.mxu0 0.0
    %5385 = vmatpush2.msra.mxu0 0.0
    %5386 = vmatprep.subr.mxu0 0.0
    %5387 = vmatpush2.msra.mxu0 0.0
    %5388 = vmatprep.subr.mxu0 0.0
    %5389 = vmatpush2.msra.mxu0 0.0
    %5390 = vmatprep.subr.mxu0 0.0
    %5391 = vmatpush2.msra.mxu0 0.0
    %5392 = vmatprep.subr.mxu0 0.0
    %5393 = vmatpush2.msra.mxu0 0.0
    %5394 = vmatprep.subr.mxu0 0.0
    %5395 = vmatpush2.msra.mxu0 0.0
    %5396 = vmatprep.subr.mxu0 0.0
    %5397 = vmatpush2.msra.mxu0 0.0
    %5398 = vmatprep.subr.mxu0 0.0
    %5399 = vmatpush2.msra.mxu0 0.0
    %5400 = vmatprep.subr.mxu0 0.0
    %5401 = vmatpush2.msra.mxu0 0.0
    %5402 = vmatprep.subr.mxu0 0.0
    %5403 = vmatpush2.msra.mxu0 0.0
    %5404 = vmatprep.mubr.f32.mxu0 0.0
    %5405 = vmatmul.mubr.f32.gmra.mxu0 %v5338
    %v5406 = vpop.f32.mrf.mxu0
    %v5407 = vadd.f32 0.0, %v5406
    %v5408 = vpop.f32.mrf.mxu0
    %5409 = vdwg.mxu0
    %5410 = vst [vmem:[#allocation23] sm:$0x3] %v5407
    %v5411 = vpack.c.bf16 %v5407, %v5407
    %v5412 = vld [vmem:[#allocation21] sm:$0xf]
    %v5413 = vld [vmem:[#allocation21 + $0x4] sm:$0xf]
    %v5414 = vld [vmem:[#allocation21 + $0x8] sm:$0xf]
    %v5415 = vld [vmem:[#allocation21 + $0xc] sm:$0xf]
    %v5416 = vld [vmem:[#allocation21 + $0x10] sm:$0xf]
    %v5417 = vld [vmem:[#allocation21 + $0x14] sm:$0xf]
    %v5418 = vld [vmem:[#allocation21 + $0x18] sm:$0xf]
    %v5419 = vld [vmem:[#allocation21 + $0x1c] sm:$0xf]
    %v5420 = vld [vmem:[#allocation21 + $0x20] sm:$0xf]
    %v5421 = vld [vmem:[#allocation21 + $0x24] sm:$0xf]
    %v5422 = vld [vmem:[#allocation21 + $0x28] sm:$0xf]
    %v5423 = vld [vmem:[#allocation21 + $0x2c] sm:$0xf]
    %v5424 = vld [vmem:[#allocation21 + $0x30] sm:$0xf]
    %v5425 = vld [vmem:[#allocation21 + $0x34] sm:$0xf]
    %v5426 = vld [vmem:[#allocation21 + $0x38] sm:$0xf]
    %v5427 = vld [vmem:[#allocation21 + $0x3c] sm:$0xf]
    %v5428 = vld [vmem:[%s14] sm:$0x1]
    %v5430 = vlaneseq
    %v5431 = vshrl.u32 %v5430, 7
    %v5432 = vsub.s32 0, %v5431
    %v5433 = vrot.slane %v5428, %v5432
    %v5451 = vunpack.c.l.b16 %v5412
    %v5452 = vunpack.c.l.b16 %v5413
    %v5453 = vunpack.c.l.b16 %v5414
    %v5454 = vunpack.c.l.b16 %v5415
    %v5455 = vunpack.c.l.b16 %v5416
    %v5456 = vunpack.c.l.b16 %v5417
    %v5457 = vunpack.c.l.b16 %v5418
    %v5458 = vunpack.c.l.b16 %v5419
    %v5459 = vunpack.c.l.b16 %v5420
    %v5460 = vunpack.c.l.b16 %v5421
    %v5461 = vunpack.c.l.b16 %v5422
    %v5462 = vunpack.c.l.b16 %v5423
    %v5463 = vunpack.c.l.b16 %v5424
    %v5464 = vunpack.c.l.b16 %v5425
    %v5465 = vunpack.c.l.b16 %v5426
    %v5466 = vunpack.c.l.b16 %v5427
    %v5467 = vpack.c.b16 %v5452, %v5451
    %v5468 = vpack.c.b16 %v5454, %v5453
    %v5469 = vpack.c.b16 %v5456, %v5455
    %v5470 = vpack.c.b16 %v5458, %v5457
    %v5471 = vpack.c.b16 %v5460, %v5459
    %v5472 = vpack.c.b16 %v5462, %v5461
    %v5473 = vpack.c.b16 %v5464, %v5463
    %v5474 = vpack.c.b16 %v5466, %v5465
    %5483 = vmatprep.subr.bf16.mxu0 0
    %5484 = vmatpush1.bf16.msra.mxu0 %v5474
    %5485 = vmatprep.subr.bf16.mxu0 0
    %5486 = vmatpush1.bf16.msra.mxu0 %v5473
    %5487 = vmatprep.subr.bf16.mxu0 0
    %5488 = vmatpush1.bf16.msra.mxu0 %v5472
    %5489 = vmatprep.subr.bf16.mxu0 0
    %5490 = vmatpush1.bf16.msra.mxu0 %v5471
    %5491 = vmatprep.subr.bf16.mxu0 0
    %5492 = vmatpush1.bf16.msra.mxu0 %v5470
    %5493 = vmatprep.subr.bf16.mxu0 0
    %5494 = vmatpush1.bf16.msra.mxu0 %v5469
    %5495 = vmatprep.subr.bf16.mxu0 0
    %5496 = vmatpush1.bf16.msra.mxu0 %v5468
    %5497 = vmatprep.subr.bf16.mxu0 0
    %5498 = vmatpush1.bf16.msra.mxu0 %v5467
    %5499 = vmatprep.subr.bf16.mxu0 0
    %5500 = vmatpush2.bf16.msra.mxu0 0
    %5501 = vmatprep.subr.bf16.mxu0 0
    %5502 = vmatpush2.bf16.msra.mxu0 0
    %5503 = vmatprep.subr.bf16.mxu0 0
    %5504 = vmatpush2.bf16.msra.mxu0 0
    %5505 = vmatprep.subr.bf16.mxu0 0
    %5506 = vmatpush2.bf16.msra.mxu0 0
    %5507 = vmatprep.subr.bf16.mxu0 0
    %5508 = vmatpush2.bf16.msra.mxu0 0
    %5509 = vmatprep.subr.bf16.mxu0 0
    %5510 = vmatpush2.bf16.msra.mxu0 0
    %5511 = vmatprep.subr.bf16.mxu0 0
    %5512 = vmatpush2.bf16.msra.mxu0 0
    %5513 = vmatprep.subr.bf16.mxu0 0
    %5514 = vmatpush2.bf16.msra.mxu0 0
    %5515 = vmatprep.mubr.bf16.mxu0 0
    %5516 = vmatmul.mubr.bf16.gmra.mxu0 %v5411
    %v5517 = vpop.f32.mrf.mxu0
    %v5518 = vadd.f32 %v5433, %v5517
    %v5519 = vpop.f32.mrf.mxu0
    %v5520 = vpop.f32.mrf.mxu0
    %v5521 = vpop.f32.mrf.mxu0
    %5522 = vdwg.mxu0
    %vm5523 = vcmask 25600
    %5524 = vst.msk [vmem:[#allocation22] sm:$0x3] %vm5523, %v5518
    %v5525 = vmul.f32 %v5407, %v5407
    %vm5526 = vcmask 1041408
    %v5527 = vsel %vm5526, %v5525, 0.0
    %5528 = vadd.xlane.f32.xlu0 %v5527
    %v5529 = vpop.xlane.xlu0 %5528
    %v5530 = vmax.f32 %v5529, 1e-24
    %v5531 = vrsqrt.pop %v5530
    %v5532 = vmul.f32 %v5407, %v5531
    %5533 = vst [vmem:[#allocation25] sm:$0x3] %v5532
    // Predicated region
    $region98: #{b7_forward.1} parent=1 // pred_check
      _
    $region99: #{b7_forward.1} parent=1 // pred_check_branch
      %5535 = sbr.rel (0) target = $region101
    $region100: #{b7_forward.1} parent=1 // pred_region
      %s5537 = ssub.s32 32, 32
      %5538 = vsyncadd [#allocation9], %s5537
      %s5540 = sshll.u32 [#allocation22], 4
      %s5541 = int_to_ptr.vmem [resolvable:$true] %s5540
      %5543 = dma.vmem_to_hbm [thread:$0]  %s5541, 32, %s15, [#allocation9]
    $region101: #{b7_forward.1} parent=1 // pred_fallthru
      _
    // Predicated region
    $region102: #{b7_forward.1} parent=1 // pred_check
      _
    $region103: #{b7_forward.1} parent=1 // pred_check_branch
      %5545 = sbr.rel (0) target = $region105
    $region104: #{b7_forward.1} parent=1 // pred_region
      %s5547 = ssub.s32 32, 32
      %5548 = vsyncadd [#allocation24], %s5547
      %s5550 = sshll.u32 [#allocation23], 4
      %s5551 = int_to_ptr.vmem [resolvable:$true] %s5550
      %5553 = dma.vmem_to_hbm [thread:$0]  %s5551, 32, %s16, [#allocation24]
    $region105: #{b7_forward.1} parent=1 // pred_fallthru
      _
    // Predicated region
    $region106: #{b7_forward.1} parent=1 // pred_check
      _
    $region107: #{b7_forward.1} parent=1 // pred_check_branch
      %5555 = sbr.rel (0) target = $region109
    $region108: #{b7_forward.1} parent=1 // pred_region
      %s5557 = ssub.s32 32, 32
      %5558 = vsyncadd [#allocation24], %s5557
      %s5560 = sshll.u32 [#allocation25], 4
      %s5561 = int_to_ptr.vmem [resolvable:$true] %s5560
      %5563 = dma.vmem_to_hbm [thread:$0]  %s5561, 32, %s17, [#allocation24]
    $region109: #{b7_forward.1} parent=1 // pred_fallthru
      _
    // Predicated region
    $region110: #{b7_forward.1} parent=1 // pred_check
      _
    $region111: #{b7_forward.1} parent=1 // pred_check_branch
      %5565 = sbr.rel (0) target = $region113
    $region112: #{b7_forward.1} parent=1 // pred_region
      %5566 = dma.done [#allocation9], 32
    $region113: #{b7_forward.1} parent=1 // pred_fallthru
      _
    // Predicated region
    $region114: #{b7_forward.1} parent=1 // pred_check
      _
    $region115: #{b7_forward.1} parent=1 // pred_check_branch
      %5568 = sbr.rel (0) target = $region117
    $region116: #{b7_forward.1} parent=1 // pred_region
      %5569 = dma.done [#allocation24], 32
    $region117: #{b7_forward.1} parent=1 // pred_fallthru
      _
    // Predicated region
    $region118: #{b7_forward.1} parent=1 // pred_check
      _
    $region119: #{b7_forward.1} parent=1 // pred_check_branch
      %5571 = sbr.rel (0) target = $region121
    $region120: #{b7_forward.1} parent=1 // pred_region
      %5572 = dma.done [#allocation24], 32
    $region121: #{b7_forward.1} parent=1 // pred_fallthru
      _
    %5573 = vsyncpa [#allocation8], 1
    %5574 = vsyncpa [#allocation11], 1
    %5575 = vsyncpa [#allocation14], 1
    %5576 = vsyncpa [#allocation17], 1
    %5577 = vsyncpa [#allocation20], 1
    %5578 = vsyncpa [#allocation9], 1
    %5579 = vsyncpa [#allocation24], 1

</llo_original>
